<compile_context>
chip_gen: v7x
topology: tpu7x:2x2x1
jax: 0.10.0
libtpu: 0.0.40
codegen_flags: <defaults>
</compile_context>

<pallas_src>
import functools
import math

import jax
import jax.numpy as jnp
from jax.experimental import pallas as pl
from jax.experimental.pallas import tpu as pltpu


# --------------------------- VMEM budget / tiling ----------------------------

def _vmem_budget_bytes():
    """Per-generation VMEM budget (v7x: 64 MiB physical, v5e/v6e: 128 MiB)."""
    try:
        cap = int(pltpu.get_tpu_info().vmem_capacity_bytes)
    except Exception:
        cap = 64 * 1024 * 1024      # conservative fallback, safe on every generation
    return min(cap * 3 // 4, 96 * 1024 * 1024)


_VMEM_BUDGET = _vmem_budget_bytes()


def _compiler_params(n_grid_axes):
    return pltpu.CompilerParams(
        dimension_semantics=("parallel",) * n_grid_axes,
        vmem_limit_bytes=_VMEM_BUDGET,
    )


def _sublane(itemsize):
    # Sublane packing granularity: f32 -> 8, bf16 -> 16, int8/fp8 -> 32 rows.
    return max(8, 32 // max(1, int(itemsize)))


def _pick_row_tile(m_rows, k_cols, n_cols, itemsize, min_steps=2):
    """Largest sublane-aligned row tile fitting the VMEM budget that still
    leaves >= min_steps grid steps (v7x megacore wants >=2)."""
    sub = _sublane(itemsize)
    if m_rows <= sub:
        return m_rows
    fixed = (k_cols * n_cols + n_cols) * itemsize        # weights + bias (one copy)
    per_row = (k_cols + n_cols) * itemsize
    avail = max(_VMEM_BUDGET - 2 * fixed, 1 << 22)
    rows = int(avail // (2 * per_row))                   # x2: double buffering
    if min_steps > 1:
        rows = min(rows, -(-m_rows // min_steps))
    rows = max(sub, (rows // sub) * sub)
    return min(rows, m_rows)


def _pick_fold(n_rows, c_in, c_out, itemsize):
    """Fold g rows into one output row (block-diag kron(I_g, W)) so stores are
    lane-dense, targeting 256 lanes (v6e/v7x MXU width), falling back to 128."""
    if c_out >= 256:
        return 1
    for target in (256, 128):
        if target % c_out == 0:
            g = target // c_out
            if (n_rows % g == 0
                    and (g * c_in) * (g * c_out) * itemsize <= _VMEM_BUDGET // 6):
                return g
    return 1


def _gelu_tanh(x):
    # TODO(synk): nn.GELU() default is exact erf; the tanh approximation is used so
    # GELU can be fused into the kernel epilogue (erf has no guaranteed Mosaic
    # lowering).  Expect ~1e-3-level divergence from the PyTorch reference.
    c = math.sqrt(2.0 / math.pi)
    return 0.5 * x * (1.0 + jnp.tanh(c * (x + 0.044715 * x * x * x)))


# ------------------------ 1x1-conv (matmul) kernel -----------------------------

def _matmul_kernel(x_ref, w_ref, b_ref, o_ref):
    """o = x @ w + b.  x:(TM,K) w:(K,N) b:(1,N)."""
    y = jnp.dot(x_ref[...], w_ref[...], preferred_element_type=jnp.float32)
    y = y + b_ref[...].astype(jnp.float32)
    o_ref[...] = y.astype(o_ref.dtype)


def conv1x1(x, w, b=None):
    """1x1 conv on NHWC: x (B,H,W,Cin) @ w (Cin,Cout) + b, row-tiled.

    Small Cout is folded block-diagonally (kron(I_g, w)) so loads/stores are
    >=128 (ideally 256) lanes wide.  Fold/unfold reshapes are row-major => free.
    """
    B, H, W, Cin = x.shape
    Cout = w.shape[1]
    M = B * H * W
    dtype = x.dtype
    itemsize = jnp.dtype(dtype).itemsize
    if b is None:
        b = jnp.zeros((Cout,), w.dtype)

    g = _pick_fold(M, Cin, Cout, itemsize)
    Kf, Nf, Mf = g * Cin, g * Cout, M // g

    xm = x.reshape(Mf, Kf)
    wf = w if g == 1 else jnp.kron(jnp.eye(g, dtype=w.dtype), w)
    bf = jnp.tile(b.reshape(1, Cout), (1, g))

    tm = _pick_row_tile(Mf, Kf, Nf, itemsize, min_steps=2)
    grid = (pl.cdiv(Mf, tm),)

    out = pl.pallas_call(
        _matmul_kernel,
        grid=grid,
        in_specs=[
            pl.BlockSpec((tm, Kf), lambda i: (i, 0)),
            # TODO(synk): constant-index operands could be single-buffered via
            # pipeline_mode=pl.Buffered(1); left at the default to stay conservative.
            pl.BlockSpec((Kf, Nf), lambda i: (0, 0)),
            pl.BlockSpec((1, Nf), lambda i: (0, 0)),
        ],
        out_specs=pl.BlockSpec((tm, Nf), lambda i: (i, 0)),
        out_shape=jax.ShapeDtypeStruct((Mf, Nf), dtype),
        compiler_params=_compiler_params(1),
    )(xm, wf, bf)
    return out.reshape(B, H, W, Cout)


# ------------------------- LayerNorm statistics kernel -------------------------

def _ln_stats_kernel(x_ref, o_ref, *, inv_n, eps):
    """Per-sample LN affine coefficients: LN(x) = x*a + c with a=rstd, c=-mean*rstd.
    One pass: var = E[x^2] - mean^2."""
    x = x_ref[...].astype(jnp.float32)
    mean = jnp.sum(x) * inv_n
    var = jnp.sum(x * x) * inv_n - mean * mean
    rstd = jax.lax.rsqrt(var + eps)
    lane = jax.lax.broadcasted_iota(jnp.int32, o_ref.shape, 2)
    o_ref[...] = jnp.where(lane == 0, rstd,
                           jnp.where(lane == 1, -mean * rstd, 0.0))


def ln_stats(x, eps=1e-5):
    """x: (B,H,W,C) -> (B,1,128) f32 where lane0=a, lane1=c (LN(x)=x*a+c)."""
    B = x.shape[0]
    n = 1
    for d in x.shape[1:]:
        n *= d
    if n % 128 == 0:
        xr = x.reshape(B, n // 128, 128)              # lane-dense presentation
    else:
        xr = x.reshape(B, -1, x.shape[-1])
    R, Cc = xr.shape[1], xr.shape[2]
    return pl.pallas_call(
        functools.partial(_ln_stats_kernel, inv_n=1.0 / float(n), eps=eps),
        grid=(B,),
        in_specs=[pl.BlockSpec((1, R, Cc), lambda b: (b, 0, 0))],
        out_specs=pl.BlockSpec((1, 1, 128), lambda b: (b, 0, 0)),
        out_shape=jax.ShapeDtypeStruct((B, 1, 128), jnp.float32),
        compiler_params=_compiler_params(1),
    )(xr)


# ----------------------- LayerNorm-fused 1x1 conv (w1) -------------------------

def _ln_matmul_kernel(x_ref, ab_ref, w_ref, b_ref, o_ref):
    """o = (x*a + c) @ w + b  -- LayerNorm applied in the matmul prologue."""
    ab = ab_ref[...]                                  # (1,1,128) f32
    a = ab[:, :, 0:1].reshape(1, 1)
    c = ab[:, :, 1:2].reshape(1, 1)
    x = x_ref[0].astype(jnp.float32) * a + c          # (TL, Kf)
    y = jnp.dot(x, w_ref[...], preferred_element_type=jnp.float32)
    y = y + b_ref[...].astype(jnp.float32)
    o_ref[0] = y.astype(o_ref.dtype)


def ln_conv1x1(x, stats, w, b):
    """(LayerNorm(x) @ w + b) with LN fused in.  x: (B,H,W,Cin) -> (B,H,W,Cout)."""
    B, H, W, Cin = x.shape
    Cout = w.shape[1]
    L = H * W
    dtype = x.dtype
    itemsize = jnp.dtype(dtype).itemsize

    g = _pick_fold(L, Cin, Cout, itemsize)            # fold stays within a sample
    Kf, Nf, Lf = g * Cin, g * Cout, L // g
    xm = x.reshape(B, Lf, Kf)
    wf = w if g == 1 else jnp.kron(jnp.eye(g, dtype=w.dtype), w)
    bf = jnp.tile(b.reshape(1, Cout), (1, g))

    tl = _pick_row_tile(Lf, Kf, Nf, itemsize, min_steps=1 if B > 1 else 2)
    grid = (B, pl.cdiv(Lf, tl))

    out = pl.pallas_call(
        _ln_matmul_kernel,
        grid=grid,
        in_specs=[
            pl.BlockSpec((1, tl, Kf), lambda bi, i: (bi, i, 0)),
            pl.BlockSpec((1, 1, 128), lambda bi, i: (bi, 0, 0)),
            pl.BlockSpec((Kf, Nf), lambda bi, i: (0, 0)),
            pl.BlockSpec((1, Nf), lambda bi, i: (0, 0)),
        ],
        out_specs=pl.BlockSpec((1, tl, Nf), lambda bi, i: (bi, i, 0)),
        out_shape=jax.ShapeDtypeStruct((B, Lf, Nf), dtype),
        compiler_params=_compiler_params(2),
    )(xm, stats, wf, bf)
    return out.reshape(B, H, W, Cout)


# ----- Fused MixFFN tail: dw3x3 + pw(wp) + GELU + pw(w2) + LayerNorm residual -----

def _mixffn_tail_kernel(h_ref, ht_ref, hb_ref, x_ref, ab_ref,
                        wd_ref, bd_ref, wp_ref, bp_ref, w2_ref, b2_ref, o_ref):
    """One (batch, H-tile) block of:
         gelu((dw3x3(h)+bd) @ wp + bp) @ w2 + b2 + LayerNorm(x)
    h_ref: (1,th,W,Ch) main tile; ht/hb: clamped 1-row halos; x_ref: (1,th*W,Cd)
    original (pre-LN) input for the residual; ab_ref: per-sample LN affine."""
    f32 = jnp.float32
    t = pl.program_id(1)
    nt = pl.num_programs(1)
    th, W, Ch = h_ref.shape[1], h_ref.shape[2], h_ref.shape[3]

    # ---- in-kernel 3x3 halo (no wrapper-side jnp.pad round trip) ----
    top = ht_ref[...].astype(f32) * (t > 0).astype(f32)
    bot = hb_ref[...].astype(f32) * (t < nt - 1).astype(f32)
    xh = jnp.concatenate([top, h_ref[...].astype(f32), bot], axis=1)   # (1,th+2,W,Ch)
    zc = jnp.zeros((1, th + 2, 1, Ch), f32)
    xp = jnp.concatenate([zc, xh, zc], axis=2)                          # (1,th+2,W+2,Ch)

    # ---- depthwise 3x3, stride 1: kj (sublane-axis) shifts hoisted (3 views) ----
    wd = wd_ref[...].astype(f32)                                        # (9, Ch)
    acc = jnp.zeros((1, th, W, Ch), f32)
    for kj in range(3):
        xj = xp[:, :, kj:kj + W, :]                                     # (1,th+2,W,Ch)
        for ki in range(3):
            acc = acc + xj[:, ki:ki + th, :, :] * wd[ki * 3 + kj]
    acc = acc + bd_ref[...].astype(f32)

    # ---- flattened pointwise matmuls (full MXU occupancy) + GELU epilogue ----
    y = acc.reshape(th * W, Ch)
    y = jnp.dot(y, wp_ref[...], preferred_element_type=f32) + bp_ref[...].astype(f32)
    y = _gelu_tanh(y)
    z = jnp.dot(y, w2_ref[...], preferred_element_type=f32) + b2_ref[...].astype(f32)

    # ---- residual = LayerNorm(x), recomputed from per-sample affine scalars ----
    ab = ab_ref[...]
    a = ab[:, :, 0:1].reshape(1, 1)
    c = ab[:, :, 1:2].reshape(1, 1)
    res = x_ref[0].astype(f32) * a + c
    o_ref[0] = (z + res).astype(o_ref.dtype)


def _pick_h_tile(B, H, W, Ch, Cd, itemsize):
    """Largest H tile (dividing H) whose double-buffered blocks + f32 temporaries
    fit the VMEM budget, forcing >=2 total grid steps (v7x megacore)."""
    fixed = (9 * Ch + Ch + Ch * Ch + Ch + Ch * Cd + Cd) * itemsize * 2
    per_row = ((W * Ch + 2 * W * Cd) * itemsize * 2          # dbuf'd h / x / out blocks
               + (W + 2) * Ch * 4 * 4)                       # f32 temporaries (xp/acc/y)
    avail = max(_VMEM_BUDGET - fixed, 1 << 22)
    th = max(1, min(H, int(avail // per_row)))
    while H % th:
        th -= 1
    if B * (H // th) < 2 and H > 1:
        th = max(1, H // 2)
        while H % th:
            th -= 1
    return th


def mixffn_tail(h, x, stats, wd, bd, wp, bp, w2, b2):
    """Fused DWSepConv(3x3,s=1,p=1) + GELU + 1x1(w2) + LayerNorm(x) residual.
    h: (B,H,W,Ch) expanded activation; x: (B,H,W,Cd) pre-LN layer input."""
    B, H, W, Ch = h.shape
    Cd = x.shape[3]
    itemsize = jnp.dtype(h.dtype).itemsize
    th = _pick_h_tile(B, H, W, Ch, Cd, itemsize)
    x2 = x.reshape(B, H * W, Cd)

    hspec = pl.BlockSpec((1, th, W, Ch), lambda b, t: (b, t, 0, 0))
    htop = pl.BlockSpec((1, 1, W, Ch),
                        lambda b, t: (b, jnp.maximum(t * th - 1, 0), 0, 0))
    hbot = pl.BlockSpec((1, 1, W, Ch),
                        lambda b, t: (b, jnp.minimum((t + 1) * th, H - 1), 0, 0))

    out = pl.pallas_call(
        _mixffn_tail_kernel,
        grid=(B, H // th),
        in_specs=[
            hspec, htop, hbot,
            pl.BlockSpec((1, th * W, Cd), lambda b, t: (b, t, 0)),
            pl.BlockSpec((1, 1, 128), lambda b, t: (b, 0, 0)),
            pl.BlockSpec((9, Ch), lambda b, t: (0, 0)),
            pl.BlockSpec((1, Ch), lambda b, t: (0, 0)),
            pl.BlockSpec((Ch, Ch), lambda b, t: (0, 0)),
            pl.BlockSpec((1, Ch), lambda b, t: (0, 0)),
            pl.BlockSpec((Ch, Cd), lambda b, t: (0, 0)),
            pl.BlockSpec((1, Cd), lambda b, t: (0, 0)),
        ],
        out_specs=pl.BlockSpec((1, th * W, Cd), lambda b, t: (b, t, 0)),
        out_shape=jax.ShapeDtypeStruct((B, H * W, Cd), x.dtype),
        compiler_params=_compiler_params(2),
    )(h, h, h, x2, stats, wd.reshape(9, Ch), bd.reshape(1, Ch),
      wp, bp.reshape(1, Ch), w2, b2.reshape(1, Cd))
    return out.reshape(B, H, W, Cd)


# ------------------------------- Patch layer ----------------------------------

def space_to_depth(x, k):
    """Non-overlapping k x k patches; feature order (c, ki, kj) = torch Unfold order."""
    B, H, W, C = x.shape
    oh, ow = H // k, W // k
    x = x.reshape(B, oh, k, ow, k, C)
    x = x.transpose(0, 1, 3, 5, 2, 4)            # (B, oh, ow, C, k, k)
    return x.reshape(B, oh, ow, C * k * k)


def unfold_nhwc(x, kernel_size, padding, stride):
    """General torch.nn.Unfold in NHWC (fallback for kernel!=stride or padding>0)."""
    B, H, W, C = x.shape
    k, p, s = kernel_size, padding, stride
    oh = (H + 2 * p - k) // s + 1
    ow = (W + 2 * p - k) // s + 1
    xp = jnp.pad(x, ((0, 0), (p, p), (p, p), (0, 0)))
    cols = []
    for ki in range(k):
        for kj in range(k):
            cols.append(xp[:, ki:ki + s * (oh - 1) + 1:s,
                           kj:kj + s * (ow - 1) + 1:s, :])
    patches = jnp.stack(cols, axis=3)            # (B, oh, ow, k*k, C)
    patches = patches.transpose(0, 1, 2, 4, 3)   # (B, oh, ow, C, k*k)
    return patches.reshape(B, oh, ow, C * k * k)


def patchify(x, kernel_size, padding, stride):
    if (kernel_size == stride and padding == 0
            and x.shape[1] % kernel_size == 0 and x.shape[2] % kernel_size == 0):
        return space_to_depth(x, kernel_size)    # pure reshape, no k^2 slice/stack
    # TODO(synk): the general overlapping-unfold path is wrapper-side jnp glue;
    # fusing the gather into the patch-embed BlockSpec index_map would avoid it.
    return unfold_nhwc(x, kernel_size, padding, stride)


# ------------------------------ Model (glue) ----------------------------------
# NOTE: the reference MiTLayer.forward computes EfficientSelfAttention and a first
# LayerNorm but overwrites both results before use, so the block reduces to
# MixFFN(LayerNorm(x)).  The dead work (and its kernels/weights) is omitted here;
# outputs are identical and we do not rely on XLA DCE across pallas_call boundaries.

def mit_layer(x, p):
    stats = ln_stats(x)                                    # (B,1,128): [a, c, ...]
    h = ln_conv1x1(x, stats, p["w1"], p["b1"])             # LN fused into first 1x1
    return mixffn_tail(h, x, stats, p["wd"], p["bd"], p["wp"], p["bp"],
                       p["w2"], p["b2"])                   # dw+pw+GELU+pw+residual


def segformer_stage(x, p, cfg):
    patches = patchify(x, cfg["kernel_size"], cfg["padding"], cfg["stride"])
    emb = conv1x1(patches, p["w_pe"], p["b_pe"])           # PatchEmbedding (1x1 conv)
    for lp in p["layers"]:
        emb = mit_layer(emb, lp["ffn"])
    return emb


def encoder_forward(x_nchw, params, cfgs):
    """x_nchw: (B, C, H, W). Returns list of NCHW stage outputs (like PyTorch)."""
    x = jnp.transpose(x_nchw, (0, 2, 3, 1))                # NCHW -> NHWC
    outputs = []
    for p, c in zip(params, cfgs):
        x = segformer_stage(x, p, c)
        outputs.append(jnp.transpose(x, (0, 3, 1, 2)))     # NHWC -> NCHW
    return outputs


# ---------------------------- Parameter init ----------------------------------

def init_encoder_params(key, dim_in, cfgs, scale=0.05):
    params = []
    for cfg in cfgs:
        k, d, e = cfg["kernel_size"], cfg["dim_emb"], cfg["expansion_factor"]
        dhid = d * e

        def nxt():
            nonlocal key
            key, sub = jax.random.split(key)
            return sub

        stage = {
            "w_pe": scale * jax.random.normal(nxt(), (dim_in * k * k, d), jnp.float32),
            "b_pe": scale * jax.random.normal(nxt(), (d,), jnp.float32),
            "layers": [],
        }
        for _ in range(cfg["n_layers"]):
            stage["layers"].append({
                "ffn": {
                    "w1": scale * jax.random.normal(nxt(), (d, dhid), jnp.float32),
                    "b1": scale * jax.random.normal(nxt(), (dhid,), jnp.float32),
                    "wd": scale * jax.random.normal(nxt(), (3, 3, dhid), jnp.float32),
                    "bd": scale * jax.random.normal(nxt(), (dhid,), jnp.float32),
                    "wp": scale * jax.random.normal(nxt(), (dhid, dhid), jnp.float32),
                    "bp": scale * jax.random.normal(nxt(), (dhid,), jnp.float32),
                    "w2": scale * jax.random.normal(nxt(), (dhid, d), jnp.float32),
                    "b2": scale * jax.random.normal(nxt(), (d,), jnp.float32),
                },
            })
        params.append(stage)
        dim_in = d
    return params


# ---------------------------------- Main ---------------------------------------

if __name__ == "__main__":
    key = jax.random.PRNGKey(0)
    kx, kp = jax.random.split(key)

    B, C, H, W = 2, 3, 32, 32
    x = jax.random.normal(kx, (B, C, H, W), jnp.float32)

    cfgs = [
        dict(kernel_size=4, stride=4, padding=0, dim_emb=32, reduction_ratio=2,
             n_heads=2, expansion_factor=2, n_layers=1),
        dict(kernel_size=2, stride=2, padding=0, dim_emb=64, reduction_ratio=1,
             n_heads=2, expansion_factor=2, n_layers=1),
    ]
    params = init_encoder_params(kp, C, cfgs)

    fwd = jax.jit(lambda xx, pp: encoder_forward(xx, pp, cfgs))
    outs = jax.block_until_ready(fwd(x, params))

    assert outs[0].shape == (B, 32, 8, 8), outs[0].shape
    assert outs[1].shape == (B, 64, 4, 4), outs[1].shape
    assert all(bool(jnp.all(jnp.isfinite(o))) for o in outs)
    print("KERNEL_OK")
</pallas_src>

<mosaic_0001>
module attributes {stable_mosaic.version = 11 : i64} {
  func.func @_matmul_kernel(%arg0: i32, %arg1: memref<8x384xf32, #tpu.memory_space<vmem>>, %arg2: memref<384x256xf32, #tpu.memory_space<vmem>>, %arg3: memref<1x256xf32, #tpu.memory_space<vmem>>, %arg4: memref<8x256xf32, #tpu.memory_space<vmem>>) attributes {dimension_semantics = [#tpu.dimension_semantics<parallel>], iteration_bounds = array<i64: 2>, scalar_prefetch = 0 : i64, scratch_operands = 0 : i64, tpu.core_type = #tpu.core_type<tc>, window_params = [{transform_indices = @transform_0, window_bounds = array<i64: 8, 384>}, {pipeline_mode = #tpu.pipeline_mode<synchronous>, transform_indices = @transform_1, window_bounds = array<i64: 384, 256>}, {pipeline_mode = #tpu.pipeline_mode<synchronous>, transform_indices = @transform_2, window_bounds = array<i64: 1, 256>}, {transform_indices = @transform_3, window_bounds = array<i64: 8, 256>}]} {
    %c0 = arith.constant 0 : index
    %c0_0 = arith.constant 0 : index
    %0 = vector.load %arg1[%c0, %c0_0] : memref<8x384xf32, #tpu.memory_space<vmem>>, vector<8x384xf32>
    %c0_1 = arith.constant 0 : index
    %c0_2 = arith.constant 0 : index
    %1 = vector.load %arg2[%c0_1, %c0_2] : memref<384x256xf32, #tpu.memory_space<vmem>>, vector<384x256xf32>
    %cst = arith.constant dense<0.000000e+00> : vector<8x256xf32>
    %2 = tpu.matmul %0, %1, %cst {dimension_numbers = #tpu.dot_dimension_numbers<[1], [0], [0], [1], [0, 0, 1, 1], [], []>} : vector<8x384xf32>, vector<384x256xf32>, vector<8x256xf32> -> vector<8x256xf32>
    %c0_3 = arith.constant 0 : index
    %c0_4 = arith.constant 0 : index
    %3 = vector.load %arg3[%c0_3, %c0_4] : memref<1x256xf32, #tpu.memory_space<vmem>>, vector<1x256xf32>
    %4 = vector.broadcast %3 : vector<1x256xf32> to vector<8x256xf32>
    %5 = arith.addf %2, %4 : vector<8x256xf32>
    %c0_5 = arith.constant 0 : index
    %c0_6 = arith.constant 0 : index
    %6 = vector.load %arg4[%c0_5, %c0_6] : memref<8x256xf32, #tpu.memory_space<vmem>>, vector<8x256xf32>
    tpu.vector_store %arg4[%c0_5, %c0_6], %5 {strides = array<i32>} : memref<8x256xf32, #tpu.memory_space<vmem>>, vector<8x256xf32>,
    return
  }
  func.func @transform_0(%arg0: i32) -> (i32, i32) {
    %c0_i32 = arith.constant 0 : i32
    %c0_i32_0 = arith.constant 0 : i32
    return %arg0, %c0_i32 : i32, i32
  }
  func.func @transform_1(%arg0: i32) -> (i32, i32) {
    %c0_i32 = arith.constant 0 : i32
    %c0_i32_0 = arith.constant 0 : i32
    %c0_i32_1 = arith.constant 0 : i32
    return %c0_i32, %c0_i32_0 : i32, i32
  }
  func.func @transform_2(%arg0: i32) -> (i32, i32) {
    %c0_i32 = arith.constant 0 : i32
    %c0_i32_0 = arith.constant 0 : i32
    %c0_i32_1 = arith.constant 0 : i32
    return %c0_i32, %c0_i32_0 : i32, i32
  }
  func.func @transform_3(%arg0: i32) -> (i32, i32) {
    %c0_i32 = arith.constant 0 : i32
    %c0_i32_0 = arith.constant 0 : i32
    return %arg0, %c0_i32 : i32, i32
  }
}

module attributes {stable_mosaic.version = 11 : i64} {
  func.func @_ln_stats_kernel(%arg0: i32, %arg1: memref<1x16x128xf32, #tpu.memory_space<vmem>>, %arg2: memref<1x1x128xf32, #tpu.memory_space<vmem>>) attributes {dimension_semantics = [#tpu.dimension_semantics<parallel>], iteration_bounds = array<i64: 2>, scalar_prefetch = 0 : i64, scratch_operands = 0 : i64, tpu.core_type = #tpu.core_type<tc>, window_params = [{transform_indices = @transform_0, window_bounds = array<i64: 1, 16, 128>}, {transform_indices = @transform_1, window_bounds = array<i64: 1, 1, 128>}]} {
    %c0 = arith.constant 0 : index
    %c0_0 = arith.constant 0 : index
    %c0_1 = arith.constant 0 : index
    %0 = vector.load %arg1[%c0, %c0_0, %c0_1] : memref<1x16x128xf32, #tpu.memory_space<vmem>>, vector<1x16x128xf32>
    %1 = vector.shape_cast %0 : vector<1x16x128xf32> to vector<1x1x16x128xf32>
    %cst = arith.constant dense<0.000000e+00> : vector<1xf32>
    %2 = vector.multi_reduction <add>, %1, %cst [1, 2, 3] : vector<1x1x16x128xf32> to vector<1xf32>
    %3 = vector.shape_cast %2 : vector<1xf32> to vector<1x1x1x1xf32>
    %4 = vector.extract %3[0, 0, 0, 0] : f32 from vector<1x1x1x1xf32>
    %cst_2 = arith.constant 4.8828125E-4 : f32
    %5 = arith.mulf %4, %cst_2 : f32
    %6 = arith.mulf %0, %0 : vector<1x16x128xf32>
    %7 = vector.shape_cast %6 : vector<1x16x128xf32> to vector<1x1x16x128xf32>
    %cst_3 = arith.constant dense<0.000000e+00> : vector<1xf32>
    %8 = vector.multi_reduction <add>, %7, %cst_3 [1, 2, 3] : vector<1x1x16x128xf32> to vector<1xf32>
    %9 = vector.shape_cast %8 : vector<1xf32> to vector<1x1x1x1xf32>
    %10 = vector.extract %9[0, 0, 0, 0] : f32 from vector<1x1x1x1xf32>
    %cst_4 = arith.constant 4.8828125E-4 : f32
    %11 = arith.mulf %10, %cst_4 : f32
    %12 = arith.mulf %5, %5 : f32
    %13 = arith.subf %11, %12 : f32
    %cst_5 = arith.constant 9.99999974E-6 : f32
    %14 = arith.addf %13, %cst_5 : f32
    %15 = math.rsqrt %14 : f32
    %16 = tpu.iota {dimensions = array<i32: 2>} : vector<1x1x128xi32>
    %c0_i32 = arith.constant 0 : i32
    %17 = vector.broadcast %c0_i32 : i32 to vector<1x1x128xi32>
    %18 = arith.cmpi eq, %16, %17 : vector<1x1x128xi32>
    %c1_i32 = arith.constant 1 : i32
    %19 = vector.broadcast %c1_i32 : i32 to vector<1x1x128xi32>
    %20 = arith.cmpi eq, %16, %19 : vector<1x1x128xi32>
    %cst_6 = arith.constant 0.000000e+00 : f32
    %21 = arith.subf %cst_6, %5 : f32
    %22 = arith.mulf %21, %15 : f32
    %cst_7 = arith.constant 0.000000e+00 : f32
    %23 = vector.broadcast %22 : f32 to vector<1x1x128xf32>
    %24 = vector.broadcast %cst_7 : f32 to vector<1x1x128xf32>
    %25 = arith.select %20, %23, %24 : vector<1x1x128xi1>, vector<1x1x128xf32>
    %26 = vector.broadcast %15 : f32 to vector<1x1x128xf32>
    %27 = arith.select %18, %26, %25 : vector<1x1x128xi1>, vector<1x1x128xf32>
    %c0_8 = arith.constant 0 : index
    %c0_9 = arith.constant 0 : index
    %c0_10 = arith.constant 0 : index
    %28 = vector.load %arg2[%c0_8, %c0_9, %c0_10] : memref<1x1x128xf32, #tpu.memory_space<vmem>>, vector<1x1x128xf32>
    tpu.vector_store %arg2[%c0_8, %c0_9, %c0_10], %27 {strides = array<i32>} : memref<1x1x128xf32, #tpu.memory_space<vmem>>, vector<1x1x128xf32>,
    return
  }
  func.func @transform_0(%arg0: i32) -> (i32, i32, i32) {
    %c0_i32 = arith.constant 0 : i32
    %c0_i32_0 = arith.constant 0 : i32
    %c0_i32_1 = arith.constant 0 : i32
    return %arg0, %c0_i32, %c0_i32_0 : i32, i32, i32
  }
  func.func @transform_1(%arg0: i32) -> (i32, i32, i32) {
    %c0_i32 = arith.constant 0 : i32
    %c0_i32_0 = arith.constant 0 : i32
    %c0_i32_1 = arith.constant 0 : i32
    return %arg0, %c0_i32, %c0_i32_0 : i32, i32, i32
  }
}

module attributes {stable_mosaic.version = 11 : i64} {
  func.func @_ln_matmul_kernel(%arg0: i32, %arg1: i32, %arg2: memref<1x16x128xf32, #tpu.memory_space<vmem>>, %arg3: memref<1x1x128xf32, #tpu.memory_space<vmem>>, %arg4: memref<128x256xf32, #tpu.memory_space<vmem>>, %arg5: memref<1x256xf32, #tpu.memory_space<vmem>>, %arg6: memref<1x16x256xf32, #tpu.memory_space<vmem>>) attributes {dimension_semantics = [#tpu.dimension_semantics<parallel>, #tpu.dimension_semantics<parallel>], iteration_bounds = array<i64: 2, 1>, scalar_prefetch = 0 : i64, scratch_operands = 0 : i64, tpu.core_type = #tpu.core_type<tc>, window_params = [{transform_indices = @transform_0, window_bounds = array<i64: 1, 16, 128>}, {transform_indices = @transform_1, window_bounds = array<i64: 1, 1, 128>}, {pipeline_mode = #tpu.pipeline_mode<synchronous>, transform_indices = @transform_2, window_bounds = array<i64: 128, 256>}, {pipeline_mode = #tpu.pipeline_mode<synchronous>, transform_indices = @transform_3, window_bounds = array<i64: 1, 256>}, {transform_indices = @transform_4, window_bounds = array<i64: 1, 16, 256>}]} {
    %c0 = arith.constant 0 : index
    %c0_0 = arith.constant 0 : index
    %c0_1 = arith.constant 0 : index
    %0 = vector.load %arg3[%c0, %c0_0, %c0_1] : memref<1x1x128xf32, #tpu.memory_space<vmem>>, vector<1x1x128xf32>
    %1 = vector.extract_strided_slice %0 {offsets = [0, 0, 0], sizes = [1, 1, 1], strides = [1, 1, 1]} : vector<1x1x128xf32> to vector<1x1x1xf32>
    %2 = vector.shape_cast %1 : vector<1x1x1xf32> to vector<1x1xf32>
    %3 = vector.extract_strided_slice %0 {offsets = [0, 0, 1], sizes = [1, 1, 1], strides = [1, 1, 1]} : vector<1x1x128xf32> to vector<1x1x1xf32>
    %4 = vector.shape_cast %3 : vector<1x1x1xf32> to vector<1x1xf32>
    %c0_2 = arith.constant 0 : index
    %c0_3 = arith.constant 0 : index
    %c0_4 = arith.constant 0 : index
    %5 = vector.load %arg2[%c0_2, %c0_3, %c0_4] : memref<1x16x128xf32, #tpu.memory_space<vmem>>, vector<1x16x128xf32>
    %6 = vector.shape_cast %5 : vector<1x16x128xf32> to vector<16x128xf32>
    %7 = vector.broadcast %2 : vector<1x1xf32> to vector<16x128xf32>
    %8 = arith.mulf %6, %7 : vector<16x128xf32>
    %9 = vector.broadcast %4 : vector<1x1xf32> to vector<16x128xf32>
    %10 = arith.addf %8, %9 : vector<16x128xf32>
    %c0_5 = arith.constant 0 : index
    %c0_6 = arith.constant 0 : index
    %11 = vector.load %arg4[%c0_5, %c0_6] : memref<128x256xf32, #tpu.memory_space<vmem>>, vector<128x256xf32>
    %cst = arith.constant dense<0.000000e+00> : vector<16x256xf32>
    %12 = tpu.matmul %10, %11, %cst {dimension_numbers = #tpu.dot_dimension_numbers<[1], [0], [0], [1], [0, 0, 1, 1], [], []>} : vector<16x128xf32>, vector<128x256xf32>, vector<16x256xf32> -> vector<16x256xf32>
    %c0_7 = arith.constant 0 : index
    %c0_8 = arith.constant 0 : index
    %13 = vector.load %arg5[%c0_7, %c0_8] : memref<1x256xf32, #tpu.memory_space<vmem>>, vector<1x256xf32>
    %14 = vector.broadcast %13 : vector<1x256xf32> to vector<16x256xf32>
    %15 = arith.addf %12, %14 : vector<16x256xf32>
    %c0_9 = arith.constant 0 : index
    %c0_10 = arith.constant 0 : index
    %c0_11 = arith.constant 0 : index
    %16 = vector.load %arg6[%c0_9, %c0_10, %c0_11] : memref<1x16x256xf32, #tpu.memory_space<vmem>>, vector<1x16x256xf32>
    %17 = vector.shape_cast %16 : vector<1x16x256xf32> to vector<16x256xf32>
    %18 = vector.shape_cast %15 : vector<16x256xf32> to vector<1x16x256xf32>
    tpu.vector_store %arg6[%c0_9, %c0_10, %c0_11], %18 {strides = array<i32>} : memref<1x16x256xf32, #tpu.memory_space<vmem>>, vector<1x16x256xf32>,
    return
  }
  func.func @transform_0(%arg0: i32, %arg1: i32) -> (i32, i32, i32) {
    %c0_i32 = arith.constant 0 : i32
    %c0_i32_0 = arith.constant 0 : i32
    return %arg0, %arg1, %c0_i32 : i32, i32, i32
  }
  func.func @transform_1(%arg0: i32, %arg1: i32) -> (i32, i32, i32) {
    %c0_i32 = arith.constant 0 : i32
    %c0_i32_0 = arith.constant 0 : i32
    %c0_i32_1 = arith.constant 0 : i32
    return %arg0, %c0_i32, %c0_i32_0 : i32, i32, i32
  }
  func.func @transform_2(%arg0: i32, %arg1: i32) -> (i32, i32) {
    %c0_i32 = arith.constant 0 : i32
    %c0_i32_0 = arith.constant 0 : i32
    %c0_i32_1 = arith.constant 0 : i32
    return %c0_i32, %c0_i32_0 : i32, i32
  }
  func.func @transform_3(%arg0: i32, %arg1: i32) -> (i32, i32) {
    %c0_i32 = arith.constant 0 : i32
    %c0_i32_0 = arith.constant 0 : i32
    %c0_i32_1 = arith.constant 0 : i32
    return %c0_i32, %c0_i32_0 : i32, i32
  }
  func.func @transform_4(%arg0: i32, %arg1: i32) -> (i32, i32, i32) {
    %c0_i32 = arith.constant 0 : i32
    %c0_i32_0 = arith.constant 0 : i32
    return %arg0, %arg1, %c0_i32 : i32, i32, i32
  }
}

module attributes {stable_mosaic.version = 11 : i64} {
  func.func @_mixffn_tail_kernel(%arg0: i32, %arg1: i32, %arg2: memref<1x8x8x64xf32, #tpu.memory_space<vmem>>, %arg3: memref<1x1x8x64xf32, #tpu.memory_space<vmem>>, %arg4: memref<1x1x8x64xf32, #tpu.memory_space<vmem>>, %arg5: memref<1x64x32xf32, #tpu.memory_space<vmem>>, %arg6: memref<1x1x128xf32, #tpu.memory_space<vmem>>, %arg7: memref<9x64xf32, #tpu.memory_space<vmem>>, %arg8: memref<1x64xf32, #tpu.memory_space<vmem>>, %arg9: memref<64x64xf32, #tpu.memory_space<vmem>>, %arg10: memref<1x64xf32, #tpu.memory_space<vmem>>, %arg11: memref<64x32xf32, #tpu.memory_space<vmem>>, %arg12: memref<1x32xf32, #tpu.memory_space<vmem>>, %arg13: memref<1x64x32xf32, #tpu.memory_space<vmem>>) attributes {dimension_semantics = [#tpu.dimension_semantics<parallel>, #tpu.dimension_semantics<parallel>], iteration_bounds = array<i64: 2, 1>, scalar_prefetch = 0 : i64, scratch_operands = 0 : i64, tpu.core_type = #tpu.core_type<tc>, window_params = [{transform_indices = @transform_0, window_bounds = array<i64: 1, 8, 8, 64>}, {transform_indices = @transform_1, window_bounds = array<i64: 1, 1, 8, 64>}, {transform_indices = @transform_2, window_bounds = array<i64: 1, 1, 8, 64>}, {transform_indices = @transform_3, window_bounds = array<i64: 1, 64, 32>}, {transform_indices = @transform_4, window_bounds = array<i64: 1, 1, 128>}, {pipeline_mode = #tpu.pipeline_mode<synchronous>, transform_indices = @transform_5, window_bounds = array<i64: 9, 64>}, {pipeline_mode = #tpu.pipeline_mode<synchronous>, transform_indices = @transform_6, window_bounds = array<i64: 1, 64>}, {pipeline_mode = #tpu.pipeline_mode<synchronous>, transform_indices = @transform_7, window_bounds = array<i64: 64, 64>}, {pipeline_mode = #tpu.pipeline_mode<synchronous>, transform_indices = @transform_8, window_bounds = array<i64: 1, 64>}, {pipeline_mode = #tpu.pipeline_mode<synchronous>, transform_indices = @transform_9, window_bounds = array<i64: 64, 32>}, {pipeline_mode = #tpu.pipeline_mode<synchronous>, transform_indices = @transform_10, window_bounds = array<i64: 1, 32>}, {transform_indices = @transform_11, window_bounds = array<i64: 1, 64, 32>}]} {
    %c0 = arith.constant 0 : index
    %c0_0 = arith.constant 0 : index
    %c0_1 = arith.constant 0 : index
    %c0_2 = arith.constant 0 : index
    %0 = vector.load %arg3[%c0, %c0_0, %c0_1, %c0_2] : memref<1x1x8x64xf32, #tpu.memory_space<vmem>>, vector<1x1x8x64xf32>
    %c0_i32 = arith.constant 0 : i32
    %1 = arith.cmpi sgt, %arg1, %c0_i32 : i32
    %2 = arith.extui %1 : i1 to i32
    %3 = arith.sitofp %2 : i32 to f32
    %4 = vector.broadcast %3 : f32 to vector<1x1x8x64xf32>
    %5 = arith.mulf %0, %4 : vector<1x1x8x64xf32>
    %c0_3 = arith.constant 0 : index
    %c0_4 = arith.constant 0 : index
    %c0_5 = arith.constant 0 : index
    %c0_6 = arith.constant 0 : index
    %6 = vector.load %arg4[%c0_3, %c0_4, %c0_5, %c0_6] : memref<1x1x8x64xf32, #tpu.memory_space<vmem>>, vector<1x1x8x64xf32>
    %c0_i32_7 = arith.constant 0 : i32
    %7 = arith.cmpi slt, %arg1, %c0_i32_7 : i32
    %8 = arith.extui %7 : i1 to i32
    %9 = arith.sitofp %8 : i32 to f32
    %10 = vector.broadcast %9 : f32 to vector<1x1x8x64xf32>
    %11 = arith.mulf %6, %10 : vector<1x1x8x64xf32>
    %c0_8 = arith.constant 0 : index
    %c0_9 = arith.constant 0 : index
    %c0_10 = arith.constant 0 : index
    %c0_11 = arith.constant 0 : index
    %12 = vector.load %arg2[%c0_8, %c0_9, %c0_10, %c0_11] : memref<1x8x8x64xf32, #tpu.memory_space<vmem>>, vector<1x8x8x64xf32>
    %13 = tpu.concatenate %5, %12, %11 in 1 : vector<1x1x8x64xf32>, vector<1x8x8x64xf32>, vector<1x1x8x64xf32> -> vector<1x10x8x64xf32>
    %cst = arith.constant 0.000000e+00 : f32
    %14 = vector.broadcast %cst : f32 to vector<1x10x1x64xf32>
    %15 = tpu.concatenate %14, %13, %14 in 2 : vector<1x10x1x64xf32>, vector<1x10x8x64xf32>, vector<1x10x1x64xf32> -> vector<1x10x10x64xf32>
    %c0_12 = arith.constant 0 : index
    %c0_13 = arith.constant 0 : index
    %16 = vector.load %arg7[%c0_12, %c0_13] : memref<9x64xf32, #tpu.memory_space<vmem>>, vector<9x64xf32>
    %cst_14 = arith.constant 0.000000e+00 : f32
    %17 = vector.broadcast %cst_14 : f32 to vector<1x8x8x64xf32>
    %18 = vector.extract_strided_slice %15 {offsets = [0, 0, 0, 0], sizes = [1, 10, 8, 64], strides = [1, 1, 1, 1]} : vector<1x10x10x64xf32> to vector<1x10x8x64xf32>
    %19 = vector.extract_strided_slice %18 {offsets = [0, 0, 0, 0], sizes = [1, 8, 8, 64], strides = [1, 1, 1, 1]} : vector<1x10x8x64xf32> to vector<1x8x8x64xf32>
    %20 = vector.extract_strided_slice %16 {offsets = [0, 0], sizes = [1, 64], strides = [1, 1]} : vector<9x64xf32> to vector<1x64xf32>
    %21 = vector.shape_cast %20 : vector<1x64xf32> to vector<64xf32>
    %22 = vector.shape_cast %21 : vector<64xf32> to vector<1x1x1x64xf32>
    %23 = vector.broadcast %22 : vector<1x1x1x64xf32> to vector<1x8x8x64xf32>
    %24 = arith.mulf %19, %23 : vector<1x8x8x64xf32>
    %25 = arith.addf %17, %24 : vector<1x8x8x64xf32>
    %26 = vector.extract_strided_slice %18 {offsets = [0, 1, 0, 0], sizes = [1, 8, 8, 64], strides = [1, 1, 1, 1]} : vector<1x10x8x64xf32> to vector<1x8x8x64xf32>
    %27 = vector.extract_strided_slice %16 {offsets = [3, 0], sizes = [1, 64], strides = [1, 1]} : vector<9x64xf32> to vector<1x64xf32>
    %28 = vector.shape_cast %27 : vector<1x64xf32> to vector<64xf32>
    %29 = vector.shape_cast %28 : vector<64xf32> to vector<1x1x1x64xf32>
    %30 = vector.broadcast %29 : vector<1x1x1x64xf32> to vector<1x8x8x64xf32>
    %31 = arith.mulf %26, %30 : vector<1x8x8x64xf32>
    %32 = arith.addf %25, %31 : vector<1x8x8x64xf32>
    %33 = vector.extract_strided_slice %18 {offsets = [0, 2, 0, 0], sizes = [1, 8, 8, 64], strides = [1, 1, 1, 1]} : vector<1x10x8x64xf32> to vector<1x8x8x64xf32>
    %34 = vector.extract_strided_slice %16 {offsets = [6, 0], sizes = [1, 64], strides = [1, 1]} : vector<9x64xf32> to vector<1x64xf32>
    %35 = vector.shape_cast %34 : vector<1x64xf32> to vector<64xf32>
    %36 = vector.shape_cast %35 : vector<64xf32> to vector<1x1x1x64xf32>
    %37 = vector.broadcast %36 : vector<1x1x1x64xf32> to vector<1x8x8x64xf32>
    %38 = arith.mulf %33, %37 : vector<1x8x8x64xf32>
    %39 = arith.addf %32, %38 : vector<1x8x8x64xf32>
    %40 = vector.extract_strided_slice %15 {offsets = [0, 0, 1, 0], sizes = [1, 10, 8, 64], strides = [1, 1, 1, 1]} : vector<1x10x10x64xf32> to vector<1x10x8x64xf32>
    %41 = vector.extract_strided_slice %40 {offsets = [0, 0, 0, 0], sizes = [1, 8, 8, 64], strides = [1, 1, 1, 1]} : vector<1x10x8x64xf32> to vector<1x8x8x64xf32>
    %42 = vector.extract_strided_slice %16 {offsets = [1, 0], sizes = [1, 64], strides = [1, 1]} : vector<9x64xf32> to vector<1x64xf32>
    %43 = vector.shape_cast %42 : vector<1x64xf32> to vector<64xf32>
    %44 = vector.shape_cast %43 : vector<64xf32> to vector<1x1x1x64xf32>
    %45 = vector.broadcast %44 : vector<1x1x1x64xf32> to vector<1x8x8x64xf32>
    %46 = arith.mulf %41, %45 : vector<1x8x8x64xf32>
    %47 = arith.addf %39, %46 : vector<1x8x8x64xf32>
    %48 = vector.extract_strided_slice %40 {offsets = [0, 1, 0, 0], sizes = [1, 8, 8, 64], strides = [1, 1, 1, 1]} : vector<1x10x8x64xf32> to vector<1x8x8x64xf32>
    %49 = vector.extract_strided_slice %16 {offsets = [4, 0], sizes = [1, 64], strides = [1, 1]} : vector<9x64xf32> to vector<1x64xf32>
    %50 = vector.shape_cast %49 : vector<1x64xf32> to vector<64xf32>
    %51 = vector.shape_cast %50 : vector<64xf32> to vector<1x1x1x64xf32>
    %52 = vector.broadcast %51 : vector<1x1x1x64xf32> to vector<1x8x8x64xf32>
    %53 = arith.mulf %48, %52 : vector<1x8x8x64xf32>
    %54 = arith.addf %47, %53 : vector<1x8x8x64xf32>
    %55 = vector.extract_strided_slice %40 {offsets = [0, 2, 0, 0], sizes = [1, 8, 8, 64], strides = [1, 1, 1, 1]} : vector<1x10x8x64xf32> to vector<1x8x8x64xf32>
    %56 = vector.extract_strided_slice %16 {offsets = [7, 0], sizes = [1, 64], strides = [1, 1]} : vector<9x64xf32> to vector<1x64xf32>
    %57 = vector.shape_cast %56 : vector<1x64xf32> to vector<64xf32>
    %58 = vector.shape_cast %57 : vector<64xf32> to vector<1x1x1x64xf32>
    %59 = vector.broadcast %58 : vector<1x1x1x64xf32> to vector<1x8x8x64xf32>
    %60 = arith.mulf %55, %59 : vector<1x8x8x64xf32>
    %61 = arith.addf %54, %60 : vector<1x8x8x64xf32>
    %62 = vector.extract_strided_slice %15 {offsets = [0, 0, 2, 0], sizes = [1, 10, 8, 64], strides = [1, 1, 1, 1]} : vector<1x10x10x64xf32> to vector<1x10x8x64xf32>
    %63 = vector.extract_strided_slice %62 {offsets = [0, 0, 0, 0], sizes = [1, 8, 8, 64], strides = [1, 1, 1, 1]} : vector<1x10x8x64xf32> to vector<1x8x8x64xf32>
    %64 = vector.extract_strided_slice %16 {offsets = [2, 0], sizes = [1, 64], strides = [1, 1]} : vector<9x64xf32> to vector<1x64xf32>
    %65 = vector.shape_cast %64 : vector<1x64xf32> to vector<64xf32>
    %66 = vector.shape_cast %65 : vector<64xf32> to vector<1x1x1x64xf32>
    %67 = vector.broadcast %66 : vector<1x1x1x64xf32> to vector<1x8x8x64xf32>
    %68 = arith.mulf %63, %67 : vector<1x8x8x64xf32>
    %69 = arith.addf %61, %68 : vector<1x8x8x64xf32>
    %70 = vector.extract_strided_slice %62 {offsets = [0, 1, 0, 0], sizes = [1, 8, 8, 64], strides = [1, 1, 1, 1]} : vector<1x10x8x64xf32> to vector<1x8x8x64xf32>
    %71 = vector.extract_strided_slice %16 {offsets = [5, 0], sizes = [1, 64], strides = [1, 1]} : vector<9x64xf32> to vector<1x64xf32>
    %72 = vector.shape_cast %71 : vector<1x64xf32> to vector<64xf32>
    %73 = vector.shape_cast %72 : vector<64xf32> to vector<1x1x1x64xf32>
    %74 = vector.broadcast %73 : vector<1x1x1x64xf32> to vector<1x8x8x64xf32>
    %75 = arith.mulf %70, %74 : vector<1x8x8x64xf32>
    %76 = arith.addf %69, %75 : vector<1x8x8x64xf32>
    %77 = vector.extract_strided_slice %62 {offsets = [0, 2, 0, 0], sizes = [1, 8, 8, 64], strides = [1, 1, 1, 1]} : vector<1x10x8x64xf32> to vector<1x8x8x64xf32>
    %78 = vector.extract_strided_slice %16 {offsets = [8, 0], sizes = [1, 64], strides = [1, 1]} : vector<9x64xf32> to vector<1x64xf32>
    %79 = vector.shape_cast %78 : vector<1x64xf32> to vector<64xf32>
    %80 = vector.shape_cast %79 : vector<64xf32> to vector<1x1x1x64xf32>
    %81 = vector.broadcast %80 : vector<1x1x1x64xf32> to vector<1x8x8x64xf32>
    %82 = arith.mulf %77, %81 : vector<1x8x8x64xf32>
    %83 = arith.addf %76, %82 : vector<1x8x8x64xf32>
    %c0_15 = arith.constant 0 : index
    %c0_16 = arith.constant 0 : index
    %84 = vector.load %arg8[%c0_15, %c0_16] : memref<1x64xf32, #tpu.memory_space<vmem>>, vector<1x64xf32>
    %85 = vector.shape_cast %84 : vector<1x64xf32> to vector<1x1x1x64xf32>
    %86 = vector.broadcast %85 : vector<1x1x1x64xf32> to vector<1x8x8x64xf32>
    %87 = arith.addf %83, %86 : vector<1x8x8x64xf32>
    %88 = vector.shape_cast %87 : vector<1x8x8x64xf32> to vector<64x64xf32>
    %c0_17 = arith.constant 0 : index
    %c0_18 = arith.constant 0 : index
    %89 = vector.load %arg9[%c0_17, %c0_18] : memref<64x64xf32, #tpu.memory_space<vmem>>, vector<64x64xf32>
    %cst_19 = arith.constant dense<0.000000e+00> : vector<64x64xf32>
    %90 = tpu.matmul %88, %89, %cst_19 {dimension_numbers = #tpu.dot_dimension_numbers<[1], [0], [0], [1], [0, 0, 1, 1], [], []>} : vector<64x64xf32>, vector<64x64xf32>, vector<64x64xf32> -> vector<64x64xf32>
    %c0_20 = arith.constant 0 : index
    %c0_21 = arith.constant 0 : index
    %91 = vector.load %arg10[%c0_20, %c0_21] : memref<1x64xf32, #tpu.memory_space<vmem>>, vector<1x64xf32>
    %92 = vector.broadcast %91 : vector<1x64xf32> to vector<64x64xf32>
    %93 = arith.addf %90, %92 : vector<64x64xf32>
    %cst_22 = arith.constant 5.000000e-01 : f32
    %94 = vector.broadcast %cst_22 : f32 to vector<64x64xf32>
    %95 = arith.mulf %94, %93 : vector<64x64xf32>
    %cst_23 = arith.constant 4.471500e-02 : f32
    %96 = vector.broadcast %cst_23 : f32 to vector<64x64xf32>
    %97 = arith.mulf %96, %93 : vector<64x64xf32>
    %98 = arith.mulf %97, %93 : vector<64x64xf32>
    %99 = arith.mulf %98, %93 : vector<64x64xf32>
    %100 = arith.addf %93, %99 : vector<64x64xf32>
    %cst_24 = arith.constant 0.797884583 : f32
    %101 = vector.broadcast %cst_24 : f32 to vector<64x64xf32>
    %102 = arith.mulf %101, %100 : vector<64x64xf32>
    %103 = math.tanh %102 : vector<64x64xf32>
    %cst_25 = arith.constant 1.000000e+00 : f32
    %104 = vector.broadcast %cst_25 : f32 to vector<64x64xf32>
    %105 = arith.addf %104, %103 : vector<64x64xf32>
    %106 = arith.mulf %95, %105 : vector<64x64xf32>
    %c0_26 = arith.constant 0 : index
    %c0_27 = arith.constant 0 : index
    %107 = vector.load %arg11[%c0_26, %c0_27] : memref<64x32xf32, #tpu.memory_space<vmem>>, vector<64x32xf32>
    %cst_28 = arith.constant dense<0.000000e+00> : vector<64x32xf32>
    %108 = tpu.matmul %106, %107, %cst_28 {dimension_numbers = #tpu.dot_dimension_numbers<[1], [0], [0], [1], [0, 0, 1, 1], [], []>} : vector<64x64xf32>, vector<64x32xf32>, vector<64x32xf32> -> vector<64x32xf32>
    %c0_29 = arith.constant 0 : index
    %c0_30 = arith.constant 0 : index
    %109 = vector.load %arg12[%c0_29, %c0_30] : memref<1x32xf32, #tpu.memory_space<vmem>>, vector<1x32xf32>
    %110 = vector.broadcast %109 : vector<1x32xf32> to vector<64x32xf32>
    %111 = arith.addf %108, %110 : vector<64x32xf32>
    %c0_31 = arith.constant 0 : index
    %c0_32 = arith.constant 0 : index
    %c0_33 = arith.constant 0 : index
    %112 = vector.load %arg6[%c0_31, %c0_32, %c0_33] : memref<1x1x128xf32, #tpu.memory_space<vmem>>, vector<1x1x128xf32>
    %113 = vector.extract_strided_slice %112 {offsets = [0, 0, 0], sizes = [1, 1, 1], strides = [1, 1, 1]} : vector<1x1x128xf32> to vector<1x1x1xf32>
    %114 = vector.shape_cast %113 : vector<1x1x1xf32> to vector<1x1xf32>
    %115 = vector.extract_strided_slice %112 {offsets = [0, 0, 1], sizes = [1, 1, 1], strides = [1, 1, 1]} : vector<1x1x128xf32> to vector<1x1x1xf32>
    %116 = vector.shape_cast %115 : vector<1x1x1xf32> to vector<1x1xf32>
    %c0_34 = arith.constant 0 : index
    %c0_35 = arith.constant 0 : index
    %c0_36 = arith.constant 0 : index
    %117 = vector.load %arg5[%c0_34, %c0_35, %c0_36] : memref<1x64x32xf32, #tpu.memory_space<vmem>>, vector<1x64x32xf32>
    %118 = vector.shape_cast %117 : vector<1x64x32xf32> to vector<64x32xf32>
    %119 = vector.broadcast %114 : vector<1x1xf32> to vector<64x32xf32>
    %120 = arith.mulf %118, %119 : vector<64x32xf32>
    %121 = vector.broadcast %116 : vector<1x1xf32> to vector<64x32xf32>
    %122 = arith.addf %120, %121 : vector<64x32xf32>
    %123 = arith.addf %111, %122 : vector<64x32xf32>
    %c0_37 = arith.constant 0 : index
    %c0_38 = arith.constant 0 : index
    %c0_39 = arith.constant 0 : index
    %124 = vector.load %arg13[%c0_37, %c0_38, %c0_39] : memref<1x64x32xf32, #tpu.memory_space<vmem>>, vector<1x64x32xf32>
    %125 = vector.shape_cast %124 : vector<1x64x32xf32> to vector<64x32xf32>
    %126 = vector.shape_cast %123 : vector<64x32xf32> to vector<1x64x32xf32>
    tpu.vector_store %arg13[%c0_37, %c0_38, %c0_39], %126 {strides = array<i32>} : memref<1x64x32xf32, #tpu.memory_space<vmem>>, vector<1x64x32xf32>,
    return
  }
  func.func @transform_0(%arg0: i32, %arg1: i32) -> (i32, i32, i32, i32) {
    %c0_i32 = arith.constant 0 : i32
    %c0_i32_0 = arith.constant 0 : i32
    %c0_i32_1 = arith.constant 0 : i32
    return %arg0, %arg1, %c0_i32, %c0_i32_0 : i32, i32, i32, i32
  }
  func.func @transform_1(%arg0: i32, %arg1: i32) -> (i32, i32, i32, i32) {
    %c8_i32 = arith.constant 8 : i32
    %0 = arith.muli %arg1, %c8_i32 : i32
    %c1_i32 = arith.constant 1 : i32
    %1 = arith.subi %0, %c1_i32 : i32
    %c0_i32 = arith.constant 0 : i32
    %2 = arith.maxsi %1, %c0_i32 : i32
    %c0_i32_0 = arith.constant 0 : i32
    %c0_i32_1 = arith.constant 0 : i32
    %c0_i32_2 = arith.constant 0 : i32
    return %arg0, %2, %c0_i32_0, %c0_i32_1 : i32, i32, i32, i32
  }
  func.func @transform_2(%arg0: i32, %arg1: i32) -> (i32, i32, i32, i32) {
    %c1_i32 = arith.constant 1 : i32
    %0 = arith.addi %arg1, %c1_i32 : i32
    %c8_i32 = arith.constant 8 : i32
    %1 = arith.muli %0, %c8_i32 : i32
    %c7_i32 = arith.constant 7 : i32
    %2 = arith.minsi %1, %c7_i32 : i32
    %c0_i32 = arith.constant 0 : i32
    %c0_i32_0 = arith.constant 0 : i32
    %c0_i32_1 = arith.constant 0 : i32
    return %arg0, %2, %c0_i32, %c0_i32_0 : i32, i32, i32, i32
  }
  func.func @transform_3(%arg0: i32, %arg1: i32) -> (i32, i32, i32) {
    %c0_i32 = arith.constant 0 : i32
    %c0_i32_0 = arith.constant 0 : i32
    return %arg0, %arg1, %c0_i32 : i32, i32, i32
  }
  func.func @transform_4(%arg0: i32, %arg1: i32) -> (i32, i32, i32) {
    %c0_i32 = arith.constant 0 : i32
    %c0_i32_0 = arith.constant 0 : i32
    %c0_i32_1 = arith.constant 0 : i32
    return %arg0, %c0_i32, %c0_i32_0 : i32, i32, i32
  }
  func.func @transform_5(%arg0: i32, %arg1: i32) -> (i32, i32) {
    %c0_i32 = arith.constant 0 : i32
    %c0_i32_0 = arith.constant 0 : i32
    %c0_i32_1 = arith.constant 0 : i32
    return %c0_i32, %c0_i32_0 : i32, i32
  }
  func.func @transform_6(%arg0: i32, %arg1: i32) -> (i32, i32) {
    %c0_i32 = arith.constant 0 : i32
    %c0_i32_0 = arith.constant 0 : i32
    %c0_i32_1 = arith.constant 0 : i32
    return %c0_i32, %c0_i32_0 : i32, i32
  }
  func.func @transform_7(%arg0: i32, %arg1: i32) -> (i32, i32) {
    %c0_i32 = arith.constant 0 : i32
    %c0_i32_0 = arith.constant 0 : i32
    %c0_i32_1 = arith.constant 0 : i32
    return %c0_i32, %c0_i32_0 : i32, i32
  }
  func.func @transform_8(%arg0: i32, %arg1: i32) -> (i32, i32) {
    %c0_i32 = arith.constant 0 : i32
    %c0_i32_0 = arith.constant 0 : i32
    %c0_i32_1 = arith.constant 0 : i32
    return %c0_i32, %c0_i32_0 : i32, i32
  }
  func.func @transform_9(%arg0: i32, %arg1: i32) -> (i32, i32) {
    %c0_i32 = arith.constant 0 : i32
    %c0_i32_0 = arith.constant 0 : i32
    %c0_i32_1 = arith.constant 0 : i32
    return %c0_i32, %c0_i32_0 : i32, i32
  }
  func.func @transform_10(%arg0: i32, %arg1: i32) -> (i32, i32) {
    %c0_i32 = arith.constant 0 : i32
    %c0_i32_0 = arith.constant 0 : i32
    %c0_i32_1 = arith.constant 0 : i32
    return %c0_i32, %c0_i32_0 : i32, i32
  }
  func.func @transform_11(%arg0: i32, %arg1: i32) -> (i32, i32, i32) {
    %c0_i32 = arith.constant 0 : i32
    %c0_i32_0 = arith.constant 0 : i32
    return %arg0, %arg1, %c0_i32 : i32, i32, i32
  }
}

module attributes {stable_mosaic.version = 11 : i64} {
  func.func @_matmul_kernel(%arg0: i32, %arg1: memref<8x512xf32, #tpu.memory_space<vmem>>, %arg2: memref<512x256xf32, #tpu.memory_space<vmem>>, %arg3: memref<1x256xf32, #tpu.memory_space<vmem>>, %arg4: memref<8x256xf32, #tpu.memory_space<vmem>>) attributes {dimension_semantics = [#tpu.dimension_semantics<parallel>], iteration_bounds = array<i64: 1>, scalar_prefetch = 0 : i64, scratch_operands = 0 : i64, tpu.core_type = #tpu.core_type<tc>, window_params = [{transform_indices = @transform_0, window_bounds = array<i64: 8, 512>}, {pipeline_mode = #tpu.pipeline_mode<synchronous>, transform_indices = @transform_1, window_bounds = array<i64: 512, 256>}, {pipeline_mode = #tpu.pipeline_mode<synchronous>, transform_indices = @transform_2, window_bounds = array<i64: 1, 256>}, {transform_indices = @transform_3, window_bounds = array<i64: 8, 256>}]} {
    %c0 = arith.constant 0 : index
    %c0_0 = arith.constant 0 : index
    %0 = vector.load %arg1[%c0, %c0_0] : memref<8x512xf32, #tpu.memory_space<vmem>>, vector<8x512xf32>
    %c0_1 = arith.constant 0 : index
    %c0_2 = arith.constant 0 : index
    %1 = vector.load %arg2[%c0_1, %c0_2] : memref<512x256xf32, #tpu.memory_space<vmem>>, vector<512x256xf32>
    %cst = arith.constant dense<0.000000e+00> : vector<8x256xf32>
    %2 = tpu.matmul %0, %1, %cst {dimension_numbers = #tpu.dot_dimension_numbers<[1], [0], [0], [1], [0, 0, 1, 1], [], []>} : vector<8x512xf32>, vector<512x256xf32>, vector<8x256xf32> -> vector<8x256xf32>
    %c0_3 = arith.constant 0 : index
    %c0_4 = arith.constant 0 : index
    %3 = vector.load %arg3[%c0_3, %c0_4] : memref<1x256xf32, #tpu.memory_space<vmem>>, vector<1x256xf32>
    %4 = vector.broadcast %3 : vector<1x256xf32> to vector<8x256xf32>
    %5 = arith.addf %2, %4 : vector<8x256xf32>
    %c0_5 = arith.constant 0 : index
    %c0_6 = arith.constant 0 : index
    %6 = vector.load %arg4[%c0_5, %c0_6] : memref<8x256xf32, #tpu.memory_space<vmem>>, vector<8x256xf32>
    tpu.vector_store %arg4[%c0_5, %c0_6], %5 {strides = array<i32>} : memref<8x256xf32, #tpu.memory_space<vmem>>, vector<8x256xf32>,
    return
  }
  func.func @transform_0(%arg0: i32) -> (i32, i32) {
    %c0_i32 = arith.constant 0 : i32
    %c0_i32_0 = arith.constant 0 : i32
    return %arg0, %c0_i32 : i32, i32
  }
  func.func @transform_1(%arg0: i32) -> (i32, i32) {
    %c0_i32 = arith.constant 0 : i32
    %c0_i32_0 = arith.constant 0 : i32
    %c0_i32_1 = arith.constant 0 : i32
    return %c0_i32, %c0_i32_0 : i32, i32
  }
  func.func @transform_2(%arg0: i32) -> (i32, i32) {
    %c0_i32 = arith.constant 0 : i32
    %c0_i32_0 = arith.constant 0 : i32
    %c0_i32_1 = arith.constant 0 : i32
    return %c0_i32, %c0_i32_0 : i32, i32
  }
  func.func @transform_3(%arg0: i32) -> (i32, i32) {
    %c0_i32 = arith.constant 0 : i32
    %c0_i32_0 = arith.constant 0 : i32
    return %arg0, %c0_i32 : i32, i32
  }
}

module attributes {stable_mosaic.version = 11 : i64} {
  func.func @_ln_stats_kernel(%arg0: i32, %arg1: memref<1x8x128xf32, #tpu.memory_space<vmem>>, %arg2: memref<1x1x128xf32, #tpu.memory_space<vmem>>) attributes {dimension_semantics = [#tpu.dimension_semantics<parallel>], iteration_bounds = array<i64: 2>, scalar_prefetch = 0 : i64, scratch_operands = 0 : i64, tpu.core_type = #tpu.core_type<tc>, window_params = [{transform_indices = @transform_0, window_bounds = array<i64: 1, 8, 128>}, {transform_indices = @transform_1, window_bounds = array<i64: 1, 1, 128>}]} {
    %c0 = arith.constant 0 : index
    %c0_0 = arith.constant 0 : index
    %c0_1 = arith.constant 0 : index
    %0 = vector.load %arg1[%c0, %c0_0, %c0_1] : memref<1x8x128xf32, #tpu.memory_space<vmem>>, vector<1x8x128xf32>
    %1 = vector.shape_cast %0 : vector<1x8x128xf32> to vector<1x1x8x128xf32>
    %cst = arith.constant dense<0.000000e+00> : vector<1xf32>
    %2 = vector.multi_reduction <add>, %1, %cst [1, 2, 3] : vector<1x1x8x128xf32> to vector<1xf32>
    %3 = vector.shape_cast %2 : vector<1xf32> to vector<1x1x1x1xf32>
    %4 = vector.extract %3[0, 0, 0, 0] : f32 from vector<1x1x1x1xf32>
    %cst_2 = arith.constant 9.765625E-4 : f32
    %5 = arith.mulf %4, %cst_2 : f32
    %6 = arith.mulf %0, %0 : vector<1x8x128xf32>
    %7 = vector.shape_cast %6 : vector<1x8x128xf32> to vector<1x1x8x128xf32>
    %cst_3 = arith.constant dense<0.000000e+00> : vector<1xf32>
    %8 = vector.multi_reduction <add>, %7, %cst_3 [1, 2, 3] : vector<1x1x8x128xf32> to vector<1xf32>
    %9 = vector.shape_cast %8 : vector<1xf32> to vector<1x1x1x1xf32>
    %10 = vector.extract %9[0, 0, 0, 0] : f32 from vector<1x1x1x1xf32>
    %cst_4 = arith.constant 9.765625E-4 : f32
    %11 = arith.mulf %10, %cst_4 : f32
    %12 = arith.mulf %5, %5 : f32
    %13 = arith.subf %11, %12 : f32
    %cst_5 = arith.constant 9.99999974E-6 : f32
    %14 = arith.addf %13, %cst_5 : f32
    %15 = math.rsqrt %14 : f32
    %16 = tpu.iota {dimensions = array<i32: 2>} : vector<1x1x128xi32>
    %c0_i32 = arith.constant 0 : i32
    %17 = vector.broadcast %c0_i32 : i32 to vector<1x1x128xi32>
    %18 = arith.cmpi eq, %16, %17 : vector<1x1x128xi32>
    %c1_i32 = arith.constant 1 : i32
    %19 = vector.broadcast %c1_i32 : i32 to vector<1x1x128xi32>
    %20 = arith.cmpi eq, %16, %19 : vector<1x1x128xi32>
    %cst_6 = arith.constant 0.000000e+00 : f32
    %21 = arith.subf %cst_6, %5 : f32
    %22 = arith.mulf %21, %15 : f32
    %cst_7 = arith.constant 0.000000e+00 : f32
    %23 = vector.broadcast %22 : f32 to vector<1x1x128xf32>
    %24 = vector.broadcast %cst_7 : f32 to vector<1x1x128xf32>
    %25 = arith.select %20, %23, %24 : vector<1x1x128xi1>, vector<1x1x128xf32>
    %26 = vector.broadcast %15 : f32 to vector<1x1x128xf32>
    %27 = arith.select %18, %26, %25 : vector<1x1x128xi1>, vector<1x1x128xf32>
    %c0_8 = arith.constant 0 : index
    %c0_9 = arith.constant 0 : index
    %c0_10 = arith.constant 0 : index
    %28 = vector.load %arg2[%c0_8, %c0_9, %c0_10] : memref<1x1x128xf32, #tpu.memory_space<vmem>>, vector<1x1x128xf32>
    tpu.vector_store %arg2[%c0_8, %c0_9, %c0_10], %27 {strides = array<i32>} : memref<1x1x128xf32, #tpu.memory_space<vmem>>, vector<1x1x128xf32>,
    return
  }
  func.func @transform_0(%arg0: i32) -> (i32, i32, i32) {
    %c0_i32 = arith.constant 0 : i32
    %c0_i32_0 = arith.constant 0 : i32
    %c0_i32_1 = arith.constant 0 : i32
    return %arg0, %c0_i32, %c0_i32_0 : i32, i32, i32
  }
  func.func @transform_1(%arg0: i32) -> (i32, i32, i32) {
    %c0_i32 = arith.constant 0 : i32
    %c0_i32_0 = arith.constant 0 : i32
    %c0_i32_1 = arith.constant 0 : i32
    return %arg0, %c0_i32, %c0_i32_0 : i32, i32, i32
  }
}

module attributes {stable_mosaic.version = 11 : i64} {
  func.func @_ln_matmul_kernel(%arg0: i32, %arg1: i32, %arg2: memref<1x8x128xf32, #tpu.memory_space<vmem>>, %arg3: memref<1x1x128xf32, #tpu.memory_space<vmem>>, %arg4: memref<128x256xf32, #tpu.memory_space<vmem>>, %arg5: memref<1x256xf32, #tpu.memory_space<vmem>>, %arg6: memref<1x8x256xf32, #tpu.memory_space<vmem>>) attributes {dimension_semantics = [#tpu.dimension_semantics<parallel>, #tpu.dimension_semantics<parallel>], iteration_bounds = array<i64: 2, 1>, scalar_prefetch = 0 : i64, scratch_operands = 0 : i64, tpu.core_type = #tpu.core_type<tc>, window_params = [{transform_indices = @transform_0, window_bounds = array<i64: 1, 8, 128>}, {transform_indices = @transform_1, window_bounds = array<i64: 1, 1, 128>}, {pipeline_mode = #tpu.pipeline_mode<synchronous>, transform_indices = @transform_2, window_bounds = array<i64: 128, 256>}, {pipeline_mode = #tpu.pipeline_mode<synchronous>, transform_indices = @transform_3, window_bounds = array<i64: 1, 256>}, {transform_indices = @transform_4, window_bounds = array<i64: 1, 8, 256>}]} {
    %c0 = arith.constant 0 : index
    %c0_0 = arith.constant 0 : index
    %c0_1 = arith.constant 0 : index
    %0 = vector.load %arg3[%c0, %c0_0, %c0_1] : memref<1x1x128xf32, #tpu.memory_space<vmem>>, vector<1x1x128xf32>
    %1 = vector.extract_strided_slice %0 {offsets = [0, 0, 0], sizes = [1, 1, 1], strides = [1, 1, 1]} : vector<1x1x128xf32> to vector<1x1x1xf32>
    %2 = vector.shape_cast %1 : vector<1x1x1xf32> to vector<1x1xf32>
    %3 = vector.extract_strided_slice %0 {offsets = [0, 0, 1], sizes = [1, 1, 1], strides = [1, 1, 1]} : vector<1x1x128xf32> to vector<1x1x1xf32>
    %4 = vector.shape_cast %3 : vector<1x1x1xf32> to vector<1x1xf32>
    %c0_2 = arith.constant 0 : index
    %c0_3 = arith.constant 0 : index
    %c0_4 = arith.constant 0 : index
    %5 = vector.load %arg2[%c0_2, %c0_3, %c0_4] : memref<1x8x128xf32, #tpu.memory_space<vmem>>, vector<1x8x128xf32>
    %6 = vector.shape_cast %5 : vector<1x8x128xf32> to vector<8x128xf32>
    %7 = vector.broadcast %2 : vector<1x1xf32> to vector<8x128xf32>
    %8 = arith.mulf %6, %7 : vector<8x128xf32>
    %9 = vector.broadcast %4 : vector<1x1xf32> to vector<8x128xf32>
    %10 = arith.addf %8, %9 : vector<8x128xf32>
    %c0_5 = arith.constant 0 : index
    %c0_6 = arith.constant 0 : index
    %11 = vector.load %arg4[%c0_5, %c0_6] : memref<128x256xf32, #tpu.memory_space<vmem>>, vector<128x256xf32>
    %cst = arith.constant dense<0.000000e+00> : vector<8x256xf32>
    %12 = tpu.matmul %10, %11, %cst {dimension_numbers = #tpu.dot_dimension_numbers<[1], [0], [0], [1], [0, 0, 1, 1], [], []>} : vector<8x128xf32>, vector<128x256xf32>, vector<8x256xf32> -> vector<8x256xf32>
    %c0_7 = arith.constant 0 : index
    %c0_8 = arith.constant 0 : index
    %13 = vector.load %arg5[%c0_7, %c0_8] : memref<1x256xf32, #tpu.memory_space<vmem>>, vector<1x256xf32>
    %14 = vector.broadcast %13 : vector<1x256xf32> to vector<8x256xf32>
    %15 = arith.addf %12, %14 : vector<8x256xf32>
    %c0_9 = arith.constant 0 : index
    %c0_10 = arith.constant 0 : index
    %c0_11 = arith.constant 0 : index
    %16 = vector.load %arg6[%c0_9, %c0_10, %c0_11] : memref<1x8x256xf32, #tpu.memory_space<vmem>>, vector<1x8x256xf32>
    %17 = vector.shape_cast %16 : vector<1x8x256xf32> to vector<8x256xf32>
    %18 = vector.shape_cast %15 : vector<8x256xf32> to vector<1x8x256xf32>
    tpu.vector_store %arg6[%c0_9, %c0_10, %c0_11], %18 {strides = array<i32>} : memref<1x8x256xf32, #tpu.memory_space<vmem>>, vector<1x8x256xf32>,
    return
  }
  func.func @transform_0(%arg0: i32, %arg1: i32) -> (i32, i32, i32) {
    %c0_i32 = arith.constant 0 : i32
    %c0_i32_0 = arith.constant 0 : i32
    return %arg0, %arg1, %c0_i32 : i32, i32, i32
  }
  func.func @transform_1(%arg0: i32, %arg1: i32) -> (i32, i32, i32) {
    %c0_i32 = arith.constant 0 : i32
    %c0_i32_0 = arith.constant 0 : i32
    %c0_i32_1 = arith.constant 0 : i32
    return %arg0, %c0_i32, %c0_i32_0 : i32, i32, i32
  }
  func.func @transform_2(%arg0: i32, %arg1: i32) -> (i32, i32) {
    %c0_i32 = arith.constant 0 : i32
    %c0_i32_0 = arith.constant 0 : i32
    %c0_i32_1 = arith.constant 0 : i32
    return %c0_i32, %c0_i32_0 : i32, i32
  }
  func.func @transform_3(%arg0: i32, %arg1: i32) -> (i32, i32) {
    %c0_i32 = arith.constant 0 : i32
    %c0_i32_0 = arith.constant 0 : i32
    %c0_i32_1 = arith.constant 0 : i32
    return %c0_i32, %c0_i32_0 : i32, i32
  }
  func.func @transform_4(%arg0: i32, %arg1: i32) -> (i32, i32, i32) {
    %c0_i32 = arith.constant 0 : i32
    %c0_i32_0 = arith.constant 0 : i32
    return %arg0, %arg1, %c0_i32 : i32, i32, i32
  }
}

module attributes {stable_mosaic.version = 11 : i64} {
  func.func @_mixffn_tail_kernel(%arg0: i32, %arg1: i32, %arg2: memref<1x4x4x128xf32, #tpu.memory_space<vmem>>, %arg3: memref<1x1x4x128xf32, #tpu.memory_space<vmem>>, %arg4: memref<1x1x4x128xf32, #tpu.memory_space<vmem>>, %arg5: memref<1x16x64xf32, #tpu.memory_space<vmem>>, %arg6: memref<1x1x128xf32, #tpu.memory_space<vmem>>, %arg7: memref<9x128xf32, #tpu.memory_space<vmem>>, %arg8: memref<1x128xf32, #tpu.memory_space<vmem>>, %arg9: memref<128x128xf32, #tpu.memory_space<vmem>>, %arg10: memref<1x128xf32, #tpu.memory_space<vmem>>, %arg11: memref<128x64xf32, #tpu.memory_space<vmem>>, %arg12: memref<1x64xf32, #tpu.memory_space<vmem>>, %arg13: memref<1x16x64xf32, #tpu.memory_space<vmem>>) attributes {dimension_semantics = [#tpu.dimension_semantics<parallel>, #tpu.dimension_semantics<parallel>], iteration_bounds = array<i64: 2, 1>, scalar_prefetch = 0 : i64, scratch_operands = 0 : i64, tpu.core_type = #tpu.core_type<tc>, window_params = [{transform_indices = @transform_0, window_bounds = array<i64: 1, 4, 4, 128>}, {transform_indices = @transform_1, window_bounds = array<i64: 1, 1, 4, 128>}, {transform_indices = @transform_2, window_bounds = array<i64: 1, 1, 4, 128>}, {transform_indices = @transform_3, window_bounds = array<i64: 1, 16, 64>}, {transform_indices = @transform_4, window_bounds = array<i64: 1, 1, 128>}, {pipeline_mode = #tpu.pipeline_mode<synchronous>, transform_indices = @transform_5, window_bounds = array<i64: 9, 128>}, {pipeline_mode = #tpu.pipeline_mode<synchronous>, transform_indices = @transform_6, window_bounds = array<i64: 1, 128>}, {pipeline_mode = #tpu.pipeline_mode<synchronous>, transform_indices = @transform_7, window_bounds = array<i64: 128, 128>}, {pipeline_mode = #tpu.pipeline_mode<synchronous>, transform_indices = @transform_8, window_bounds = array<i64: 1, 128>}, {pipeline_mode = #tpu.pipeline_mode<synchronous>, transform_indices = @transform_9, window_bounds = array<i64: 128, 64>}, {pipeline_mode = #tpu.pipeline_mode<synchronous>, transform_indices = @transform_10, window_bounds = array<i64: 1, 64>}, {transform_indices = @transform_11, window_bounds = array<i64: 1, 16, 64>}]} {
    %c0 = arith.constant 0 : index
    %c0_0 = arith.constant 0 : index
    %c0_1 = arith.constant 0 : index
    %c0_2 = arith.constant 0 : index
    %0 = vector.load %arg3[%c0, %c0_0, %c0_1, %c0_2] : memref<1x1x4x128xf32, #tpu.memory_space<vmem>>, vector<1x1x4x128xf32>
    %c0_i32 = arith.constant 0 : i32
    %1 = arith.cmpi sgt, %arg1, %c0_i32 : i32
    %2 = arith.extui %1 : i1 to i32
    %3 = arith.sitofp %2 : i32 to f32
    %4 = vector.broadcast %3 : f32 to vector<1x1x4x128xf32>
    %5 = arith.mulf %0, %4 : vector<1x1x4x128xf32>
    %c0_3 = arith.constant 0 : index
    %c0_4 = arith.constant 0 : index
    %c0_5 = arith.constant 0 : index
    %c0_6 = arith.constant 0 : index
    %6 = vector.load %arg4[%c0_3, %c0_4, %c0_5, %c0_6] : memref<1x1x4x128xf32, #tpu.memory_space<vmem>>, vector<1x1x4x128xf32>
    %c0_i32_7 = arith.constant 0 : i32
    %7 = arith.cmpi slt, %arg1, %c0_i32_7 : i32
    %8 = arith.extui %7 : i1 to i32
    %9 = arith.sitofp %8 : i32 to f32
    %10 = vector.broadcast %9 : f32 to vector<1x1x4x128xf32>
    %11 = arith.mulf %6, %10 : vector<1x1x4x128xf32>
    %c0_8 = arith.constant 0 : index
    %c0_9 = arith.constant 0 : index
    %c0_10 = arith.constant 0 : index
    %c0_11 = arith.constant 0 : index
    %12 = vector.load %arg2[%c0_8, %c0_9, %c0_10, %c0_11] : memref<1x4x4x128xf32, #tpu.memory_space<vmem>>, vector<1x4x4x128xf32>
    %13 = tpu.concatenate %5, %12, %11 in 1 : vector<1x1x4x128xf32>, vector<1x4x4x128xf32>, vector<1x1x4x128xf32> -> vector<1x6x4x128xf32>
    %cst = arith.constant 0.000000e+00 : f32
    %14 = vector.broadcast %cst : f32 to vector<1x6x1x128xf32>
    %15 = tpu.concatenate %14, %13, %14 in 2 : vector<1x6x1x128xf32>, vector<1x6x4x128xf32>, vector<1x6x1x128xf32> -> vector<1x6x6x128xf32>
    %c0_12 = arith.constant 0 : index
    %c0_13 = arith.constant 0 : index
    %16 = vector.load %arg7[%c0_12, %c0_13] : memref<9x128xf32, #tpu.memory_space<vmem>>, vector<9x128xf32>
    %cst_14 = arith.constant 0.000000e+00 : f32
    %17 = vector.broadcast %cst_14 : f32 to vector<1x4x4x128xf32>
    %18 = vector.extract_strided_slice %15 {offsets = [0, 0, 0, 0], sizes = [1, 6, 4, 128], strides = [1, 1, 1, 1]} : vector<1x6x6x128xf32> to vector<1x6x4x128xf32>
    %19 = vector.extract_strided_slice %18 {offsets = [0, 0, 0, 0], sizes = [1, 4, 4, 128], strides = [1, 1, 1, 1]} : vector<1x6x4x128xf32> to vector<1x4x4x128xf32>
    %20 = vector.extract_strided_slice %16 {offsets = [0, 0], sizes = [1, 128], strides = [1, 1]} : vector<9x128xf32> to vector<1x128xf32>
    %21 = vector.shape_cast %20 : vector<1x128xf32> to vector<128xf32>
    %22 = vector.shape_cast %21 : vector<128xf32> to vector<1x1x1x128xf32>
    %23 = vector.broadcast %22 : vector<1x1x1x128xf32> to vector<1x4x4x128xf32>
    %24 = arith.mulf %19, %23 : vector<1x4x4x128xf32>
    %25 = arith.addf %17, %24 : vector<1x4x4x128xf32>
    %26 = vector.extract_strided_slice %18 {offsets = [0, 1, 0, 0], sizes = [1, 4, 4, 128], strides = [1, 1, 1, 1]} : vector<1x6x4x128xf32> to vector<1x4x4x128xf32>
    %27 = vector.extract_strided_slice %16 {offsets = [3, 0], sizes = [1, 128], strides = [1, 1]} : vector<9x128xf32> to vector<1x128xf32>
    %28 = vector.shape_cast %27 : vector<1x128xf32> to vector<128xf32>
    %29 = vector.shape_cast %28 : vector<128xf32> to vector<1x1x1x128xf32>
    %30 = vector.broadcast %29 : vector<1x1x1x128xf32> to vector<1x4x4x128xf32>
    %31 = arith.mulf %26, %30 : vector<1x4x4x128xf32>
    %32 = arith.addf %25, %31 : vector<1x4x4x128xf32>
    %33 = vector.extract_strided_slice %18 {offsets = [0, 2, 0, 0], sizes = [1, 4, 4, 128], strides = [1, 1, 1, 1]} : vector<1x6x4x128xf32> to vector<1x4x4x128xf32>
    %34 = vector.extract_strided_slice %16 {offsets = [6, 0], sizes = [1, 128], strides = [1, 1]} : vector<9x128xf32> to vector<1x128xf32>
    %35 = vector.shape_cast %34 : vector<1x128xf32> to vector<128xf32>
    %36 = vector.shape_cast %35 : vector<128xf32> to vector<1x1x1x128xf32>
    %37 = vector.broadcast %36 : vector<1x1x1x128xf32> to vector<1x4x4x128xf32>
    %38 = arith.mulf %33, %37 : vector<1x4x4x128xf32>
    %39 = arith.addf %32, %38 : vector<1x4x4x128xf32>
    %40 = vector.extract_strided_slice %15 {offsets = [0, 0, 1, 0], sizes = [1, 6, 4, 128], strides = [1, 1, 1, 1]} : vector<1x6x6x128xf32> to vector<1x6x4x128xf32>
    %41 = vector.extract_strided_slice %40 {offsets = [0, 0, 0, 0], sizes = [1, 4, 4, 128], strides = [1, 1, 1, 1]} : vector<1x6x4x128xf32> to vector<1x4x4x128xf32>
    %42 = vector.extract_strided_slice %16 {offsets = [1, 0], sizes = [1, 128], strides = [1, 1]} : vector<9x128xf32> to vector<1x128xf32>
    %43 = vector.shape_cast %42 : vector<1x128xf32> to vector<128xf32>
    %44 = vector.shape_cast %43 : vector<128xf32> to vector<1x1x1x128xf32>
    %45 = vector.broadcast %44 : vector<1x1x1x128xf32> to vector<1x4x4x128xf32>
    %46 = arith.mulf %41, %45 : vector<1x4x4x128xf32>
    %47 = arith.addf %39, %46 : vector<1x4x4x128xf32>
    %48 = vector.extract_strided_slice %40 {offsets = [0, 1, 0, 0], sizes = [1, 4, 4, 128], strides = [1, 1, 1, 1]} : vector<1x6x4x128xf32> to vector<1x4x4x128xf32>
    %49 = vector.extract_strided_slice %16 {offsets = [4, 0], sizes = [1, 128], strides = [1, 1]} : vector<9x128xf32> to vector<1x128xf32>
    %50 = vector.shape_cast %49 : vector<1x128xf32> to vector<128xf32>
    %51 = vector.shape_cast %50 : vector<128xf32> to vector<1x1x1x128xf32>
    %52 = vector.broadcast %51 : vector<1x1x1x128xf32> to vector<1x4x4x128xf32>
    %53 = arith.mulf %48, %52 : vector<1x4x4x128xf32>
    %54 = arith.addf %47, %53 : vector<1x4x4x128xf32>
    %55 = vector.extract_strided_slice %40 {offsets = [0, 2, 0, 0], sizes = [1, 4, 4, 128], strides = [1, 1, 1, 1]} : vector<1x6x4x128xf32> to vector<1x4x4x128xf32>
    %56 = vector.extract_strided_slice %16 {offsets = [7, 0], sizes = [1, 128], strides = [1, 1]} : vector<9x128xf32> to vector<1x128xf32>
    %57 = vector.shape_cast %56 : vector<1x128xf32> to vector<128xf32>
    %58 = vector.shape_cast %57 : vector<128xf32> to vector<1x1x1x128xf32>
    %59 = vector.broadcast %58 : vector<1x1x1x128xf32> to vector<1x4x4x128xf32>
    %60 = arith.mulf %55, %59 : vector<1x4x4x128xf32>
    %61 = arith.addf %54, %60 : vector<1x4x4x128xf32>
    %62 = vector.extract_strided_slice %15 {offsets = [0, 0, 2, 0], sizes = [1, 6, 4, 128], strides = [1, 1, 1, 1]} : vector<1x6x6x128xf32> to vector<1x6x4x128xf32>
    %63 = vector.extract_strided_slice %62 {offsets = [0, 0, 0, 0], sizes = [1, 4, 4, 128], strides = [1, 1, 1, 1]} : vector<1x6x4x128xf32> to vector<1x4x4x128xf32>
    %64 = vector.extract_strided_slice %16 {offsets = [2, 0], sizes = [1, 128], strides = [1, 1]} : vector<9x128xf32> to vector<1x128xf32>
    %65 = vector.shape_cast %64 : vector<1x128xf32> to vector<128xf32>
    %66 = vector.shape_cast %65 : vector<128xf32> to vector<1x1x1x128xf32>
    %67 = vector.broadcast %66 : vector<1x1x1x128xf32> to vector<1x4x4x128xf32>
    %68 = arith.mulf %63, %67 : vector<1x4x4x128xf32>
    %69 = arith.addf %61, %68 : vector<1x4x4x128xf32>
    %70 = vector.extract_strided_slice %62 {offsets = [0, 1, 0, 0], sizes = [1, 4, 4, 128], strides = [1, 1, 1, 1]} : vector<1x6x4x128xf32> to vector<1x4x4x128xf32>
    %71 = vector.extract_strided_slice %16 {offsets = [5, 0], sizes = [1, 128], strides = [1, 1]} : vector<9x128xf32> to vector<1x128xf32>
    %72 = vector.shape_cast %71 : vector<1x128xf32> to vector<128xf32>
    %73 = vector.shape_cast %72 : vector<128xf32> to vector<1x1x1x128xf32>
    %74 = vector.broadcast %73 : vector<1x1x1x128xf32> to vector<1x4x4x128xf32>
    %75 = arith.mulf %70, %74 : vector<1x4x4x128xf32>
    %76 = arith.addf %69, %75 : vector<1x4x4x128xf32>
    %77 = vector.extract_strided_slice %62 {offsets = [0, 2, 0, 0], sizes = [1, 4, 4, 128], strides = [1, 1, 1, 1]} : vector<1x6x4x128xf32> to vector<1x4x4x128xf32>
    %78 = vector.extract_strided_slice %16 {offsets = [8, 0], sizes = [1, 128], strides = [1, 1]} : vector<9x128xf32> to vector<1x128xf32>
    %79 = vector.shape_cast %78 : vector<1x128xf32> to vector<128xf32>
    %80 = vector.shape_cast %79 : vector<128xf32> to vector<1x1x1x128xf32>
    %81 = vector.broadcast %80 : vector<1x1x1x128xf32> to vector<1x4x4x128xf32>
    %82 = arith.mulf %77, %81 : vector<1x4x4x128xf32>
    %83 = arith.addf %76, %82 : vector<1x4x4x128xf32>
    %c0_15 = arith.constant 0 : index
    %c0_16 = arith.constant 0 : index
    %84 = vector.load %arg8[%c0_15, %c0_16] : memref<1x128xf32, #tpu.memory_space<vmem>>, vector<1x128xf32>
    %85 = vector.shape_cast %84 : vector<1x128xf32> to vector<1x1x1x128xf32>
    %86 = vector.broadcast %85 : vector<1x1x1x128xf32> to vector<1x4x4x128xf32>
    %87 = arith.addf %83, %86 : vector<1x4x4x128xf32>
    %88 = vector.shape_cast %87 : vector<1x4x4x128xf32> to vector<16x128xf32>
    %c0_17 = arith.constant 0 : index
    %c0_18 = arith.constant 0 : index
    %89 = vector.load %arg9[%c0_17, %c0_18] : memref<128x128xf32, #tpu.memory_space<vmem>>, vector<128x128xf32>
    %cst_19 = arith.constant dense<0.000000e+00> : vector<16x128xf32>
    %90 = tpu.matmul %88, %89, %cst_19 {dimension_numbers = #tpu.dot_dimension_numbers<[1], [0], [0], [1], [0, 0, 1, 1], [], []>} : vector<16x128xf32>, vector<128x128xf32>, vector<16x128xf32> -> vector<16x128xf32>
    %c0_20 = arith.constant 0 : index
    %c0_21 = arith.constant 0 : index
    %91 = vector.load %arg10[%c0_20, %c0_21] : memref<1x128xf32, #tpu.memory_space<vmem>>, vector<1x128xf32>
    %92 = vector.broadcast %91 : vector<1x128xf32> to vector<16x128xf32>
    %93 = arith.addf %90, %92 : vector<16x128xf32>
    %cst_22 = arith.constant 5.000000e-01 : f32
    %94 = vector.broadcast %cst_22 : f32 to vector<16x128xf32>
    %95 = arith.mulf %94, %93 : vector<16x128xf32>
    %cst_23 = arith.constant 4.471500e-02 : f32
    %96 = vector.broadcast %cst_23 : f32 to vector<16x128xf32>
    %97 = arith.mulf %96, %93 : vector<16x128xf32>
    %98 = arith.mulf %97, %93 : vector<16x128xf32>
    %99 = arith.mulf %98, %93 : vector<16x128xf32>
    %100 = arith.addf %93, %99 : vector<16x128xf32>
    %cst_24 = arith.constant 0.797884583 : f32
    %101 = vector.broadcast %cst_24 : f32 to vector<16x128xf32>
    %102 = arith.mulf %101, %100 : vector<16x128xf32>
    %103 = math.tanh %102 : vector<16x128xf32>
    %cst_25 = arith.constant 1.000000e+00 : f32
    %104 = vector.broadcast %cst_25 : f32 to vector<16x128xf32>
    %105 = arith.addf %104, %103 : vector<16x128xf32>
    %106 = arith.mulf %95, %105 : vector<16x128xf32>
    %c0_26 = arith.constant 0 : index
    %c0_27 = arith.constant 0 : index
    %107 = vector.load %arg11[%c0_26, %c0_27] : memref<128x64xf32, #tpu.memory_space<vmem>>, vector<128x64xf32>
    %cst_28 = arith.constant dense<0.000000e+00> : vector<16x64xf32>
    %108 = tpu.matmul %106, %107, %cst_28 {dimension_numbers = #tpu.dot_dimension_numbers<[1], [0], [0], [1], [0, 0, 1, 1], [], []>} : vector<16x128xf32>, vector<128x64xf32>, vector<16x64xf32> -> vector<16x64xf32>
    %c0_29 = arith.constant 0 : index
    %c0_30 = arith.constant 0 : index
    %109 = vector.load %arg12[%c0_29, %c0_30] : memref<1x64xf32, #tpu.memory_space<vmem>>, vector<1x64xf32>
    %110 = vector.broadcast %109 : vector<1x64xf32> to vector<16x64xf32>
    %111 = arith.addf %108, %110 : vector<16x64xf32>
    %c0_31 = arith.constant 0 : index
    %c0_32 = arith.constant 0 : index
    %c0_33 = arith.constant 0 : index
    %112 = vector.load %arg6[%c0_31, %c0_32, %c0_33] : memref<1x1x128xf32, #tpu.memory_space<vmem>>, vector<1x1x128xf32>
    %113 = vector.extract_strided_slice %112 {offsets = [0, 0, 0], sizes = [1, 1, 1], strides = [1, 1, 1]} : vector<1x1x128xf32> to vector<1x1x1xf32>
    %114 = vector.shape_cast %113 : vector<1x1x1xf32> to vector<1x1xf32>
    %115 = vector.extract_strided_slice %112 {offsets = [0, 0, 1], sizes = [1, 1, 1], strides = [1, 1, 1]} : vector<1x1x128xf32> to vector<1x1x1xf32>
    %116 = vector.shape_cast %115 : vector<1x1x1xf32> to vector<1x1xf32>
    %c0_34 = arith.constant 0 : index
    %c0_35 = arith.constant 0 : index
    %c0_36 = arith.constant 0 : index
    %117 = vector.load %arg5[%c0_34, %c0_35, %c0_36] : memref<1x16x64xf32, #tpu.memory_space<vmem>>, vector<1x16x64xf32>
    %118 = vector.shape_cast %117 : vector<1x16x64xf32> to vector<16x64xf32>
    %119 = vector.broadcast %114 : vector<1x1xf32> to vector<16x64xf32>
    %120 = arith.mulf %118, %119 : vector<16x64xf32>
    %121 = vector.broadcast %116 : vector<1x1xf32> to vector<16x64xf32>
    %122 = arith.addf %120, %121 : vector<16x64xf32>
    %123 = arith.addf %111, %122 : vector<16x64xf32>
    %c0_37 = arith.constant 0 : index
    %c0_38 = arith.constant 0 : index
    %c0_39 = arith.constant 0 : index
    %124 = vector.load %arg13[%c0_37, %c0_38, %c0_39] : memref<1x16x64xf32, #tpu.memory_space<vmem>>, vector<1x16x64xf32>
    %125 = vector.shape_cast %124 : vector<1x16x64xf32> to vector<16x64xf32>
    %126 = vector.shape_cast %123 : vector<16x64xf32> to vector<1x16x64xf32>
    tpu.vector_store %arg13[%c0_37, %c0_38, %c0_39], %126 {strides = array<i32>} : memref<1x16x64xf32, #tpu.memory_space<vmem>>, vector<1x16x64xf32>,
    return
  }
  func.func @transform_0(%arg0: i32, %arg1: i32) -> (i32, i32, i32, i32) {
    %c0_i32 = arith.constant 0 : i32
    %c0_i32_0 = arith.constant 0 : i32
    %c0_i32_1 = arith.constant 0 : i32
    return %arg0, %arg1, %c0_i32, %c0_i32_0 : i32, i32, i32, i32
  }
  func.func @transform_1(%arg0: i32, %arg1: i32) -> (i32, i32, i32, i32) {
    %c4_i32 = arith.constant 4 : i32
    %0 = arith.muli %arg1, %c4_i32 : i32
    %c1_i32 = arith.constant 1 : i32
    %1 = arith.subi %0, %c1_i32 : i32
    %c0_i32 = arith.constant 0 : i32
    %2 = arith.maxsi %1, %c0_i32 : i32
    %c0_i32_0 = arith.constant 0 : i32
    %c0_i32_1 = arith.constant 0 : i32
    %c0_i32_2 = arith.constant 0 : i32
    return %arg0, %2, %c0_i32_0, %c0_i32_1 : i32, i32, i32, i32
  }
  func.func @transform_2(%arg0: i32, %arg1: i32) -> (i32, i32, i32, i32) {
    %c1_i32 = arith.constant 1 : i32
    %0 = arith.addi %arg1, %c1_i32 : i32
    %c4_i32 = arith.constant 4 : i32
    %1 = arith.muli %0, %c4_i32 : i32
    %c3_i32 = arith.constant 3 : i32
    %2 = arith.minsi %1, %c3_i32 : i32
    %c0_i32 = arith.constant 0 : i32
    %c0_i32_0 = arith.constant 0 : i32
    %c0_i32_1 = arith.constant 0 : i32
    return %arg0, %2, %c0_i32, %c0_i32_0 : i32, i32, i32, i32
  }
  func.func @transform_3(%arg0: i32, %arg1: i32) -> (i32, i32, i32) {
    %c0_i32 = arith.constant 0 : i32
    %c0_i32_0 = arith.constant 0 : i32
    return %arg0, %arg1, %c0_i32 : i32, i32, i32
  }
  func.func @transform_4(%arg0: i32, %arg1: i32) -> (i32, i32, i32) {
    %c0_i32 = arith.constant 0 : i32
    %c0_i32_0 = arith.constant 0 : i32
    %c0_i32_1 = arith.constant 0 : i32
    return %arg0, %c0_i32, %c0_i32_0 : i32, i32, i32
  }
  func.func @transform_5(%arg0: i32, %arg1: i32) -> (i32, i32) {
    %c0_i32 = arith.constant 0 : i32
    %c0_i32_0 = arith.constant 0 : i32
    %c0_i32_1 = arith.constant 0 : i32
    return %c0_i32, %c0_i32_0 : i32, i32
  }
  func.func @transform_6(%arg0: i32, %arg1: i32) -> (i32, i32) {
    %c0_i32 = arith.constant 0 : i32
    %c0_i32_0 = arith.constant 0 : i32
    %c0_i32_1 = arith.constant 0 : i32
    return %c0_i32, %c0_i32_0 : i32, i32
  }
  func.func @transform_7(%arg0: i32, %arg1: i32) -> (i32, i32) {
    %c0_i32 = arith.constant 0 : i32
    %c0_i32_0 = arith.constant 0 : i32
    %c0_i32_1 = arith.constant 0 : i32
    return %c0_i32, %c0_i32_0 : i32, i32
  }
  func.func @transform_8(%arg0: i32, %arg1: i32) -> (i32, i32) {
    %c0_i32 = arith.constant 0 : i32
    %c0_i32_0 = arith.constant 0 : i32
    %c0_i32_1 = arith.constant 0 : i32
    return %c0_i32, %c0_i32_0 : i32, i32
  }
  func.func @transform_9(%arg0: i32, %arg1: i32) -> (i32, i32) {
    %c0_i32 = arith.constant 0 : i32
    %c0_i32_0 = arith.constant 0 : i32
    %c0_i32_1 = arith.constant 0 : i32
    return %c0_i32, %c0_i32_0 : i32, i32
  }
  func.func @transform_10(%arg0: i32, %arg1: i32) -> (i32, i32) {
    %c0_i32 = arith.constant 0 : i32
    %c0_i32_0 = arith.constant 0 : i32
    %c0_i32_1 = arith.constant 0 : i32
    return %c0_i32, %c0_i32_0 : i32, i32
  }
  func.func @transform_11(%arg0: i32, %arg1: i32) -> (i32, i32, i32) {
    %c0_i32 = arith.constant 0 : i32
    %c0_i32_0 = arith.constant 0 : i32
    return %arg0, %arg1, %c0_i32 : i32, i32, i32
  }
}

</mosaic_0001>

<llo_original>
// kernel: _lambda_.9
$region0: #{_lambda_.9}
  #allocation0 [shape = 'u32[]', space=smem, size = 0x4, offset = 0x4, fixed_abs, tag = 'smem constant byte address 0x4 - core index']
  #allocation1 [shape = 'u32[144,128]{1,0:T(1,128)}', space=vmem, size = 0x12000, scoped, tag = 'internal scratch']
  %s0 = inlined_call_operand.vmem [shape: f32[2,16,128], index: 0, kind: input, shape index: {}]
  %s1 = inlined_call_operand.vmem [shape: f32[2,1,128], index: 1, kind: output, shape index: {}]
  %s2 = sld [smem:[#allocation0]]
  $region37: #{_lambda_.9} parent=0
    _
  %s4 = ssub.s32 1, %s2
  %s5 = scalar_select 0, %s4, %s2
  loop: start=0, step=1, limit=4
  $region2: #{_lambda_.9} parent=0 // loop_pre_header
    _
  $region3: #{_lambda_.9} parent=0 // loop_header
    %s7 = sphi 0, %s11
    %p8 = scmp.ge.s32.totalorder %s7, 4
    %s17 = sphi 0, %s19
    %s20 = sphi 0, %s17
    %s21 = sphi 0, %s20
    %s37 = sphi 0, %s21
    %s43 = sphi 0, %s45
    %s46 = sphi 0, %s43
    %s47 = sphi 0, %s46
    %s63 = sphi 0, %s47
  $region4: #{_lambda_.9} parent=0 // loop_header_branch
    %10 = sbr.rel (%p8) target = $region8
  $region5: #{_lambda_.9} parent=0 // loop_body
    %s12 = ssub.s32 %s7, 1
    %s13 = ssub.s32 %s7, 2
    %s14 = sadd.s32 %s7, 1
    %s15 = ssub.s32 %s7, %s14
    %p16 = scmp.eq.s32.totalorder %s15, 0
    %s18 = sadd.s32 %s17, 1
    %s19 = scalar_select %p16, %s17, %s18
    %p22 = pneg %p16
    %p23 = scmp.eq.s32.totalorder %s7, 1
    %p24 = por %p22, %p23
    %p25 = scmp.ne.s32.totalorder %s17, %s20
    %p26 = scmp.eq.s32.totalorder %s7, 0
    %p27 = por %p25, %p26
    %p28 = scmp.ne.s32.totalorder %s17, %s20
    %p29 = scmp.eq.s32.totalorder %s12, 1
    %p30 = por %p28, %p29
    %p31 = scmp.ne.s32.totalorder %s20, %s21
    %p32 = scmp.eq.s32.totalorder %s12, 0
    %p33 = por %p31, %p32
    %p34 = scmp.ne.s32.totalorder %s20, %s21
    %p35 = scmp.eq.s32.totalorder %s13, 1
    %p36 = por %p34, %p35
    %p38 = scmp.ne.s32.totalorder %s21, %s37
    %p39 = scmp.eq.s32.totalorder %s13, 0
    %p40 = por %p38, %p39
    %s41 = ssub.s32 %s7, %s14
    %p42 = scmp.eq.s32.totalorder %s41, 0
    %s44 = sadd.s32 %s43, 1
    %s45 = scalar_select %p42, %s43, %s44
    %p48 = pneg %p42
    %p49 = scmp.eq.s32.totalorder %s7, 1
    %p50 = por %p48, %p49
    %p51 = scmp.ne.s32.totalorder %s43, %s46
    %p52 = scmp.eq.s32.totalorder %s7, 0
    %p53 = por %p51, %p52
    %p54 = scmp.ne.s32.totalorder %s43, %s46
    %p55 = scmp.eq.s32.totalorder %s12, 1
    %p56 = por %p54, %p55
    %p57 = scmp.ne.s32.totalorder %s46, %s47
    %p58 = scmp.eq.s32.totalorder %s12, 0
    %p59 = por %p57, %p58
    %p60 = scmp.ne.s32.totalorder %s46, %s47
    %p61 = scmp.eq.s32.totalorder %s13, 1
    %p62 = por %p60, %p61
    %p64 = scmp.ne.s32.totalorder %s47, %s63
    %p65 = scmp.eq.s32.totalorder %s13, 0
    %p66 = por %p64, %p65
    %p67 = scmp.le.s32.totalorder 1, %s7
    %p68 = scmp.lt.s32.totalorder %s7, 3
    %p69 = pnand %p67, %p68
    %p70 = pneg %p69
    // Predicated region
    $region9: #{_lambda_.9} parent=5 // pred_check
      _
    $region10: #{_lambda_.9} parent=5 // pred_check_branch
      %72 = sbr.rel (%p69) target = $region12
    $region11: #{_lambda_.9} parent=5 // pred_region
      %s73 = ssub.s32 %s7, 1
    $region12: #{_lambda_.9} parent=5 // pred_fallthru
      _
    %p74 = scmp.lt.s32.totalorder %s7, 2
    // Predicated region
    $region13: #{_lambda_.9} parent=5 // pred_check
      %p75 = pneg %p74
    $region14: #{_lambda_.9} parent=5 // pred_check_branch
      %77 = sbr.rel (%p75) target = $region16
    $region15: #{_lambda_.9} parent=5 // pred_region
      // Predicated region
      $region17: #{_lambda_.9} parent=15 // pred_check
        %p78 = pneg %p27
      $region18: #{_lambda_.9} parent=15 // pred_check_branch
        %80 = sbr.rel (%p78) target = $region20
      $region19: #{_lambda_.9} parent=15 // pred_region
        %p81 = scmp.lt.s32.totalorder %s7, 1
        %s82 = scalar_select %p81, %s7, 1
        %s83 = smul.addr %s82, 2
        %s84 = smul.addr %s83, 8
        %s85 = scalar_lea.vmem %s0, %s84
      $region20: #{_lambda_.9} parent=15 // pred_fallthru
        _
    $region16: #{_lambda_.9} parent=5 // pred_fallthru
      _
    %p86 = scmp.le.s32.totalorder 1, %s7
    %p87 = scmp.lt.s32.totalorder %s7, 3
    %p88 = pnand %p86, %p87
    %p89 = pneg %p88
    // Predicated region
    $region21: #{_lambda_.9} parent=5 // pred_check
      _
    $region22: #{_lambda_.9} parent=5 // pred_check_branch
      %91 = sbr.rel (%p88) target = $region24
    $region23: #{_lambda_.9} parent=5 // pred_region
      %s92 = ssub.s32 %s7, 1
      %p93 = scmp.lt.s32.totalorder %s12, 1
      %s94 = scalar_select %p93, %s12, 1
      %s95 = smul.addr %s94, 2
      %s96 = smul.addr %s95, 8
      %s97 = scalar_lea.vmem %s0, %s96
      %p98 = pneg %p33
      %p99 = pneg %p30
      %p100 = pneg %p59
      %p101 = pneg %p56
      %p102 = scmp.lt.s32.totalorder %s12, 1
      %s103 = scalar_select %p102, %s12, 1
      %s104 = scalar_lea.vmem %s1, %s103
      %p105 = scmp.lt.s32.totalorder %s12, 1
      %s106 = scalar_select %p105, %s12, 1
      %s107 = smul.addr %s106, 2
      %s108 = smul.addr %s107, 8
      %s109 = scalar_lea.vmem %s0, %s108
      %p110 = scmp.lt.s32.totalorder %s12, 1
      %s111 = scalar_select %p110, %s12, 1
      %s112 = scalar_lea.vmem %s1, %s111
      %v113 = vld [vmem:[%s109] sm:$0xff]
      %v114 = vld [vmem:[%s109 + $0x8] sm:$0xff]
      %v115 = vadd.f32 %v113, %v114
      %116 = vadd.xlane.f32.xlu0 %v115
      %v117 = vpop.xlane.xlu0 %116
      %v118 = vrot.slane %v117, 4
      %v119 = vadd.f32 %v117, %v118
      %v120 = vrot.slane %v119, 2
      %v121 = vadd.f32 %v119, %v120
      %v122 = vrot.slane %v121, 1
      %v123 = vadd.f32 %v121, %v122
      %s124 = vtos %v123
      %s125 = smul.f32 %s124, 0.00048828125
      %v126 = vmul.f32 %v113, %v113
      %v127 = vmul.f32 %v114, %v114
      %v128 = vadd.f32 %v126, %v127
      %129 = vadd.xlane.f32.xlu0 %v128
      %v130 = vpop.xlane.xlu0 %129
      %v131 = vrot.slane %v130, 4
      %v132 = vadd.f32 %v130, %v131
      %v133 = vrot.slane %v132, 2
      %v134 = vadd.f32 %v132, %v133
      %v135 = vrot.slane %v134, 1
      %v136 = vadd.f32 %v134, %v135
      %s137 = vtos %v136
      %s138 = smul.f32 %s137, 0.00048828125
      %s139 = smul.f32 %s125, %s125
      %s140 = ssub.f32 %s138, %s139
      %s141 = sadd.f32 %s140, 1e-05
      %v142 = vstv %s141
      %v143 = vrsqrt.pop %v142
      %s144 = vtos %v143
      %v145 = vlaneseq
      %v146 = vand.u32 %v145, 127
      %vm147 = vcmp.eq.s32.totalorder %v146, 0
      %vm148 = vcmp.eq.s32.totalorder %v146, 1
      %s149 = ssub.f32 0.0, %s125
      %s150 = smul.f32 %s149, %s144
      %v151 = vstv %s150
      %v152 = vsel %vm148, %v151, 0.0
      %v153 = vstv %s144
      %v154 = vsel %vm147, %v153, %v152
      %155 = vst [vmem:[%s112] sm:$0x1] %v154
      %p156 = scmp.lt.s32.totalorder %s12, 1
      %s157 = scalar_select %p156, %s12, 1
      %s158 = scalar_lea.vmem %s1, %s157
      // Predicated region
      $region25: #{_lambda_.9} parent=23 // pred_check
        %p159 = pneg %p56
      $region26: #{_lambda_.9} parent=23 // pred_check_branch
        %161 = sbr.rel (%p159) target = $region28
      $region27: #{_lambda_.9} parent=23 // pred_region
        _
      $region28: #{_lambda_.9} parent=23 // pred_fallthru
        _
    $region24: #{_lambda_.9} parent=5 // pred_fallthru
      _
    %p162 = scmp.le.s32.totalorder 2, %s7
    // Predicated region
    $region29: #{_lambda_.9} parent=5 // pred_check
      %p163 = pneg %p162
    $region30: #{_lambda_.9} parent=5 // pred_check_branch
      %165 = sbr.rel (%p163) target = $region32
    $region31: #{_lambda_.9} parent=5 // pred_region
      %s166 = ssub.s32 %s7, 2
      // Predicated region
      $region33: #{_lambda_.9} parent=31 // pred_check
        %p167 = pneg %p62
      $region34: #{_lambda_.9} parent=31 // pred_check_branch
        %169 = sbr.rel (%p167) target = $region36
      $region35: #{_lambda_.9} parent=31 // pred_region
        %p170 = scmp.lt.s32.totalorder %s13, 1
        %s171 = scalar_select %p170, %s13, 1
        %s172 = scalar_lea.vmem %s1, %s171
      $region36: #{_lambda_.9} parent=31 // pred_fallthru
        _
    $region32: #{_lambda_.9} parent=5 // pred_fallthru
      _
  $region6: #{_lambda_.9} parent=0 // loop_footer
    %s11 = sadd.s32 1, %s7
  $region7: #{_lambda_.9} parent=0 // loop_footer_branch
    %6 = sbr.rel target = $region3
  $region8: #{_lambda_.9} parent=0 // loop_exit
    _

// kernel: _lambda_.8
$region0: #{_lambda_.8}
  #allocation0 [shape = 'u32[]', space=smem, size = 0x4, offset = 0x4, fixed_abs, tag = 'smem constant byte address 0x4 - core index']
  #allocation1 [shape = 'u32[144,128]{1,0:T(1,128)}', space=vmem, size = 0x12000, scoped, tag = 'internal scratch']
  %s0 = inlined_call_operand.vmem [shape: f32[16,384], index: 0, kind: input, shape index: {}]
  %s1 = inlined_call_operand.vmem [shape: f32[384,256], index: 1, kind: input, shape index: {}]
  %s2 = inlined_call_operand.vmem [shape: f32[1,256], index: 2, kind: input, shape index: {}]
  %s3 = inlined_call_operand.vmem [shape: f32[16,256], index: 3, kind: output, shape index: {}]
  %s4 = sld [smem:[#allocation0]]
  $region45: #{_lambda_.8} parent=0
    _
  %s6 = ssub.s32 1, %s4
  %s7 = scalar_select 0, %s6, %s4
  loop: start=0, step=1, limit=4
  $region2: #{_lambda_.8} parent=0 // loop_pre_header
    _
  $region3: #{_lambda_.8} parent=0 // loop_header
    %s9 = sphi 0, %s13
    %p10 = scmp.ge.s32.totalorder %s9, 4
    %s19 = sphi 0, %s21
    %s22 = sphi 0, %s19
    %s23 = sphi 0, %s22
    %s39 = sphi 0, %s23
    %s43 = sphi 0, %s43
    %s45 = sphi 0, %s43
    %s46 = sphi 0, %s45
    %s60 = sphi 0, %s46
    %s64 = sphi 0, %s64
    %s66 = sphi 0, %s64
    %s67 = sphi 0, %s66
    %s81 = sphi 0, %s67
    %s87 = sphi 0, %s89
    %s90 = sphi 0, %s87
    %s91 = sphi 0, %s90
    %s107 = sphi 0, %s91
  $region4: #{_lambda_.8} parent=0 // loop_header_branch
    %12 = sbr.rel (%p10) target = $region8
  $region5: #{_lambda_.8} parent=0 // loop_body
    %s14 = ssub.s32 %s9, 1
    %s15 = ssub.s32 %s9, 2
    %s16 = sadd.s32 %s9, 1
    %s17 = ssub.s32 %s9, %s16
    %p18 = scmp.eq.s32.totalorder %s17, 0
    %s20 = sadd.s32 %s19, 1
    %s21 = scalar_select %p18, %s19, %s20
    %p24 = pneg %p18
    %p25 = scmp.eq.s32.totalorder %s9, 1
    %p26 = por %p24, %p25
    %p27 = scmp.ne.s32.totalorder %s19, %s22
    %p28 = scmp.eq.s32.totalorder %s9, 0
    %p29 = por %p27, %p28
    %p30 = scmp.ne.s32.totalorder %s19, %s22
    %p31 = scmp.eq.s32.totalorder %s14, 1
    %p32 = por %p30, %p31
    %p33 = scmp.ne.s32.totalorder %s22, %s23
    %p34 = scmp.eq.s32.totalorder %s14, 0
    %p35 = por %p33, %p34
    %p36 = scmp.ne.s32.totalorder %s22, %s23
    %p37 = scmp.eq.s32.totalorder %s15, 1
    %p38 = por %p36, %p37
    %p40 = scmp.ne.s32.totalorder %s23, %s39
    %p41 = scmp.eq.s32.totalorder %s15, 0
    %p42 = por %p40, %p41
    %s44 = sadd.s32 %s43, 1
    %p47 = scmp.eq.s32.totalorder %s9, 1
    %p48 = scmp.ne.s32.totalorder %s43, %s45
    %p49 = scmp.eq.s32.totalorder %s9, 0
    %p50 = por %p48, %p49
    %p51 = scmp.ne.s32.totalorder %s43, %s45
    %p52 = scmp.eq.s32.totalorder %s14, 1
    %p53 = por %p51, %p52
    %p54 = scmp.ne.s32.totalorder %s45, %s46
    %p55 = scmp.eq.s32.totalorder %s14, 0
    %p56 = por %p54, %p55
    %p57 = scmp.ne.s32.totalorder %s45, %s46
    %p58 = scmp.eq.s32.totalorder %s15, 1
    %p59 = por %p57, %p58
    %p61 = scmp.ne.s32.totalorder %s46, %s60
    %p62 = scmp.eq.s32.totalorder %s15, 0
    %p63 = por %p61, %p62
    %s65 = sadd.s32 %s64, 1
    %p68 = scmp.eq.s32.totalorder %s9, 1
    %p69 = scmp.ne.s32.totalorder %s64, %s66
    %p70 = scmp.eq.s32.totalorder %s9, 0
    %p71 = por %p69, %p70
    %p72 = scmp.ne.s32.totalorder %s64, %s66
    %p73 = scmp.eq.s32.totalorder %s14, 1
    %p74 = por %p72, %p73
    %p75 = scmp.ne.s32.totalorder %s66, %s67
    %p76 = scmp.eq.s32.totalorder %s14, 0
    %p77 = por %p75, %p76
    %p78 = scmp.ne.s32.totalorder %s66, %s67
    %p79 = scmp.eq.s32.totalorder %s15, 1
    %p80 = por %p78, %p79
    %p82 = scmp.ne.s32.totalorder %s67, %s81
    %p83 = scmp.eq.s32.totalorder %s15, 0
    %p84 = por %p82, %p83
    %s85 = ssub.s32 %s9, %s16
    %p86 = scmp.eq.s32.totalorder %s85, 0
    %s88 = sadd.s32 %s87, 1
    %s89 = scalar_select %p86, %s87, %s88
    %p92 = pneg %p86
    %p93 = scmp.eq.s32.totalorder %s9, 1
    %p94 = por %p92, %p93
    %p95 = scmp.ne.s32.totalorder %s87, %s90
    %p96 = scmp.eq.s32.totalorder %s9, 0
    %p97 = por %p95, %p96
    %p98 = scmp.ne.s32.totalorder %s87, %s90
    %p99 = scmp.eq.s32.totalorder %s14, 1
    %p100 = por %p98, %p99
    %p101 = scmp.ne.s32.totalorder %s90, %s91
    %p102 = scmp.eq.s32.totalorder %s14, 0
    %p103 = por %p101, %p102
    %p104 = scmp.ne.s32.totalorder %s90, %s91
    %p105 = scmp.eq.s32.totalorder %s15, 1
    %p106 = por %p104, %p105
    %p108 = scmp.ne.s32.totalorder %s91, %s107
    %p109 = scmp.eq.s32.totalorder %s15, 0
    %p110 = por %p108, %p109
    %p111 = scmp.le.s32.totalorder 1, %s9
    %p112 = scmp.lt.s32.totalorder %s9, 3
    %p113 = pnand %p111, %p112
    %p114 = pneg %p113
    // Predicated region
    $region9: #{_lambda_.8} parent=5 // pred_check
      _
    $region10: #{_lambda_.8} parent=5 // pred_check_branch
      %116 = sbr.rel (%p113) target = $region12
    $region11: #{_lambda_.8} parent=5 // pred_region
      %s117 = ssub.s32 %s9, 1
      // Predicated region
      $region13: #{_lambda_.8} parent=11 // pred_check
        %p118 = pneg %p56
      $region14: #{_lambda_.8} parent=11 // pred_check_branch
        %120 = sbr.rel (%p118) target = $region16
      $region15: #{_lambda_.8} parent=11 // pred_region
        _
      $region16: #{_lambda_.8} parent=11 // pred_fallthru
        _
      // Predicated region
      $region17: #{_lambda_.8} parent=11 // pred_check
        %p121 = pneg %p77
      $region18: #{_lambda_.8} parent=11 // pred_check_branch
        %123 = sbr.rel (%p121) target = $region20
      $region19: #{_lambda_.8} parent=11 // pred_region
        _
      $region20: #{_lambda_.8} parent=11 // pred_fallthru
        _
    $region12: #{_lambda_.8} parent=5 // pred_fallthru
      _
    %p124 = scmp.lt.s32.totalorder %s9, 2
    // Predicated region
    $region21: #{_lambda_.8} parent=5 // pred_check
      %p125 = pneg %p124
    $region22: #{_lambda_.8} parent=5 // pred_check_branch
      %127 = sbr.rel (%p125) target = $region24
    $region23: #{_lambda_.8} parent=5 // pred_region
      // Predicated region
      $region25: #{_lambda_.8} parent=23 // pred_check
        %p128 = pneg %p29
      $region26: #{_lambda_.8} parent=23 // pred_check_branch
        %130 = sbr.rel (%p128) target = $region28
      $region27: #{_lambda_.8} parent=23 // pred_region
        %p131 = scmp.lt.s32.totalorder %s9, 1
        %s132 = scalar_select %p131, %s9, 1
        %s133 = smul.addr %s132, 3
        %s134 = smul.addr %s133, 8
        %s135 = scalar_lea.vmem %s0, %s134
      $region28: #{_lambda_.8} parent=23 // pred_fallthru
        _
    $region24: #{_lambda_.8} parent=5 // pred_fallthru
      _
    %p136 = scmp.le.s32.totalorder 1, %s9
    %p137 = scmp.lt.s32.totalorder %s9, 3
    %p138 = pnand %p136, %p137
    %p139 = pneg %p138
    // Predicated region
    $region29: #{_lambda_.8} parent=5 // pred_check
      _
    $region30: #{_lambda_.8} parent=5 // pred_check_branch
      %141 = sbr.rel (%p138) target = $region32
    $region31: #{_lambda_.8} parent=5 // pred_region
      %s142 = ssub.s32 %s9, 1
      %p143 = scmp.lt.s32.totalorder %s14, 1
      %s144 = scalar_select %p143, %s14, 1
      %s145 = smul.addr %s144, 3
      %s146 = smul.addr %s145, 8
      %s147 = scalar_lea.vmem %s0, %s146
      %p148 = pneg %p35
      %p149 = pneg %p32
      %p150 = pneg %p56
      %p151 = pneg %p53
      %p152 = pneg %p77
      %p153 = pneg %p74
      %p154 = pneg %p103
      %p155 = pneg %p100
      %p156 = scmp.lt.s32.totalorder %s14, 1
      %s157 = scalar_select %p156, %s14, 1
      %s158 = smul.addr %s157, 2
      %s159 = smul.addr %s158, 8
      %s160 = scalar_lea.vmem %s3, %s159
      %p161 = scmp.lt.s32.totalorder %s14, 1
      %s162 = scalar_select %p161, %s14, 1
      %s163 = smul.addr %s162, 3
      %s164 = smul.addr %s163, 8
      %s165 = scalar_lea.vmem %s0, %s164
      %p166 = scmp.lt.s32.totalorder %s14, 1
      %s167 = scalar_select %p166, %s14, 1
      %s168 = smul.addr %s167, 2
      %s169 = smul.addr %s168, 8
      %s170 = scalar_lea.vmem %s3, %s169
      %v171 = vld [vmem:[%s165] sm:$0xff]
      %v172 = vld [vmem:[%s165 + $0x8] sm:$0xff]
      %v173 = vld [vmem:[%s165 + $0x10] sm:$0xff]
      %v174 = vld [vmem:[%s1] sm:$0xff]
      %v175 = vld [vmem:[%s1 + $0x8] sm:$0xff]
      %v176 = vld [vmem:[%s1 + $0x10] sm:$0xff]
      %v177 = vld [vmem:[%s1 + $0x18] sm:$0xff]
      %v178 = vld [vmem:[%s1 + $0x20] sm:$0xff]
      %v179 = vld [vmem:[%s1 + $0x28] sm:$0xff]
      %v180 = vld [vmem:[%s1 + $0x30] sm:$0xff]
      %v181 = vld [vmem:[%s1 + $0x38] sm:$0xff]
      %v182 = vld [vmem:[%s1 + $0x40] sm:$0xff]
      %v183 = vld [vmem:[%s1 + $0x48] sm:$0xff]
      %v184 = vld [vmem:[%s1 + $0x50] sm:$0xff]
      %v185 = vld [vmem:[%s1 + $0x58] sm:$0xff]
      %v186 = vld [vmem:[%s1 + $0x60] sm:$0xff]
      %v187 = vld [vmem:[%s1 + $0x68] sm:$0xff]
      %v188 = vld [vmem:[%s1 + $0x70] sm:$0xff]
      %v189 = vld [vmem:[%s1 + $0x78] sm:$0xff]
      %v190 = vld [vmem:[%s1 + $0x80] sm:$0xff]
      %v191 = vld [vmem:[%s1 + $0x88] sm:$0xff]
      %v192 = vld [vmem:[%s1 + $0x90] sm:$0xff]
      %v193 = vld [vmem:[%s1 + $0x98] sm:$0xff]
      %v194 = vld [vmem:[%s1 + $0xa0] sm:$0xff]
      %v195 = vld [vmem:[%s1 + $0xa8] sm:$0xff]
      %v196 = vld [vmem:[%s1 + $0xb0] sm:$0xff]
      %v197 = vld [vmem:[%s1 + $0xb8] sm:$0xff]
      %v198 = vld [vmem:[%s1 + $0xc0] sm:$0xff]
      %v199 = vld [vmem:[%s1 + $0xc8] sm:$0xff]
      %v200 = vld [vmem:[%s1 + $0xd0] sm:$0xff]
      %v201 = vld [vmem:[%s1 + $0xd8] sm:$0xff]
      %v202 = vld [vmem:[%s1 + $0xe0] sm:$0xff]
      %v203 = vld [vmem:[%s1 + $0xe8] sm:$0xff]
      %v204 = vld [vmem:[%s1 + $0xf0] sm:$0xff]
      %v205 = vld [vmem:[%s1 + $0xf8] sm:$0xff]
      %v206 = vld [vmem:[%s1 + $0x100] sm:$0xff]
      %v207 = vld [vmem:[%s1 + $0x108] sm:$0xff]
      %v208 = vld [vmem:[%s1 + $0x110] sm:$0xff]
      %v209 = vld [vmem:[%s1 + $0x118] sm:$0xff]
      %v210 = vld [vmem:[%s1 + $0x120] sm:$0xff]
      %v211 = vld [vmem:[%s1 + $0x128] sm:$0xff]
      %v212 = vld [vmem:[%s1 + $0x130] sm:$0xff]
      %v213 = vld [vmem:[%s1 + $0x138] sm:$0xff]
      %v214 = vld [vmem:[%s1 + $0x140] sm:$0xff]
      %v215 = vld [vmem:[%s1 + $0x148] sm:$0xff]
      %v216 = vld [vmem:[%s1 + $0x150] sm:$0xff]
      %v217 = vld [vmem:[%s1 + $0x158] sm:$0xff]
      %v218 = vld [vmem:[%s1 + $0x160] sm:$0xff]
      %v219 = vld [vmem:[%s1 + $0x168] sm:$0xff]
      %v220 = vld [vmem:[%s1 + $0x170] sm:$0xff]
      %v221 = vld [vmem:[%s1 + $0x178] sm:$0xff]
      %v222 = vld [vmem:[%s1 + $0x180] sm:$0xff]
      %v223 = vld [vmem:[%s1 + $0x188] sm:$0xff]
      %v224 = vld [vmem:[%s1 + $0x190] sm:$0xff]
      %v225 = vld [vmem:[%s1 + $0x198] sm:$0xff]
      %v226 = vld [vmem:[%s1 + $0x1a0] sm:$0xff]
      %v227 = vld [vmem:[%s1 + $0x1a8] sm:$0xff]
      %v228 = vld [vmem:[%s1 + $0x1b0] sm:$0xff]
      %v229 = vld [vmem:[%s1 + $0x1b8] sm:$0xff]
      %v230 = vld [vmem:[%s1 + $0x1c0] sm:$0xff]
      %v231 = vld [vmem:[%s1 + $0x1c8] sm:$0xff]
      %v232 = vld [vmem:[%s1 + $0x1d0] sm:$0xff]
      %v233 = vld [vmem:[%s1 + $0x1d8] sm:$0xff]
      %v234 = vld [vmem:[%s1 + $0x1e0] sm:$0xff]
      %v235 = vld [vmem:[%s1 + $0x1e8] sm:$0xff]
      %v236 = vld [vmem:[%s1 + $0x1f0] sm:$0xff]
      %v237 = vld [vmem:[%s1 + $0x1f8] sm:$0xff]
      %v238 = vld [vmem:[%s1 + $0x200] sm:$0xff]
      %v239 = vld [vmem:[%s1 + $0x208] sm:$0xff]
      %v240 = vld [vmem:[%s1 + $0x210] sm:$0xff]
      %v241 = vld [vmem:[%s1 + $0x218] sm:$0xff]
      %v242 = vld [vmem:[%s1 + $0x220] sm:$0xff]
      %v243 = vld [vmem:[%s1 + $0x228] sm:$0xff]
      %v244 = vld [vmem:[%s1 + $0x230] sm:$0xff]
      %v245 = vld [vmem:[%s1 + $0x238] sm:$0xff]
      %v246 = vld [vmem:[%s1 + $0x240] sm:$0xff]
      %v247 = vld [vmem:[%s1 + $0x248] sm:$0xff]
      %v248 = vld [vmem:[%s1 + $0x250] sm:$0xff]
      %v249 = vld [vmem:[%s1 + $0x258] sm:$0xff]
      %v250 = vld [vmem:[%s1 + $0x260] sm:$0xff]
      %v251 = vld [vmem:[%s1 + $0x268] sm:$0xff]
      %v252 = vld [vmem:[%s1 + $0x270] sm:$0xff]
      %v253 = vld [vmem:[%s1 + $0x278] sm:$0xff]
      %v254 = vld [vmem:[%s1 + $0x280] sm:$0xff]
      %v255 = vld [vmem:[%s1 + $0x288] sm:$0xff]
      %v256 = vld [vmem:[%s1 + $0x290] sm:$0xff]
      %v257 = vld [vmem:[%s1 + $0x298] sm:$0xff]
      %v258 = vld [vmem:[%s1 + $0x2a0] sm:$0xff]
      %v259 = vld [vmem:[%s1 + $0x2a8] sm:$0xff]
      %v260 = vld [vmem:[%s1 + $0x2b0] sm:$0xff]
      %v261 = vld [vmem:[%s1 + $0x2b8] sm:$0xff]
      %v262 = vld [vmem:[%s1 + $0x2c0] sm:$0xff]
      %v263 = vld [vmem:[%s1 + $0x2c8] sm:$0xff]
      %v264 = vld [vmem:[%s1 + $0x2d0] sm:$0xff]
      %v265 = vld [vmem:[%s1 + $0x2d8] sm:$0xff]
      %v266 = vld [vmem:[%s1 + $0x2e0] sm:$0xff]
      %v267 = vld [vmem:[%s1 + $0x2e8] sm:$0xff]
      %v268 = vld [vmem:[%s1 + $0x2f0] sm:$0xff]
      %v269 = vld [vmem:[%s1 + $0x2f8] sm:$0xff]
      %v270 = vld [vmem:[%s2] sm:$0x3]
      %v272 = vlaneseq
      %v273 = vshrl.u32 %v272, 7
      %v274 = vsub.s32 0, %v273
      %v275 = vrot.slane %v270, %v274
      %v276 = vlaneseq
      %v277 = vshrl.u32 %v276, 7
      %v278 = vsub.s32 1, %v277
      %v279 = vrot.slane %v270, %v278
      %282 = vmatprep.subr.mxu0 %v175
      %283 = vmatpush1.msra.mxu0 %v174
      %284 = vmatprep.subr.mxu0 %v177
      %285 = vmatpush1.msra.mxu0 %v176
      %286 = vmatprep.subr.mxu0 %v179
      %287 = vmatpush1.msra.mxu0 %v178
      %288 = vmatprep.subr.mxu0 %v181
      %289 = vmatpush1.msra.mxu0 %v180
      %290 = vmatprep.subr.mxu0 %v183
      %291 = vmatpush1.msra.mxu0 %v182
      %292 = vmatprep.subr.mxu0 %v185
      %293 = vmatpush1.msra.mxu0 %v184
      %294 = vmatprep.subr.mxu0 %v187
      %295 = vmatpush1.msra.mxu0 %v186
      %296 = vmatprep.subr.mxu0 %v189
      %297 = vmatpush1.msra.mxu0 %v188
      %298 = vmatprep.subr.mxu0 %v191
      %299 = vmatpush1.msra.mxu0 %v190
      %300 = vmatprep.subr.mxu0 %v193
      %301 = vmatpush1.msra.mxu0 %v192
      %302 = vmatprep.subr.mxu0 %v195
      %303 = vmatpush1.msra.mxu0 %v194
      %304 = vmatprep.subr.mxu0 %v197
      %305 = vmatpush1.msra.mxu0 %v196
      %306 = vmatprep.subr.mxu0 %v199
      %307 = vmatpush1.msra.mxu0 %v198
      %308 = vmatprep.subr.mxu0 %v201
      %309 = vmatpush1.msra.mxu0 %v200
      %310 = vmatprep.subr.mxu0 %v203
      %311 = vmatpush1.msra.mxu0 %v202
      %312 = vmatprep.subr.mxu0 %v205
      %313 = vmatpush1.msra.mxu0 %v204
      %314 = vmatprep.subr.mxu0 %v207
      %315 = vmatpush1.msra.mxu0 %v206
      %316 = vmatprep.subr.mxu0 %v209
      %317 = vmatpush1.msra.mxu0 %v208
      %318 = vmatprep.subr.mxu0 %v211
      %319 = vmatpush1.msra.mxu0 %v210
      %320 = vmatprep.subr.mxu0 %v213
      %321 = vmatpush1.msra.mxu0 %v212
      %322 = vmatprep.subr.mxu0 %v215
      %323 = vmatpush1.msra.mxu0 %v214
      %324 = vmatprep.subr.mxu0 %v217
      %325 = vmatpush1.msra.mxu0 %v216
      %326 = vmatprep.subr.mxu0 %v219
      %327 = vmatpush1.msra.mxu0 %v218
      %328 = vmatprep.subr.mxu0 %v221
      %329 = vmatpush1.msra.mxu0 %v220
      %330 = vmatprep.subr.mxu0 %v223
      %331 = vmatpush1.msra.mxu0 %v222
      %332 = vmatprep.subr.mxu0 %v225
      %333 = vmatpush1.msra.mxu0 %v224
      %334 = vmatprep.subr.mxu0 %v227
      %335 = vmatpush1.msra.mxu0 %v226
      %336 = vmatprep.subr.mxu0 %v229
      %337 = vmatpush1.msra.mxu0 %v228
      %338 = vmatprep.subr.mxu0 %v231
      %339 = vmatpush1.msra.mxu0 %v230
      %340 = vmatprep.subr.mxu0 %v233
      %341 = vmatpush1.msra.mxu0 %v232
      %342 = vmatprep.subr.mxu0 %v235
      %343 = vmatpush1.msra.mxu0 %v234
      %344 = vmatprep.subr.mxu0 %v237
      %345 = vmatpush1.msra.mxu0 %v236
      %346 = vmatprep.mubr.f32.mxu0 %v172
      %347 = vmatmul.mubr.f32.gmra.mrb[0].mxu0 %v171
      %v348 = vpop.f32.mrb[0].mxu0
      %v349 = vadd.f32 %v275, %v348
      %v350 = vpop.f32.mrb[0].mxu0
      %v351 = vadd.f32 %v279, %v350
      %352 = vdwg.mxu0
      %353 = vmatprep.subr.mxu0 %v239
      %354 = vmatpush1.msra.mxu0 %v238
      %355 = vmatprep.subr.mxu0 %v241
      %356 = vmatpush1.msra.mxu0 %v240
      %357 = vmatprep.subr.mxu0 %v243
      %358 = vmatpush1.msra.mxu0 %v242
      %359 = vmatprep.subr.mxu0 %v245
      %360 = vmatpush1.msra.mxu0 %v244
      %361 = vmatprep.subr.mxu0 %v247
      %362 = vmatpush1.msra.mxu0 %v246
      %363 = vmatprep.subr.mxu0 %v249
      %364 = vmatpush1.msra.mxu0 %v248
      %365 = vmatprep.subr.mxu0 %v251
      %366 = vmatpush1.msra.mxu0 %v250
      %367 = vmatprep.subr.mxu0 %v253
      %368 = vmatpush1.msra.mxu0 %v252
      %369 = vmatprep.subr.mxu0 %v255
      %370 = vmatpush1.msra.mxu0 %v254
      %371 = vmatprep.subr.mxu0 %v257
      %372 = vmatpush1.msra.mxu0 %v256
      %373 = vmatprep.subr.mxu0 %v259
      %374 = vmatpush1.msra.mxu0 %v258
      %375 = vmatprep.subr.mxu0 %v261
      %376 = vmatpush1.msra.mxu0 %v260
      %377 = vmatprep.subr.mxu0 %v263
      %378 = vmatpush1.msra.mxu0 %v262
      %379 = vmatprep.subr.mxu0 %v265
      %380 = vmatpush1.msra.mxu0 %v264
      %381 = vmatprep.subr.mxu0 %v267
      %382 = vmatpush1.msra.mxu0 %v266
      %383 = vmatprep.subr.mxu0 %v269
      %384 = vmatpush1.msra.mxu0 %v268
      %385 = vmatprep.subr.mxu0 0.0
      %386 = vmatpush1.msra.mxu0 0.0
      %387 = vmatprep.subr.mxu0 0.0
      %388 = vmatpush1.msra.mxu0 0.0
      %389 = vmatprep.subr.mxu0 0.0
      %390 = vmatpush1.msra.mxu0 0.0
      %391 = vmatprep.subr.mxu0 0.0
      %392 = vmatpush1.msra.mxu0 0.0
      %393 = vmatprep.subr.mxu0 0.0
      %394 = vmatpush1.msra.mxu0 0.0
      %395 = vmatprep.subr.mxu0 0.0
      %396 = vmatpush1.msra.mxu0 0.0
      %397 = vmatprep.subr.mxu0 0.0
      %398 = vmatpush1.msra.mxu0 0.0
      %399 = vmatprep.subr.mxu0 0.0
      %400 = vmatpush1.msra.mxu0 0.0
      %401 = vmatprep.subr.mxu0 0.0
      %402 = vmatpush1.msra.mxu0 0.0
      %403 = vmatprep.subr.mxu0 0.0
      %404 = vmatpush1.msra.mxu0 0.0
      %405 = vmatprep.subr.mxu0 0.0
      %406 = vmatpush1.msra.mxu0 0.0
      %407 = vmatprep.subr.mxu0 0.0
      %408 = vmatpush1.msra.mxu0 0.0
      %409 = vmatprep.subr.mxu0 0.0
      %410 = vmatpush1.msra.mxu0 0.0
      %411 = vmatprep.subr.mxu0 0.0
      %412 = vmatpush1.msra.mxu0 0.0
      %413 = vmatprep.subr.mxu0 0.0
      %414 = vmatpush1.msra.mxu0 0.0
      %415 = vmatprep.subr.mxu0 0.0
      %416 = vmatpush1.msra.mxu0 0.0
      %417 = vmatprep.mubr.f32.mxu0 0.0
      %418 = vmatmul.mubr.f32.gmra.mrb[0].mxu0 %v173
      %v419 = vpop.f32.mrb[0].mxu0
      %v420 = vadd.f32 %v349, %v419
      %v421 = vpop.f32.mrb[0].mxu0
      %v422 = vadd.f32 %v351, %v421
      %423 = vdwg.mxu0
      %424 = vst [vmem:[%s170] sm:$0xff] %v420
      %425 = vst [vmem:[%s170 + $0x8] sm:$0xff] %v422
      %p426 = scmp.lt.s32.totalorder %s14, 1
      %s427 = scalar_select %p426, %s14, 1
      %s428 = smul.addr %s427, 2
      %s429 = smul.addr %s428, 8
      %s430 = scalar_lea.vmem %s3, %s429
      // Predicated region
      $region33: #{_lambda_.8} parent=31 // pred_check
        %p431 = pneg %p100
      $region34: #{_lambda_.8} parent=31 // pred_check_branch
        %433 = sbr.rel (%p431) target = $region36
      $region35: #{_lambda_.8} parent=31 // pred_region
        _
      $region36: #{_lambda_.8} parent=31 // pred_fallthru
        _
    $region32: #{_lambda_.8} parent=5 // pred_fallthru
      _
    %p434 = scmp.le.s32.totalorder 2, %s9
    // Predicated region
    $region37: #{_lambda_.8} parent=5 // pred_check
      %p435 = pneg %p434
    $region38: #{_lambda_.8} parent=5 // pred_check_branch
      %437 = sbr.rel (%p435) target = $region40
    $region39: #{_lambda_.8} parent=5 // pred_region
      %s438 = ssub.s32 %s9, 2
      // Predicated region
      $region41: #{_lambda_.8} parent=39 // pred_check
        %p439 = pneg %p106
      $region42: #{_lambda_.8} parent=39 // pred_check_branch
        %441 = sbr.rel (%p439) target = $region44
      $region43: #{_lambda_.8} parent=39 // pred_region
        %p442 = scmp.lt.s32.totalorder %s15, 1
        %s443 = scalar_select %p442, %s15, 1
        %s444 = smul.addr %s443, 2
        %s445 = smul.addr %s444, 8
        %s446 = scalar_lea.vmem %s3, %s445
      $region44: #{_lambda_.8} parent=39 // pred_fallthru
        _
    $region40: #{_lambda_.8} parent=5 // pred_fallthru
      _
  $region6: #{_lambda_.8} parent=0 // loop_footer
    %s13 = sadd.s32 1, %s9
  $region7: #{_lambda_.8} parent=0 // loop_footer_branch
    %8 = sbr.rel target = $region3
  $region8: #{_lambda_.8} parent=0 // loop_exit
    _

// kernel: _lambda_.10
$region0: #{_lambda_.10}
  #allocation0 [shape = 'u32[]', space=smem, size = 0x4, offset = 0x4, fixed_abs, tag = 'smem constant byte address 0x4 - core index']
  #allocation1 [shape = 'u32[144,128]{1,0:T(1,128)}', space=vmem, size = 0x12000, scoped, tag = 'internal scratch']
  %s0 = inlined_call_operand.vmem [shape: f32[2,16,128], index: 0, kind: input, shape index: {}]
  %s1 = inlined_call_operand.vmem [shape: f32[2,1,128], index: 1, kind: input, shape index: {}]
  %s2 = inlined_call_operand.vmem [shape: f32[128,256], index: 2, kind: input, shape index: {}]
  %s3 = inlined_call_operand.vmem [shape: f32[1,256], index: 3, kind: input, shape index: {}]
  %s4 = inlined_call_operand.vmem [shape: f32[2,16,256], index: 4, kind: output, shape index: {}]
  %s5 = sld [smem:[#allocation0]]
  $region49: #{_lambda_.10} parent=0
    _
  %s7 = ssub.s32 1, %s5
  %s8 = scalar_select 0, %s7, %s5
  loop: start=0, step=1, limit=4
  $region2: #{_lambda_.10} parent=0 // loop_pre_header
    _
  $region3: #{_lambda_.10} parent=0 // loop_header
    %s10 = sphi 0, %s14
    %p11 = scmp.ge.s32.totalorder %s10, 4
    %s17 = sphi 0, %s29
    %s18 = sphi 0, %s25
    %s19 = sphi 0, %s17
    %s20 = sphi 0, %s18
    %s21 = sphi 0, %s19
    %s22 = sphi 0, %s20
    %s34 = sphi 0, %s36
    %s37 = sphi 0, %s34
    %s38 = sphi 0, %s37
    %s54 = sphi 0, %s38
    %s60 = sphi 0, %s62
    %s63 = sphi 0, %s60
    %s64 = sphi 0, %s63
    %s80 = sphi 0, %s64
    %s84 = sphi 0, %s84
    %s86 = sphi 0, %s84
    %s87 = sphi 0, %s86
    %s101 = sphi 0, %s87
    %s105 = sphi 0, %s105
    %s107 = sphi 0, %s105
    %s108 = sphi 0, %s107
    %s122 = sphi 0, %s108
    %s130 = sphi 0, %s132
    %s133 = sphi 0, %s130
    %s134 = sphi 0, %s133
    %s150 = sphi 0, %s134
  $region4: #{_lambda_.10} parent=0 // loop_header_branch
    %13 = sbr.rel (%p11) target = $region8
  $region5: #{_lambda_.10} parent=0 // loop_body
    %s15 = ssub.s32 %s10, 1
    %s16 = ssub.s32 %s10, 2
    %s23 = sadd.s32 1, %s18
    %p24 = scmp.ge.s32.totalorder %s23, 1
    %s25 = scalar_select %p24, 0, %s23
    %s26 = sadd.s32 1, %s17
    %s27 = scalar_select %p24, %s26, %s17
    %p28 = scmp.ge.s32.totalorder %s27, 2
    %s29 = scalar_select %p28, 0, %s27
    %s30 = ssub.s32 %s17, %s29
    %s31 = ssub.s32 %s18, %s25
    %s32 = sor.u32 %s30, %s31
    %p33 = scmp.eq.s32.totalorder %s32, 0
    %s35 = sadd.s32 %s34, 1
    %s36 = scalar_select %p33, %s34, %s35
    %p39 = pneg %p33
    %p40 = scmp.eq.s32.totalorder %s10, 1
    %p41 = por %p39, %p40
    %p42 = scmp.ne.s32.totalorder %s34, %s37
    %p43 = scmp.eq.s32.totalorder %s10, 0
    %p44 = por %p42, %p43
    %p45 = scmp.ne.s32.totalorder %s34, %s37
    %p46 = scmp.eq.s32.totalorder %s15, 1
    %p47 = por %p45, %p46
    %p48 = scmp.ne.s32.totalorder %s37, %s38
    %p49 = scmp.eq.s32.totalorder %s15, 0
    %p50 = por %p48, %p49
    %p51 = scmp.ne.s32.totalorder %s37, %s38
    %p52 = scmp.eq.s32.totalorder %s16, 1
    %p53 = por %p51, %p52
    %p55 = scmp.ne.s32.totalorder %s38, %s54
    %p56 = scmp.eq.s32.totalorder %s16, 0
    %p57 = por %p55, %p56
    %s58 = ssub.s32 %s17, %s29
    %p59 = scmp.eq.s32.totalorder %s58, 0
    %s61 = sadd.s32 %s60, 1
    %s62 = scalar_select %p59, %s60, %s61
    %p65 = pneg %p59
    %p66 = scmp.eq.s32.totalorder %s10, 1
    %p67 = por %p65, %p66
    %p68 = scmp.ne.s32.totalorder %s60, %s63
    %p69 = scmp.eq.s32.totalorder %s10, 0
    %p70 = por %p68, %p69
    %p71 = scmp.ne.s32.totalorder %s60, %s63
    %p72 = scmp.eq.s32.totalorder %s15, 1
    %p73 = por %p71, %p72
    %p74 = scmp.ne.s32.totalorder %s63, %s64
    %p75 = scmp.eq.s32.totalorder %s15, 0
    %p76 = por %p74, %p75
    %p77 = scmp.ne.s32.totalorder %s63, %s64
    %p78 = scmp.eq.s32.totalorder %s16, 1
    %p79 = por %p77, %p78
    %p81 = scmp.ne.s32.totalorder %s64, %s80
    %p82 = scmp.eq.s32.totalorder %s16, 0
    %p83 = por %p81, %p82
    %s85 = sadd.s32 %s84, 1
    %p88 = scmp.eq.s32.totalorder %s10, 1
    %p89 = scmp.ne.s32.totalorder %s84, %s86
    %p90 = scmp.eq.s32.totalorder %s10, 0
    %p91 = por %p89, %p90
    %p92 = scmp.ne.s32.totalorder %s84, %s86
    %p93 = scmp.eq.s32.totalorder %s15, 1
    %p94 = por %p92, %p93
    %p95 = scmp.ne.s32.totalorder %s86, %s87
    %p96 = scmp.eq.s32.totalorder %s15, 0
    %p97 = por %p95, %p96
    %p98 = scmp.ne.s32.totalorder %s86, %s87
    %p99 = scmp.eq.s32.totalorder %s16, 1
    %p100 = por %p98, %p99
    %p102 = scmp.ne.s32.totalorder %s87, %s101
    %p103 = scmp.eq.s32.totalorder %s16, 0
    %p104 = por %p102, %p103
    %s106 = sadd.s32 %s105, 1
    %p109 = scmp.eq.s32.totalorder %s10, 1
    %p110 = scmp.ne.s32.totalorder %s105, %s107
    %p111 = scmp.eq.s32.totalorder %s10, 0
    %p112 = por %p110, %p111
    %p113 = scmp.ne.s32.totalorder %s105, %s107
    %p114 = scmp.eq.s32.totalorder %s15, 1
    %p115 = por %p113, %p114
    %p116 = scmp.ne.s32.totalorder %s107, %s108
    %p117 = scmp.eq.s32.totalorder %s15, 0
    %p118 = por %p116, %p117
    %p119 = scmp.ne.s32.totalorder %s107, %s108
    %p120 = scmp.eq.s32.totalorder %s16, 1
    %p121 = por %p119, %p120
    %p123 = scmp.ne.s32.totalorder %s108, %s122
    %p124 = scmp.eq.s32.totalorder %s16, 0
    %p125 = por %p123, %p124
    %s126 = ssub.s32 %s17, %s29
    %s127 = ssub.s32 %s18, %s25
    %s128 = sor.u32 %s126, %s127
    %p129 = scmp.eq.s32.totalorder %s128, 0
    %s131 = sadd.s32 %s130, 1
    %s132 = scalar_select %p129, %s130, %s131
    %p135 = pneg %p129
    %p136 = scmp.eq.s32.totalorder %s10, 1
    %p137 = por %p135, %p136
    %p138 = scmp.ne.s32.totalorder %s130, %s133
    %p139 = scmp.eq.s32.totalorder %s10, 0
    %p140 = por %p138, %p139
    %p141 = scmp.ne.s32.totalorder %s130, %s133
    %p142 = scmp.eq.s32.totalorder %s15, 1
    %p143 = por %p141, %p142
    %p144 = scmp.ne.s32.totalorder %s133, %s134
    %p145 = scmp.eq.s32.totalorder %s15, 0
    %p146 = por %p144, %p145
    %p147 = scmp.ne.s32.totalorder %s133, %s134
    %p148 = scmp.eq.s32.totalorder %s16, 1
    %p149 = por %p147, %p148
    %p151 = scmp.ne.s32.totalorder %s134, %s150
    %p152 = scmp.eq.s32.totalorder %s16, 0
    %p153 = por %p151, %p152
    %p154 = scmp.le.s32.totalorder 1, %s10
    %p155 = scmp.lt.s32.totalorder %s10, 3
    %p156 = pnand %p154, %p155
    %p157 = pneg %p156
    // Predicated region
    $region9: #{_lambda_.10} parent=5 // pred_check
      _
    $region10: #{_lambda_.10} parent=5 // pred_check_branch
      %159 = sbr.rel (%p156) target = $region12
    $region11: #{_lambda_.10} parent=5 // pred_region
      %s160 = ssub.s32 %s10, 1
      // Predicated region
      $region13: #{_lambda_.10} parent=11 // pred_check
        %p161 = pneg %p97
      $region14: #{_lambda_.10} parent=11 // pred_check_branch
        %163 = sbr.rel (%p161) target = $region16
      $region15: #{_lambda_.10} parent=11 // pred_region
        _
      $region16: #{_lambda_.10} parent=11 // pred_fallthru
        _
      // Predicated region
      $region17: #{_lambda_.10} parent=11 // pred_check
        %p164 = pneg %p118
      $region18: #{_lambda_.10} parent=11 // pred_check_branch
        %166 = sbr.rel (%p164) target = $region20
      $region19: #{_lambda_.10} parent=11 // pred_region
        _
      $region20: #{_lambda_.10} parent=11 // pred_fallthru
        _
    $region12: #{_lambda_.10} parent=5 // pred_fallthru
      _
    %p167 = scmp.lt.s32.totalorder %s10, 2
    // Predicated region
    $region21: #{_lambda_.10} parent=5 // pred_check
      %p168 = pneg %p167
    $region22: #{_lambda_.10} parent=5 // pred_check_branch
      %170 = sbr.rel (%p168) target = $region24
    $region23: #{_lambda_.10} parent=5 // pred_region
      // Predicated region
      $region25: #{_lambda_.10} parent=23 // pred_check
        %p171 = pneg %p44
      $region26: #{_lambda_.10} parent=23 // pred_check_branch
        %173 = sbr.rel (%p171) target = $region28
      $region27: #{_lambda_.10} parent=23 // pred_region
        %s174 = smul.u32 2, %s18
        %p175 = scmp.lt.s32.totalorder %s17, 1
        %s176 = scalar_select %p175, %s17, 1
        %p177 = scmp.lt.s32.totalorder %s174, 1
        %s178 = scalar_select %p177, %s174, 1
        %s179 = smul.addr %s176, 2
        %s180 = sadd.s32 %s178, %s179
        %s181 = smul.addr %s180, 8
        %s182 = scalar_lea.vmem %s0, %s181
        %s183 = smul.u32 2, %s18
      $region28: #{_lambda_.10} parent=23 // pred_fallthru
        _
      // Predicated region
      $region29: #{_lambda_.10} parent=23 // pred_check
        %p184 = pneg %p70
      $region30: #{_lambda_.10} parent=23 // pred_check_branch
        %186 = sbr.rel (%p184) target = $region32
      $region31: #{_lambda_.10} parent=23 // pred_region
        %p187 = scmp.lt.s32.totalorder %s17, 1
        %s188 = scalar_select %p187, %s17, 1
        %s189 = scalar_lea.vmem %s1, %s188
      $region32: #{_lambda_.10} parent=23 // pred_fallthru
        _
    $region24: #{_lambda_.10} parent=5 // pred_fallthru
      _
    %p190 = scmp.le.s32.totalorder 1, %s10
    %p191 = scmp.lt.s32.totalorder %s10, 3
    %p192 = pnand %p190, %p191
    %p193 = pneg %p192
    // Predicated region
    $region33: #{_lambda_.10} parent=5 // pred_check
      _
    $region34: #{_lambda_.10} parent=5 // pred_check_branch
      %195 = sbr.rel (%p192) target = $region36
    $region35: #{_lambda_.10} parent=5 // pred_region
      %s196 = ssub.s32 %s10, 1
      %s197 = smul.u32 2, %s20
      %p198 = scmp.lt.s32.totalorder %s19, 1
      %s199 = scalar_select %p198, %s19, 1
      %p200 = scmp.lt.s32.totalorder %s197, 1
      %s201 = scalar_select %p200, %s197, 1
      %s202 = smul.addr %s199, 2
      %s203 = sadd.s32 %s201, %s202
      %s204 = smul.addr %s203, 8
      %s205 = scalar_lea.vmem %s0, %s204
      %p206 = pneg %p50
      %p207 = pneg %p47
      %p208 = scmp.lt.s32.totalorder %s19, 1
      %s209 = scalar_select %p208, %s19, 1
      %s210 = scalar_lea.vmem %s1, %s209
      %p211 = pneg %p76
      %p212 = pneg %p73
      %p213 = pneg %p97
      %p214 = pneg %p94
      %p215 = pneg %p118
      %p216 = pneg %p115
      %p217 = pneg %p146
      %p218 = pneg %p143
      %s219 = smul.u32 2, %s20
      %p220 = scmp.lt.s32.totalorder %s19, 1
      %s221 = scalar_select %p220, %s19, 1
      %p222 = scmp.lt.s32.totalorder %s219, 1
      %s223 = scalar_select %p222, %s219, 1
      %s224 = smul.addr %s223, 2
      %s225 = smul.addr %s221, 4
      %s226 = sadd.s32 %s224, %s225
      %s227 = smul.addr %s226, 8
      %s228 = scalar_lea.vmem %s4, %s227
      %s229 = smul.u32 2, %s20
      %p230 = scmp.lt.s32.totalorder %s19, 1
      %s231 = scalar_select %p230, %s19, 1
      %p232 = scmp.lt.s32.totalorder %s229, 1
      %s233 = scalar_select %p232, %s229, 1
      %s234 = smul.addr %s231, 2
      %s235 = sadd.s32 %s233, %s234
      %s236 = smul.addr %s235, 8
      %s237 = scalar_lea.vmem %s0, %s236
      %s238 = smul.u32 2, %s20
      %p239 = scmp.lt.s32.totalorder %s19, 1
      %s240 = scalar_select %p239, %s19, 1
      %s241 = scalar_lea.vmem %s1, %s240
      %s242 = smul.u32 2, %s20
      %p243 = scmp.lt.s32.totalorder %s19, 1
      %s244 = scalar_select %p243, %s19, 1
      %p245 = scmp.lt.s32.totalorder %s242, 1
      %s246 = scalar_select %p245, %s242, 1
      %s247 = smul.addr %s246, 2
      %s248 = smul.addr %s244, 4
      %s249 = sadd.s32 %s247, %s248
      %s250 = smul.addr %s249, 8
      %s251 = scalar_lea.vmem %s4, %s250
      %s252 = smul.u32 2, %s20
      %v253 = vld [vmem:[%s241] sm:$0x1]
      %v254 = vld [vmem:[%s237] sm:$0xff]
      %v255 = vld [vmem:[%s237 + $0x8] sm:$0xff]
      %v257 = vlaneseq
      %v258 = vshrl.u32 %v257, 7
      %v259 = vsub.s32 0, %v258
      %v260 = vrot.slane %v253, %v259
      %261 = vset.pattern.permute.xlu0 0
      %262 = vperm.xlu0 %261, %v260
      %v263 = vpop.permute.xlu0 %262
      %v265 = vmul.f32 %v254, %v263
      %v266 = vmul.f32 %v255, %v263
      %267 = vset.pattern.permute.xlu0 1
      %268 = vperm.xlu0 %267, %v260
      %v269 = vpop.permute.xlu0 %268
      %v271 = vadd.f32 %v265, %v269
      %v272 = vadd.f32 %v266, %v269
      %v273 = vld [vmem:[%s2] sm:$0xff]
      %v274 = vld [vmem:[%s2 + $0x8] sm:$0xff]
      %v275 = vld [vmem:[%s2 + $0x10] sm:$0xff]
      %v276 = vld [vmem:[%s2 + $0x18] sm:$0xff]
      %v277 = vld [vmem:[%s2 + $0x20] sm:$0xff]
      %v278 = vld [vmem:[%s2 + $0x28] sm:$0xff]
      %v279 = vld [vmem:[%s2 + $0x30] sm:$0xff]
      %v280 = vld [vmem:[%s2 + $0x38] sm:$0xff]
      %v281 = vld [vmem:[%s2 + $0x40] sm:$0xff]
      %v282 = vld [vmem:[%s2 + $0x48] sm:$0xff]
      %v283 = vld [vmem:[%s2 + $0x50] sm:$0xff]
      %v284 = vld [vmem:[%s2 + $0x58] sm:$0xff]
      %v285 = vld [vmem:[%s2 + $0x60] sm:$0xff]
      %v286 = vld [vmem:[%s2 + $0x68] sm:$0xff]
      %v287 = vld [vmem:[%s2 + $0x70] sm:$0xff]
      %v288 = vld [vmem:[%s2 + $0x78] sm:$0xff]
      %v289 = vld [vmem:[%s2 + $0x80] sm:$0xff]
      %v290 = vld [vmem:[%s2 + $0x88] sm:$0xff]
      %v291 = vld [vmem:[%s2 + $0x90] sm:$0xff]
      %v292 = vld [vmem:[%s2 + $0x98] sm:$0xff]
      %v293 = vld [vmem:[%s2 + $0xa0] sm:$0xff]
      %v294 = vld [vmem:[%s2 + $0xa8] sm:$0xff]
      %v295 = vld [vmem:[%s2 + $0xb0] sm:$0xff]
      %v296 = vld [vmem:[%s2 + $0xb8] sm:$0xff]
      %v297 = vld [vmem:[%s2 + $0xc0] sm:$0xff]
      %v298 = vld [vmem:[%s2 + $0xc8] sm:$0xff]
      %v299 = vld [vmem:[%s2 + $0xd0] sm:$0xff]
      %v300 = vld [vmem:[%s2 + $0xd8] sm:$0xff]
      %v301 = vld [vmem:[%s2 + $0xe0] sm:$0xff]
      %v302 = vld [vmem:[%s2 + $0xe8] sm:$0xff]
      %v303 = vld [vmem:[%s2 + $0xf0] sm:$0xff]
      %v304 = vld [vmem:[%s2 + $0xf8] sm:$0xff]
      %v305 = vld [vmem:[%s3] sm:$0x3]
      %v307 = vlaneseq
      %v308 = vshrl.u32 %v307, 7
      %v309 = vsub.s32 0, %v308
      %v310 = vrot.slane %v305, %v309
      %v311 = vlaneseq
      %v312 = vshrl.u32 %v311, 7
      %v313 = vsub.s32 1, %v312
      %v314 = vrot.slane %v305, %v313
      %317 = vmatprep.subr.mxu0 %v274
      %318 = vmatpush1.msra.mxu0 %v273
      %319 = vmatprep.subr.mxu0 %v276
      %320 = vmatpush1.msra.mxu0 %v275
      %321 = vmatprep.subr.mxu0 %v278
      %322 = vmatpush1.msra.mxu0 %v277
      %323 = vmatprep.subr.mxu0 %v280
      %324 = vmatpush1.msra.mxu0 %v279
      %325 = vmatprep.subr.mxu0 %v282
      %326 = vmatpush1.msra.mxu0 %v281
      %327 = vmatprep.subr.mxu0 %v284
      %328 = vmatpush1.msra.mxu0 %v283
      %329 = vmatprep.subr.mxu0 %v286
      %330 = vmatpush1.msra.mxu0 %v285
      %331 = vmatprep.subr.mxu0 %v288
      %332 = vmatpush1.msra.mxu0 %v287
      %333 = vmatprep.subr.mxu0 %v290
      %334 = vmatpush1.msra.mxu0 %v289
      %335 = vmatprep.subr.mxu0 %v292
      %336 = vmatpush1.msra.mxu0 %v291
      %337 = vmatprep.subr.mxu0 %v294
      %338 = vmatpush1.msra.mxu0 %v293
      %339 = vmatprep.subr.mxu0 %v296
      %340 = vmatpush1.msra.mxu0 %v295
      %341 = vmatprep.subr.mxu0 %v298
      %342 = vmatpush1.msra.mxu0 %v297
      %343 = vmatprep.subr.mxu0 %v300
      %344 = vmatpush1.msra.mxu0 %v299
      %345 = vmatprep.subr.mxu0 %v302
      %346 = vmatpush1.msra.mxu0 %v301
      %347 = vmatprep.subr.mxu0 %v304
      %348 = vmatpush1.msra.mxu0 %v303
      %349 = vmatprep.subr.mxu0 0.0
      %350 = vmatpush1.msra.mxu0 0.0
      %351 = vmatprep.subr.mxu0 0.0
      %352 = vmatpush1.msra.mxu0 0.0
      %353 = vmatprep.subr.mxu0 0.0
      %354 = vmatpush1.msra.mxu0 0.0
      %355 = vmatprep.subr.mxu0 0.0
      %356 = vmatpush1.msra.mxu0 0.0
      %357 = vmatprep.subr.mxu0 0.0
      %358 = vmatpush1.msra.mxu0 0.0
      %359 = vmatprep.subr.mxu0 0.0
      %360 = vmatpush1.msra.mxu0 0.0
      %361 = vmatprep.subr.mxu0 0.0
      %362 = vmatpush1.msra.mxu0 0.0
      %363 = vmatprep.subr.mxu0 0.0
      %364 = vmatpush1.msra.mxu0 0.0
      %365 = vmatprep.subr.mxu0 0.0
      %366 = vmatpush1.msra.mxu0 0.0
      %367 = vmatprep.subr.mxu0 0.0
      %368 = vmatpush1.msra.mxu0 0.0
      %369 = vmatprep.subr.mxu0 0.0
      %370 = vmatpush1.msra.mxu0 0.0
      %371 = vmatprep.subr.mxu0 0.0
      %372 = vmatpush1.msra.mxu0 0.0
      %373 = vmatprep.subr.mxu0 0.0
      %374 = vmatpush1.msra.mxu0 0.0
      %375 = vmatprep.subr.mxu0 0.0
      %376 = vmatpush1.msra.mxu0 0.0
      %377 = vmatprep.subr.mxu0 0.0
      %378 = vmatpush1.msra.mxu0 0.0
      %379 = vmatprep.subr.mxu0 0.0
      %380 = vmatpush1.msra.mxu0 0.0
      %381 = vmatprep.mubr.f32.mxu0 0.0
      %382 = vmatmul.mubr.f32.gmra.mrb[0].mxu0 %v271
      %v383 = vpop.f32.mrb[0].mxu0
      %v384 = vadd.f32 %v310, %v383
      %v385 = vpop.f32.mrb[0].mxu0
      %v386 = vadd.f32 %v314, %v385
      %387 = vmatprep.mubr.f32.mxu0 0.0
      %388 = vmatmul.mubr.f32.gmra.mrb[0].mxu0 %v272
      %v389 = vpop.f32.mrb[0].mxu0
      %v390 = vadd.f32 %v310, %v389
      %v391 = vpop.f32.mrb[0].mxu0
      %v392 = vadd.f32 %v314, %v391
      %393 = vdwg.mxu0
      %394 = vst [vmem:[%s251] sm:$0xff] %v384
      %395 = vst [vmem:[%s251 + $0x8] sm:$0xff] %v386
      %396 = vst [vmem:[%s251 + $0x10] sm:$0xff] %v390
      %397 = vst [vmem:[%s251 + $0x18] sm:$0xff] %v392
      %s398 = smul.u32 2, %s20
      %p399 = scmp.lt.s32.totalorder %s19, 1
      %s400 = scalar_select %p399, %s19, 1
      %p401 = scmp.lt.s32.totalorder %s398, 1
      %s402 = scalar_select %p401, %s398, 1
      %s403 = smul.addr %s402, 2
      %s404 = smul.addr %s400, 4
      %s405 = sadd.s32 %s403, %s404
      %s406 = smul.addr %s405, 8
      %s407 = scalar_lea.vmem %s4, %s406
      // Predicated region
      $region37: #{_lambda_.10} parent=35 // pred_check
        %p408 = pneg %p143
      $region38: #{_lambda_.10} parent=35 // pred_check_branch
        %410 = sbr.rel (%p408) target = $region40
      $region39: #{_lambda_.10} parent=35 // pred_region
        %s411 = smul.u32 2, %s20
      $region40: #{_lambda_.10} parent=35 // pred_fallthru
        _
    $region36: #{_lambda_.10} parent=5 // pred_fallthru
      _
    %p412 = scmp.le.s32.totalorder 2, %s10
    // Predicated region
    $region41: #{_lambda_.10} parent=5 // pred_check
      %p413 = pneg %p412
    $region42: #{_lambda_.10} parent=5 // pred_check_branch
      %415 = sbr.rel (%p413) target = $region44
    $region43: #{_lambda_.10} parent=5 // pred_region
      %s416 = ssub.s32 %s10, 2
      // Predicated region
      $region45: #{_lambda_.10} parent=43 // pred_check
        %p417 = pneg %p149
      $region46: #{_lambda_.10} parent=43 // pred_check_branch
        %419 = sbr.rel (%p417) target = $region48
      $region47: #{_lambda_.10} parent=43 // pred_region
        %s420 = smul.u32 2, %s22
        %p421 = scmp.lt.s32.totalorder %s21, 1
        %s422 = scalar_select %p421, %s21, 1
        %p423 = scmp.lt.s32.totalorder %s420, 1
        %s424 = scalar_select %p423, %s420, 1
        %s425 = smul.addr %s424, 2
        %s426 = smul.addr %s422, 4
        %s427 = sadd.s32 %s425, %s426
        %s428 = smul.addr %s427, 8
        %s429 = scalar_lea.vmem %s4, %s428
      $region48: #{_lambda_.10} parent=43 // pred_fallthru
        _
    $region44: #{_lambda_.10} parent=5 // pred_fallthru
      _
  $region6: #{_lambda_.10} parent=0 // loop_footer
    %s14 = sadd.s32 1, %s10
  $region7: #{_lambda_.10} parent=0 // loop_footer_branch
    %9 = sbr.rel target = $region3
  $region8: #{_lambda_.10} parent=0 // loop_exit
    _

// kernel: _lambda_.11
$region0: #{_lambda_.11}
  #allocation0 [shape = 'u32[]', space=smem, size = 0x4, offset = 0x4, fixed_abs, tag = 'smem constant byte address 0x4 - core index']
  #allocation1 [shape = 'u32[144,128]{1,0:T(1,128)}', space=vmem, size = 0x12000, scoped, tag = 'internal scratch']
  %s0 = inlined_call_operand.vmem [shape: f32[2,8,8,64], index: 0, kind: input, shape index: {}, may-alias: {0,1,2}]
  %s1 = inlined_call_operand.vmem [shape: f32[2,8,8,64], index: 1, kind: input, shape index: {}, may-alias: {0,1,2}]
  %s2 = inlined_call_operand.vmem [shape: f32[2,8,8,64], index: 2, kind: input, shape index: {}, may-alias: {0,1,2}]
  %s3 = inlined_call_operand.vmem [shape: f32[2,64,32], index: 3, kind: input, shape index: {}]
  %s4 = inlined_call_operand.vmem [shape: f32[2,1,128], index: 4, kind: input, shape index: {}]
  %s5 = inlined_call_operand.vmem [shape: f32[9,64], index: 5, kind: input, shape index: {}]
  %s6 = inlined_call_operand.vmem [shape: f32[1,64], index: 6, kind: input, shape index: {}]
  %s7 = inlined_call_operand.vmem [shape: f32[64,64], index: 7, kind: input, shape index: {}]
  %s8 = inlined_call_operand.vmem [shape: f32[1,64], index: 8, kind: input, shape index: {}]
  %s9 = inlined_call_operand.vmem [shape: f32[64,32], index: 9, kind: input, shape index: {}]
  %s10 = inlined_call_operand.vmem [shape: f32[1,32], index: 10, kind: input, shape index: {}]
  %s11 = inlined_call_operand.vmem [shape: f32[2,64,32], index: 11, kind: output, shape index: {}]
  %s12 = sld [smem:[#allocation0]]
  $region77: #{_lambda_.11} parent=0
    _
  %s14 = ssub.s32 1, %s12
  %s15 = scalar_select 0, %s14, %s12
  loop: start=0, step=1, limit=4
  $region2: #{_lambda_.11} parent=0 // loop_pre_header
    _
  $region3: #{_lambda_.11} parent=0 // loop_header
    %s17 = sphi 0, %s21
    %p18 = scmp.ge.s32.totalorder %s17, 4
    %s24 = sphi 0, %s36
    %s25 = sphi 0, %s32
    %s26 = sphi 0, %s24
    %s27 = sphi 0, %s25
    %s28 = sphi 0, %s26
    %s29 = sphi 0, %s27
    %s41 = sphi 0, %s43
    %s44 = sphi 0, %s41
    %s45 = sphi 0, %s44
    %s61 = sphi 0, %s45
    %s77 = sphi 0, %s79
    %s80 = sphi 0, %s77
    %s81 = sphi 0, %s80
    %s97 = sphi 0, %s81
    %s113 = sphi 0, %s115
    %s116 = sphi 0, %s113
    %s117 = sphi 0, %s116
    %s133 = sphi 0, %s117
    %s141 = sphi 0, %s143
    %s144 = sphi 0, %s141
    %s145 = sphi 0, %s144
    %s161 = sphi 0, %s145
    %s167 = sphi 0, %s169
    %s170 = sphi 0, %s167
    %s171 = sphi 0, %s170
    %s187 = sphi 0, %s171
    %s191 = sphi 0, %s191
    %s193 = sphi 0, %s191
    %s194 = sphi 0, %s193
    %s208 = sphi 0, %s194
    %s212 = sphi 0, %s212
    %s214 = sphi 0, %s212
    %s215 = sphi 0, %s214
    %s229 = sphi 0, %s215
    %s233 = sphi 0, %s233
    %s235 = sphi 0, %s233
    %s236 = sphi 0, %s235
    %s250 = sphi 0, %s236
    %s254 = sphi 0, %s254
    %s256 = sphi 0, %s254
    %s257 = sphi 0, %s256
    %s271 = sphi 0, %s257
    %s275 = sphi 0, %s275
    %s277 = sphi 0, %s275
    %s278 = sphi 0, %s277
    %s292 = sphi 0, %s278
    %s296 = sphi 0, %s296
    %s298 = sphi 0, %s296
    %s299 = sphi 0, %s298
    %s313 = sphi 0, %s299
    %s321 = sphi 0, %s323
    %s324 = sphi 0, %s321
    %s325 = sphi 0, %s324
    %s341 = sphi 0, %s325
  $region4: #{_lambda_.11} parent=0 // loop_header_branch
    %20 = sbr.rel (%p18) target = $region8
  $region5: #{_lambda_.11} parent=0 // loop_body
    %s22 = ssub.s32 %s17, 1
    %s23 = ssub.s32 %s17, 2
    %s30 = sadd.s32 1, %s25
    %p31 = scmp.ge.s32.totalorder %s30, 1
    %s32 = scalar_select %p31, 0, %s30
    %s33 = sadd.s32 1, %s24
    %s34 = scalar_select %p31, %s33, %s24
    %p35 = scmp.ge.s32.totalorder %s34, 2
    %s36 = scalar_select %p35, 0, %s34
    %s37 = ssub.s32 %s24, %s36
    %s38 = ssub.s32 %s25, %s32
    %s39 = sor.u32 %s37, %s38
    %p40 = scmp.eq.s32.totalorder %s39, 0
    %s42 = sadd.s32 %s41, 1
    %s43 = scalar_select %p40, %s41, %s42
    %p46 = pneg %p40
    %p47 = scmp.eq.s32.totalorder %s17, 1
    %p48 = por %p46, %p47
    %p49 = scmp.ne.s32.totalorder %s41, %s44
    %p50 = scmp.eq.s32.totalorder %s17, 0
    %p51 = por %p49, %p50
    %p52 = scmp.ne.s32.totalorder %s41, %s44
    %p53 = scmp.eq.s32.totalorder %s22, 1
    %p54 = por %p52, %p53
    %p55 = scmp.ne.s32.totalorder %s44, %s45
    %p56 = scmp.eq.s32.totalorder %s22, 0
    %p57 = por %p55, %p56
    %p58 = scmp.ne.s32.totalorder %s44, %s45
    %p59 = scmp.eq.s32.totalorder %s23, 1
    %p60 = por %p58, %p59
    %p62 = scmp.ne.s32.totalorder %s45, %s61
    %p63 = scmp.eq.s32.totalorder %s23, 0
    %p64 = por %p62, %p63
    %s65 = smul.u32 %s25, 8
    %s66 = ssub.s32 %s65, 1
    %p67 = scmp.gt.s32.totalorder %s66, 0
    %s68 = scalar_select %p67, %s66, 0
    %s69 = smul.u32 %s32, 8
    %s70 = ssub.s32 %s69, 1
    %p71 = scmp.gt.s32.totalorder %s70, 0
    %s72 = scalar_select %p71, %s70, 0
    %s73 = ssub.s32 %s24, %s36
    %s74 = ssub.s32 %s68, %s72
    %s75 = sor.u32 %s73, %s74
    %p76 = scmp.eq.s32.totalorder %s75, 0
    %s78 = sadd.s32 %s77, 1
    %s79 = scalar_select %p76, %s77, %s78
    %p82 = pneg %p76
    %p83 = scmp.eq.s32.totalorder %s17, 1
    %p84 = por %p82, %p83
    %p85 = scmp.ne.s32.totalorder %s77, %s80
    %p86 = scmp.eq.s32.totalorder %s17, 0
    %p87 = por %p85, %p86
    %p88 = scmp.ne.s32.totalorder %s77, %s80
    %p89 = scmp.eq.s32.totalorder %s22, 1
    %p90 = por %p88, %p89
    %p91 = scmp.ne.s32.totalorder %s80, %s81
    %p92 = scmp.eq.s32.totalorder %s22, 0
    %p93 = por %p91, %p92
    %p94 = scmp.ne.s32.totalorder %s80, %s81
    %p95 = scmp.eq.s32.totalorder %s23, 1
    %p96 = por %p94, %p95
    %p98 = scmp.ne.s32.totalorder %s81, %s97
    %p99 = scmp.eq.s32.totalorder %s23, 0
    %p100 = por %p98, %p99
    %s101 = sadd.s32 %s25, 1
    %s102 = smul.u32 %s101, 8
    %p103 = scmp.lt.s32.totalorder %s102, 7
    %s104 = scalar_select %p103, %s102, 7
    %s105 = sadd.s32 %s32, 1
    %s106 = smul.u32 %s105, 8
    %p107 = scmp.lt.s32.totalorder %s106, 7
    %s108 = scalar_select %p107, %s106, 7
    %s109 = ssub.s32 %s24, %s36
    %s110 = ssub.s32 %s104, %s108
    %s111 = sor.u32 %s109, %s110
    %p112 = scmp.eq.s32.totalorder %s111, 0
    %s114 = sadd.s32 %s113, 1
    %s115 = scalar_select %p112, %s113, %s114
    %p118 = pneg %p112
    %p119 = scmp.eq.s32.totalorder %s17, 1
    %p120 = por %p118, %p119
    %p121 = scmp.ne.s32.totalorder %s113, %s116
    %p122 = scmp.eq.s32.totalorder %s17, 0
    %p123 = por %p121, %p122
    %p124 = scmp.ne.s32.totalorder %s113, %s116
    %p125 = scmp.eq.s32.totalorder %s22, 1
    %p126 = por %p124, %p125
    %p127 = scmp.ne.s32.totalorder %s116, %s117
    %p128 = scmp.eq.s32.totalorder %s22, 0
    %p129 = por %p127, %p128
    %p130 = scmp.ne.s32.totalorder %s116, %s117
    %p131 = scmp.eq.s32.totalorder %s23, 1
    %p132 = por %p130, %p131
    %p134 = scmp.ne.s32.totalorder %s117, %s133
    %p135 = scmp.eq.s32.totalorder %s23, 0
    %p136 = por %p134, %p135
    %s137 = ssub.s32 %s24, %s36
    %s138 = ssub.s32 %s25, %s32
    %s139 = sor.u32 %s137, %s138
    %p140 = scmp.eq.s32.totalorder %s139, 0
    %s142 = sadd.s32 %s141, 1
    %s143 = scalar_select %p140, %s141, %s142
    %p146 = pneg %p140
    %p147 = scmp.eq.s32.totalorder %s17, 1
    %p148 = por %p146, %p147
    %p149 = scmp.ne.s32.totalorder %s141, %s144
    %p150 = scmp.eq.s32.totalorder %s17, 0
    %p151 = por %p149, %p150
    %p152 = scmp.ne.s32.totalorder %s141, %s144
    %p153 = scmp.eq.s32.totalorder %s22, 1
    %p154 = por %p152, %p153
    %p155 = scmp.ne.s32.totalorder %s144, %s145
    %p156 = scmp.eq.s32.totalorder %s22, 0
    %p157 = por %p155, %p156
    %p158 = scmp.ne.s32.totalorder %s144, %s145
    %p159 = scmp.eq.s32.totalorder %s23, 1
    %p160 = por %p158, %p159
    %p162 = scmp.ne.s32.totalorder %s145, %s161
    %p163 = scmp.eq.s32.totalorder %s23, 0
    %p164 = por %p162, %p163
    %s165 = ssub.s32 %s24, %s36
    %p166 = scmp.eq.s32.totalorder %s165, 0
    %s168 = sadd.s32 %s167, 1
    %s169 = scalar_select %p166, %s167, %s168
    %p172 = pneg %p166
    %p173 = scmp.eq.s32.totalorder %s17, 1
    %p174 = por %p172, %p173
    %p175 = scmp.ne.s32.totalorder %s167, %s170
    %p176 = scmp.eq.s32.totalorder %s17, 0
    %p177 = por %p175, %p176
    %p178 = scmp.ne.s32.totalorder %s167, %s170
    %p179 = scmp.eq.s32.totalorder %s22, 1
    %p180 = por %p178, %p179
    %p181 = scmp.ne.s32.totalorder %s170, %s171
    %p182 = scmp.eq.s32.totalorder %s22, 0
    %p183 = por %p181, %p182
    %p184 = scmp.ne.s32.totalorder %s170, %s171
    %p185 = scmp.eq.s32.totalorder %s23, 1
    %p186 = por %p184, %p185
    %p188 = scmp.ne.s32.totalorder %s171, %s187
    %p189 = scmp.eq.s32.totalorder %s23, 0
    %p190 = por %p188, %p189
    %s192 = sadd.s32 %s191, 1
    %p195 = scmp.eq.s32.totalorder %s17, 1
    %p196 = scmp.ne.s32.totalorder %s191, %s193
    %p197 = scmp.eq.s32.totalorder %s17, 0
    %p198 = por %p196, %p197
    %p199 = scmp.ne.s32.totalorder %s191, %s193
    %p200 = scmp.eq.s32.totalorder %s22, 1
    %p201 = por %p199, %p200
    %p202 = scmp.ne.s32.totalorder %s193, %s194
    %p203 = scmp.eq.s32.totalorder %s22, 0
    %p204 = por %p202, %p203
    %p205 = scmp.ne.s32.totalorder %s193, %s194
    %p206 = scmp.eq.s32.totalorder %s23, 1
    %p207 = por %p205, %p206
    %p209 = scmp.ne.s32.totalorder %s194, %s208
    %p210 = scmp.eq.s32.totalorder %s23, 0
    %p211 = por %p209, %p210
    %s213 = sadd.s32 %s212, 1
    %p216 = scmp.eq.s32.totalorder %s17, 1
    %p217 = scmp.ne.s32.totalorder %s212, %s214
    %p218 = scmp.eq.s32.totalorder %s17, 0
    %p219 = por %p217, %p218
    %p220 = scmp.ne.s32.totalorder %s212, %s214
    %p221 = scmp.eq.s32.totalorder %s22, 1
    %p222 = por %p220, %p221
    %p223 = scmp.ne.s32.totalorder %s214, %s215
    %p224 = scmp.eq.s32.totalorder %s22, 0
    %p225 = por %p223, %p224
    %p226 = scmp.ne.s32.totalorder %s214, %s215
    %p227 = scmp.eq.s32.totalorder %s23, 1
    %p228 = por %p226, %p227
    %p230 = scmp.ne.s32.totalorder %s215, %s229
    %p231 = scmp.eq.s32.totalorder %s23, 0
    %p232 = por %p230, %p231
    %s234 = sadd.s32 %s233, 1
    %p237 = scmp.eq.s32.totalorder %s17, 1
    %p238 = scmp.ne.s32.totalorder %s233, %s235
    %p239 = scmp.eq.s32.totalorder %s17, 0
    %p240 = por %p238, %p239
    %p241 = scmp.ne.s32.totalorder %s233, %s235
    %p242 = scmp.eq.s32.totalorder %s22, 1
    %p243 = por %p241, %p242
    %p244 = scmp.ne.s32.totalorder %s235, %s236
    %p245 = scmp.eq.s32.totalorder %s22, 0
    %p246 = por %p244, %p245
    %p247 = scmp.ne.s32.totalorder %s235, %s236
    %p248 = scmp.eq.s32.totalorder %s23, 1
    %p249 = por %p247, %p248
    %p251 = scmp.ne.s32.totalorder %s236, %s250
    %p252 = scmp.eq.s32.totalorder %s23, 0
    %p253 = por %p251, %p252
    %s255 = sadd.s32 %s254, 1
    %p258 = scmp.eq.s32.totalorder %s17, 1
    %p259 = scmp.ne.s32.totalorder %s254, %s256
    %p260 = scmp.eq.s32.totalorder %s17, 0
    %p261 = por %p259, %p260
    %p262 = scmp.ne.s32.totalorder %s254, %s256
    %p263 = scmp.eq.s32.totalorder %s22, 1
    %p264 = por %p262, %p263
    %p265 = scmp.ne.s32.totalorder %s256, %s257
    %p266 = scmp.eq.s32.totalorder %s22, 0
    %p267 = por %p265, %p266
    %p268 = scmp.ne.s32.totalorder %s256, %s257
    %p269 = scmp.eq.s32.totalorder %s23, 1
    %p270 = por %p268, %p269
    %p272 = scmp.ne.s32.totalorder %s257, %s271
    %p273 = scmp.eq.s32.totalorder %s23, 0
    %p274 = por %p272, %p273
    %s276 = sadd.s32 %s275, 1
    %p279 = scmp.eq.s32.totalorder %s17, 1
    %p280 = scmp.ne.s32.totalorder %s275, %s277
    %p281 = scmp.eq.s32.totalorder %s17, 0
    %p282 = por %p280, %p281
    %p283 = scmp.ne.s32.totalorder %s275, %s277
    %p284 = scmp.eq.s32.totalorder %s22, 1
    %p285 = por %p283, %p284
    %p286 = scmp.ne.s32.totalorder %s277, %s278
    %p287 = scmp.eq.s32.totalorder %s22, 0
    %p288 = por %p286, %p287
    %p289 = scmp.ne.s32.totalorder %s277, %s278
    %p290 = scmp.eq.s32.totalorder %s23, 1
    %p291 = por %p289, %p290
    %p293 = scmp.ne.s32.totalorder %s278, %s292
    %p294 = scmp.eq.s32.totalorder %s23, 0
    %p295 = por %p293, %p294
    %s297 = sadd.s32 %s296, 1
    %p300 = scmp.eq.s32.totalorder %s17, 1
    %p301 = scmp.ne.s32.totalorder %s296, %s298
    %p302 = scmp.eq.s32.totalorder %s17, 0
    %p303 = por %p301, %p302
    %p304 = scmp.ne.s32.totalorder %s296, %s298
    %p305 = scmp.eq.s32.totalorder %s22, 1
    %p306 = por %p304, %p305
    %p307 = scmp.ne.s32.totalorder %s298, %s299
    %p308 = scmp.eq.s32.totalorder %s22, 0
    %p309 = por %p307, %p308
    %p310 = scmp.ne.s32.totalorder %s298, %s299
    %p311 = scmp.eq.s32.totalorder %s23, 1
    %p312 = por %p310, %p311
    %p314 = scmp.ne.s32.totalorder %s299, %s313
    %p315 = scmp.eq.s32.totalorder %s23, 0
    %p316 = por %p314, %p315
    %s317 = ssub.s32 %s24, %s36
    %s318 = ssub.s32 %s25, %s32
    %s319 = sor.u32 %s317, %s318
    %p320 = scmp.eq.s32.totalorder %s319, 0
    %s322 = sadd.s32 %s321, 1
    %s323 = scalar_select %p320, %s321, %s322
    %p326 = pneg %p320
    %p327 = scmp.eq.s32.totalorder %s17, 1
    %p328 = por %p326, %p327
    %p329 = scmp.ne.s32.totalorder %s321, %s324
    %p330 = scmp.eq.s32.totalorder %s17, 0
    %p331 = por %p329, %p330
    %p332 = scmp.ne.s32.totalorder %s321, %s324
    %p333 = scmp.eq.s32.totalorder %s22, 1
    %p334 = por %p332, %p333
    %p335 = scmp.ne.s32.totalorder %s324, %s325
    %p336 = scmp.eq.s32.totalorder %s22, 0
    %p337 = por %p335, %p336
    %p338 = scmp.ne.s32.totalorder %s324, %s325
    %p339 = scmp.eq.s32.totalorder %s23, 1
    %p340 = por %p338, %p339
    %p342 = scmp.ne.s32.totalorder %s325, %s341
    %p343 = scmp.eq.s32.totalorder %s23, 0
    %p344 = por %p342, %p343
    %p345 = scmp.le.s32.totalorder 1, %s17
    %p346 = scmp.lt.s32.totalorder %s17, 3
    %p347 = pnand %p345, %p346
    %p348 = pneg %p347
    // Predicated region
    $region9: #{_lambda_.11} parent=5 // pred_check
      _
    $region10: #{_lambda_.11} parent=5 // pred_check_branch
      %350 = sbr.rel (%p347) target = $region12
    $region11: #{_lambda_.11} parent=5 // pred_region
      %s351 = ssub.s32 %s17, 1
      // Predicated region
      $region13: #{_lambda_.11} parent=11 // pred_check
        %p352 = pneg %p204
      $region14: #{_lambda_.11} parent=11 // pred_check_branch
        %354 = sbr.rel (%p352) target = $region16
      $region15: #{_lambda_.11} parent=11 // pred_region
        _
      $region16: #{_lambda_.11} parent=11 // pred_fallthru
        _
      // Predicated region
      $region17: #{_lambda_.11} parent=11 // pred_check
        %p355 = pneg %p225
      $region18: #{_lambda_.11} parent=11 // pred_check_branch
        %357 = sbr.rel (%p355) target = $region20
      $region19: #{_lambda_.11} parent=11 // pred_region
        _
      $region20: #{_lambda_.11} parent=11 // pred_fallthru
        _
      // Predicated region
      $region21: #{_lambda_.11} parent=11 // pred_check
        %p358 = pneg %p246
      $region22: #{_lambda_.11} parent=11 // pred_check_branch
        %360 = sbr.rel (%p358) target = $region24
      $region23: #{_lambda_.11} parent=11 // pred_region
        _
      $region24: #{_lambda_.11} parent=11 // pred_fallthru
        _
      // Predicated region
      $region25: #{_lambda_.11} parent=11 // pred_check
        %p361 = pneg %p267
      $region26: #{_lambda_.11} parent=11 // pred_check_branch
        %363 = sbr.rel (%p361) target = $region28
      $region27: #{_lambda_.11} parent=11 // pred_region
        _
      $region28: #{_lambda_.11} parent=11 // pred_fallthru
        _
      // Predicated region
      $region29: #{_lambda_.11} parent=11 // pred_check
        %p364 = pneg %p288
      $region30: #{_lambda_.11} parent=11 // pred_check_branch
        %366 = sbr.rel (%p364) target = $region32
      $region31: #{_lambda_.11} parent=11 // pred_region
        _
      $region32: #{_lambda_.11} parent=11 // pred_fallthru
        _
      // Predicated region
      $region33: #{_lambda_.11} parent=11 // pred_check
        %p367 = pneg %p309
      $region34: #{_lambda_.11} parent=11 // pred_check_branch
        %369 = sbr.rel (%p367) target = $region36
      $region35: #{_lambda_.11} parent=11 // pred_region
        _
      $region36: #{_lambda_.11} parent=11 // pred_fallthru
        _
    $region12: #{_lambda_.11} parent=5 // pred_fallthru
      _
    %p370 = scmp.lt.s32.totalorder %s17, 2
    // Predicated region
    $region37: #{_lambda_.11} parent=5 // pred_check
      %p371 = pneg %p370
    $region38: #{_lambda_.11} parent=5 // pred_check_branch
      %373 = sbr.rel (%p371) target = $region40
    $region39: #{_lambda_.11} parent=5 // pred_region
      // Predicated region
      $region41: #{_lambda_.11} parent=39 // pred_check
        %p374 = pneg %p51
      $region42: #{_lambda_.11} parent=39 // pred_check_branch
        %376 = sbr.rel (%p374) target = $region44
      $region43: #{_lambda_.11} parent=39 // pred_region
        %s377 = smul.u32 8, %s25
        %p378 = scmp.lt.s32.totalorder %s24, 1
        %s379 = scalar_select %p378, %s24, 1
        %p380 = scmp.lt.s32.totalorder %s377, 7
        %s381 = scalar_select %p380, %s377, 7
        %s382 = smul.addr %s379, 8
        %s383 = sadd.s32 %s381, %s382
        %s384 = smul.addr %s383, 8
        %s385 = scalar_lea.vmem %s0, %s384
        %s386 = smul.u32 8, %s25
      $region44: #{_lambda_.11} parent=39 // pred_fallthru
        _
      // Predicated region
      $region45: #{_lambda_.11} parent=39 // pred_check
        %p387 = pneg %p87
      $region46: #{_lambda_.11} parent=39 // pred_check_branch
        %389 = sbr.rel (%p387) target = $region48
      $region47: #{_lambda_.11} parent=39 // pred_region
        %s390 = smul.u32 %s25, 8
        %s391 = ssub.s32 %s390, 1
        %p392 = scmp.gt.s32.totalorder %s391, 0
        %s393 = scalar_select %p392, %s391, 0
        %p394 = scmp.lt.s32.totalorder %s24, 1
        %s395 = scalar_select %p394, %s24, 1
        %p396 = scmp.lt.s32.totalorder %s393, 7
        %s397 = scalar_select %p396, %s393, 7
        %s398 = smul.addr %s395, 8
        %s399 = sadd.s32 %s397, %s398
        %s400 = smul.addr %s399, 8
        %s401 = scalar_lea.vmem %s1, %s400
        %s402 = smul.u32 %s25, 8
        %s403 = ssub.s32 %s402, 1
        %p404 = scmp.gt.s32.totalorder %s403, 0
        %s405 = scalar_select %p404, %s403, 0
      $region48: #{_lambda_.11} parent=39 // pred_fallthru
        _
      // Predicated region
      $region49: #{_lambda_.11} parent=39 // pred_check
        %p406 = pneg %p123
      $region50: #{_lambda_.11} parent=39 // pred_check_branch
        %408 = sbr.rel (%p406) target = $region52
      $region51: #{_lambda_.11} parent=39 // pred_region
        %s409 = sadd.s32 %s25, 1
        %s410 = smul.u32 %s409, 8
        %p411 = scmp.lt.s32.totalorder %s410, 7
        %s412 = scalar_select %p411, %s410, 7
        %p413 = scmp.lt.s32.totalorder %s24, 1
        %s414 = scalar_select %p413, %s24, 1
        %p415 = scmp.lt.s32.totalorder %s412, 7
        %s416 = scalar_select %p415, %s412, 7
        %s417 = smul.addr %s414, 8
        %s418 = sadd.s32 %s416, %s417
        %s419 = smul.addr %s418, 8
        %s420 = scalar_lea.vmem %s2, %s419
        %s421 = sadd.s32 %s25, 1
        %s422 = smul.u32 %s421, 8
        %p423 = scmp.lt.s32.totalorder %s422, 7
        %s424 = scalar_select %p423, %s422, 7
      $region52: #{_lambda_.11} parent=39 // pred_fallthru
        _
      // Predicated region
      $region53: #{_lambda_.11} parent=39 // pred_check
        %p425 = pneg %p151
      $region54: #{_lambda_.11} parent=39 // pred_check_branch
        %427 = sbr.rel (%p425) target = $region56
      $region55: #{_lambda_.11} parent=39 // pred_region
        %s428 = smul.u32 8, %s25
        %p429 = scmp.lt.s32.totalorder %s24, 1
        %s430 = scalar_select %p429, %s24, 1
        %p431 = scmp.lt.s32.totalorder %s428, 7
        %s432 = scalar_select %p431, %s428, 7
        %s433 = smul.addr %s430, 8
        %s434 = sadd.s32 %s432, %s433
        %s435 = smul.addr %s434, 8
        %s436 = scalar_lea.vmem %s3, %s435
        %s437 = smul.u32 8, %s25
      $region56: #{_lambda_.11} parent=39 // pred_fallthru
        _
      // Predicated region
      $region57: #{_lambda_.11} parent=39 // pred_check
        %p438 = pneg %p177
      $region58: #{_lambda_.11} parent=39 // pred_check_branch
        %440 = sbr.rel (%p438) target = $region60
      $region59: #{_lambda_.11} parent=39 // pred_region
        %p441 = scmp.lt.s32.totalorder %s24, 1
        %s442 = scalar_select %p441, %s24, 1
        %s443 = scalar_lea.vmem %s4, %s442
      $region60: #{_lambda_.11} parent=39 // pred_fallthru
        _
    $region40: #{_lambda_.11} parent=5 // pred_fallthru
      _
    %p444 = scmp.le.s32.totalorder 1, %s17
    %p445 = scmp.lt.s32.totalorder %s17, 3
    %p446 = pnand %p444, %p445
    %p447 = pneg %p446
    // Predicated region
    $region61: #{_lambda_.11} parent=5 // pred_check
      _
    $region62: #{_lambda_.11} parent=5 // pred_check_branch
      %449 = sbr.rel (%p446) target = $region64
    $region63: #{_lambda_.11} parent=5 // pred_region
      %s450 = ssub.s32 %s17, 1
      %s451 = smul.u32 8, %s27
      %p452 = scmp.lt.s32.totalorder %s26, 1
      %s453 = scalar_select %p452, %s26, 1
      %p454 = scmp.lt.s32.totalorder %s451, 7
      %s455 = scalar_select %p454, %s451, 7
      %s456 = smul.addr %s453, 8
      %s457 = sadd.s32 %s455, %s456
      %s458 = smul.addr %s457, 8
      %s459 = scalar_lea.vmem %s0, %s458
      %p460 = pneg %p57
      %p461 = pneg %p54
      %s462 = smul.u32 %s27, 8
      %s463 = ssub.s32 %s462, 1
      %p464 = scmp.gt.s32.totalorder %s463, 0
      %s465 = scalar_select %p464, %s463, 0
      %p466 = scmp.lt.s32.totalorder %s26, 1
      %s467 = scalar_select %p466, %s26, 1
      %p468 = scmp.lt.s32.totalorder %s465, 7
      %s469 = scalar_select %p468, %s465, 7
      %s470 = smul.addr %s467, 8
      %s471 = sadd.s32 %s469, %s470
      %s472 = smul.addr %s471, 8
      %s473 = scalar_lea.vmem %s1, %s472
      %p474 = pneg %p93
      %p475 = pneg %p90
      %s476 = sadd.s32 %s27, 1
      %s477 = smul.u32 %s476, 8
      %p478 = scmp.lt.s32.totalorder %s477, 7
      %s479 = scalar_select %p478, %s477, 7
      %p480 = scmp.lt.s32.totalorder %s26, 1
      %s481 = scalar_select %p480, %s26, 1
      %p482 = scmp.lt.s32.totalorder %s479, 7
      %s483 = scalar_select %p482, %s479, 7
      %s484 = smul.addr %s481, 8
      %s485 = sadd.s32 %s483, %s484
      %s486 = smul.addr %s485, 8
      %s487 = scalar_lea.vmem %s2, %s486
      %p488 = pneg %p129
      %p489 = pneg %p126
      %s490 = smul.u32 8, %s27
      %p491 = scmp.lt.s32.totalorder %s26, 1
      %s492 = scalar_select %p491, %s26, 1
      %p493 = scmp.lt.s32.totalorder %s490, 7
      %s494 = scalar_select %p493, %s490, 7
      %s495 = smul.addr %s492, 8
      %s496 = sadd.s32 %s494, %s495
      %s497 = smul.addr %s496, 8
      %s498 = scalar_lea.vmem %s3, %s497
      %p499 = pneg %p157
      %p500 = pneg %p154
      %p501 = scmp.lt.s32.totalorder %s26, 1
      %s502 = scalar_select %p501, %s26, 1
      %s503 = scalar_lea.vmem %s4, %s502
      %p504 = pneg %p183
      %p505 = pneg %p180
      %p506 = pneg %p204
      %p507 = pneg %p201
      %p508 = pneg %p225
      %p509 = pneg %p222
      %p510 = pneg %p246
      %p511 = pneg %p243
      %p512 = pneg %p267
      %p513 = pneg %p264
      %p514 = pneg %p288
      %p515 = pneg %p285
      %p516 = pneg %p309
      %p517 = pneg %p306
      %p518 = pneg %p337
      %p519 = pneg %p334
      %s520 = smul.u32 8, %s27
      %p521 = scmp.lt.s32.totalorder %s26, 1
      %s522 = scalar_select %p521, %s26, 1
      %p523 = scmp.lt.s32.totalorder %s520, 7
      %s524 = scalar_select %p523, %s520, 7
      %s525 = smul.addr %s522, 8
      %s526 = sadd.s32 %s524, %s525
      %s527 = smul.addr %s526, 8
      %s528 = scalar_lea.vmem %s11, %s527
      %s529 = smul.u32 8, %s27
      %p530 = scmp.lt.s32.totalorder %s26, 1
      %s531 = scalar_select %p530, %s26, 1
      %p532 = scmp.lt.s32.totalorder %s529, 7
      %s533 = scalar_select %p532, %s529, 7
      %s534 = smul.addr %s531, 8
      %s535 = sadd.s32 %s533, %s534
      %s536 = smul.addr %s535, 8
      %s537 = scalar_lea.vmem %s0, %s536
      %s538 = smul.u32 8, %s27
      %s539 = smul.u32 %s27, 8
      %s540 = ssub.s32 %s539, 1
      %p541 = scmp.gt.s32.totalorder %s540, 0
      %s542 = scalar_select %p541, %s540, 0
      %p543 = scmp.lt.s32.totalorder %s26, 1
      %s544 = scalar_select %p543, %s26, 1
      %p545 = scmp.lt.s32.totalorder %s542, 7
      %s546 = scalar_select %p545, %s542, 7
      %s547 = smul.addr %s544, 8
      %s548 = sadd.s32 %s546, %s547
      %s549 = smul.addr %s548, 8
      %s550 = scalar_lea.vmem %s1, %s549
      %s551 = smul.u32 %s27, 8
      %s552 = ssub.s32 %s551, 1
      %p553 = scmp.gt.s32.totalorder %s552, 0
      %s554 = scalar_select %p553, %s552, 0
      %s555 = sadd.s32 %s27, 1
      %s556 = smul.u32 %s555, 8
      %p557 = scmp.lt.s32.totalorder %s556, 7
      %s558 = scalar_select %p557, %s556, 7
      %p559 = scmp.lt.s32.totalorder %s26, 1
      %s560 = scalar_select %p559, %s26, 1
      %p561 = scmp.lt.s32.totalorder %s558, 7
      %s562 = scalar_select %p561, %s558, 7
      %s563 = smul.addr %s560, 8
      %s564 = sadd.s32 %s562, %s563
      %s565 = smul.addr %s564, 8
      %s566 = scalar_lea.vmem %s2, %s565
      %s567 = sadd.s32 %s27, 1
      %s568 = smul.u32 %s567, 8
      %p569 = scmp.lt.s32.totalorder %s568, 7
      %s570 = scalar_select %p569, %s568, 7
      %s571 = smul.u32 8, %s27
      %p572 = scmp.lt.s32.totalorder %s26, 1
      %s573 = scalar_select %p572, %s26, 1
      %p574 = scmp.lt.s32.totalorder %s571, 7
      %s575 = scalar_select %p574, %s571, 7
      %s576 = smul.addr %s573, 8
      %s577 = sadd.s32 %s575, %s576
      %s578 = smul.addr %s577, 8
      %s579 = scalar_lea.vmem %s3, %s578
      %s580 = smul.u32 8, %s27
      %p581 = scmp.lt.s32.totalorder %s26, 1
      %s582 = scalar_select %p581, %s26, 1
      %s583 = scalar_lea.vmem %s4, %s582
      %s584 = smul.u32 8, %s27
      %p585 = scmp.lt.s32.totalorder %s26, 1
      %s586 = scalar_select %p585, %s26, 1
      %p587 = scmp.lt.s32.totalorder %s584, 7
      %s588 = scalar_select %p587, %s584, 7
      %s589 = smul.addr %s586, 8
      %s590 = sadd.s32 %s588, %s589
      %s591 = smul.addr %s590, 8
      %s592 = scalar_lea.vmem %s11, %s591
      %s593 = smul.u32 8, %s27
      %v594 = vld [vmem:[%s550] sm:$0xff]
      %p595 = scmp.gt.s32.totalorder %s27, 0
      %s596 = scalar_select %p595, 1, 0
      %s597 = scvt.s32.f32 %s596
      %v598 = vstv %s597
      %v599 = vmul.f32 %v594, %v598
      %v600 = vld [vmem:[%s566] sm:$0xff]
      %p601 = scmp.lt.s32.totalorder %s27, 0
      %s602 = scalar_select %p601, 1, 0
      %s603 = scvt.s32.f32 %s602
      %v604 = vstv %s603
      %v605 = vmul.f32 %v600, %v604
      %v606 = vld [vmem:[%s537] sm:$0xff]
      %v607 = vld [vmem:[%s537 + $0x8] sm:$0xff]
      %v608 = vld [vmem:[%s537 + $0x10] sm:$0xff]
      %v609 = vld [vmem:[%s537 + $0x18] sm:$0xff]
      %v610 = vld [vmem:[%s537 + $0x20] sm:$0xff]
      %v611 = vld [vmem:[%s537 + $0x28] sm:$0xff]
      %v612 = vld [vmem:[%s537 + $0x30] sm:$0xff]
      %v613 = vld [vmem:[%s537 + $0x38] sm:$0xff]
      %v624 = vrot.slane %v599, 7
      %v625 = vrot.slane %v606, 7
      %v626 = vrot.slane %v607, 7
      %v627 = vrot.slane %v608, 7
      %v628 = vrot.slane %v609, 7
      %v629 = vrot.slane %v610, 7
      %v630 = vrot.slane %v611, 7
      %v631 = vrot.slane %v612, 7
      %v632 = vrot.slane %v613, 7
      %v633 = vrot.slane %v605, 7
      %vm644 = vcmask 1040384
      %v645 = vsel %vm644, 0.0, %v624
      %v646 = vsel %vm644, 0.0, %v625
      %v647 = vsel %vm644, 0.0, %v626
      %v648 = vsel %vm644, 0.0, %v627
      %v649 = vsel %vm644, 0.0, %v628
      %v650 = vsel %vm644, 0.0, %v629
      %v651 = vsel %vm644, 0.0, %v630
      %v652 = vsel %vm644, 0.0, %v631
      %v653 = vsel %vm644, 0.0, %v632
      %v654 = vsel %vm644, 0.0, %v633
      %v655 = vsel %vm644, %v624, 0.0
      %v656 = vsel %vm644, %v625, 0.0
      %v657 = vsel %vm644, %v626, 0.0
      %v658 = vsel %vm644, %v627, 0.0
      %v659 = vsel %vm644, %v628, 0.0
      %v660 = vsel %vm644, %v629, 0.0
      %v661 = vsel %vm644, %v630, 0.0
      %v662 = vsel %vm644, %v631, 0.0
      %v663 = vsel %vm644, %v632, 0.0
      %v664 = vsel %vm644, %v633, 0.0
      %v665 = vld [vmem:[%s5] sm:$0xff]
      %v666 = vld [vmem:[%s5 + $0x8] sm:$0x1]
      %v667 = vlaneseq
      %v668 = vshrl.u32 %v667, 7
      %v669 = vsub.s32 0, %v668
      %v670 = vrot.slane %v665, %v669
      %v671 = vmul.f32 %v645, %v670
      %v672 = vmul.f32 %v646, %v670
      %v673 = vmul.f32 %v647, %v670
      %v674 = vmul.f32 %v648, %v670
      %v675 = vmul.f32 %v649, %v670
      %v676 = vmul.f32 %v650, %v670
      %v677 = vmul.f32 %v651, %v670
      %v678 = vmul.f32 %v652, %v670
      %v679 = vadd.f32 %v671, 0.0
      %v680 = vadd.f32 %v672, 0.0
      %v681 = vadd.f32 %v673, 0.0
      %v682 = vadd.f32 %v674, 0.0
      %v683 = vadd.f32 %v675, 0.0
      %v684 = vadd.f32 %v676, 0.0
      %v685 = vadd.f32 %v677, 0.0
      %v686 = vadd.f32 %v678, 0.0
      %v687 = vlaneseq
      %v688 = vshrl.u32 %v687, 7
      %v689 = vsub.s32 3, %v688
      %v690 = vrot.slane %v665, %v689
      %v691 = vmul.f32 %v646, %v690
      %v692 = vmul.f32 %v647, %v690
      %v693 = vmul.f32 %v648, %v690
      %v694 = vmul.f32 %v649, %v690
      %v695 = vmul.f32 %v650, %v690
      %v696 = vmul.f32 %v651, %v690
      %v697 = vmul.f32 %v652, %v690
      %v698 = vmul.f32 %v653, %v690
      %v699 = vadd.f32 %v679, %v691
      %v700 = vadd.f32 %v680, %v692
      %v701 = vadd.f32 %v681, %v693
      %v702 = vadd.f32 %v682, %v694
      %v703 = vadd.f32 %v683, %v695
      %v704 = vadd.f32 %v684, %v696
      %v705 = vadd.f32 %v685, %v697
      %v706 = vadd.f32 %v686, %v698
      %v707 = vlaneseq
      %v708 = vshrl.u32 %v707, 7
      %v709 = vsub.s32 6, %v708
      %v710 = vrot.slane %v665, %v709
      %v711 = vmul.f32 %v647, %v710
      %v712 = vmul.f32 %v648, %v710
      %v713 = vmul.f32 %v649, %v710
      %v714 = vmul.f32 %v650, %v710
      %v715 = vmul.f32 %v651, %v710
      %v716 = vmul.f32 %v652, %v710
      %v717 = vmul.f32 %v653, %v710
      %v718 = vmul.f32 %v654, %v710
      %v719 = vadd.f32 %v699, %v711
      %v720 = vadd.f32 %v700, %v712
      %v721 = vadd.f32 %v701, %v713
      %v722 = vadd.f32 %v702, %v714
      %v723 = vadd.f32 %v703, %v715
      %v724 = vadd.f32 %v704, %v716
      %v725 = vadd.f32 %v705, %v717
      %v726 = vadd.f32 %v706, %v718
      %v727 = vlaneseq
      %v728 = vshrl.u32 %v727, 7
      %v729 = vsub.s32 1, %v728
      %v730 = vrot.slane %v665, %v729
      %v731 = vmul.f32 %v645, %v730
      %v732 = vmul.f32 %v655, %v730
      %v733 = vmul.f32 %v646, %v730
      %v734 = vmul.f32 %v656, %v730
      %v735 = vmul.f32 %v647, %v730
      %v736 = vmul.f32 %v657, %v730
      %v737 = vmul.f32 %v648, %v730
      %v738 = vmul.f32 %v658, %v730
      %v739 = vmul.f32 %v649, %v730
      %v740 = vmul.f32 %v659, %v730
      %v741 = vmul.f32 %v650, %v730
      %v742 = vmul.f32 %v660, %v730
      %v743 = vmul.f32 %v651, %v730
      %v744 = vmul.f32 %v661, %v730
      %v745 = vmul.f32 %v652, %v730
      %v746 = vmul.f32 %v662, %v730
      %vm763 = vcmask 1046528
      %v764 = vrot.slane %v731, 1
      %v765 = vrot.slane %v732, 1
      %v766 = vsel %vm763, %v764, %v765
      %v767 = vrot.slane %v733, 1
      %v768 = vrot.slane %v734, 1
      %v769 = vsel %vm763, %v767, %v768
      %v770 = vrot.slane %v735, 1
      %v771 = vrot.slane %v736, 1
      %v772 = vsel %vm763, %v770, %v771
      %v773 = vrot.slane %v737, 1
      %v774 = vrot.slane %v738, 1
      %v775 = vsel %vm763, %v773, %v774
      %v776 = vrot.slane %v739, 1
      %v777 = vrot.slane %v740, 1
      %v778 = vsel %vm763, %v776, %v777
      %v779 = vrot.slane %v741, 1
      %v780 = vrot.slane %v742, 1
      %v781 = vsel %vm763, %v779, %v780
      %v782 = vrot.slane %v743, 1
      %v783 = vrot.slane %v744, 1
      %v784 = vsel %vm763, %v782, %v783
      %v785 = vrot.slane %v745, 1
      %v786 = vrot.slane %v746, 1
      %v787 = vsel %vm763, %v785, %v786
      %v796 = vadd.f32 %v719, %v766
      %v797 = vadd.f32 %v720, %v769
      %v798 = vadd.f32 %v721, %v772
      %v799 = vadd.f32 %v722, %v775
      %v800 = vadd.f32 %v723, %v778
      %v801 = vadd.f32 %v724, %v781
      %v802 = vadd.f32 %v725, %v784
      %v803 = vadd.f32 %v726, %v787
      %v804 = vlaneseq
      %v805 = vshrl.u32 %v804, 7
      %v806 = vsub.s32 4, %v805
      %v807 = vrot.slane %v665, %v806
      %v808 = vmul.f32 %v646, %v807
      %v809 = vmul.f32 %v656, %v807
      %v810 = vmul.f32 %v647, %v807
      %v811 = vmul.f32 %v657, %v807
      %v812 = vmul.f32 %v648, %v807
      %v813 = vmul.f32 %v658, %v807
      %v814 = vmul.f32 %v649, %v807
      %v815 = vmul.f32 %v659, %v807
      %v816 = vmul.f32 %v650, %v807
      %v817 = vmul.f32 %v660, %v807
      %v818 = vmul.f32 %v651, %v807
      %v819 = vmul.f32 %v661, %v807
      %v820 = vmul.f32 %v652, %v807
      %v821 = vmul.f32 %v662, %v807
      %v822 = vmul.f32 %v653, %v807
      %v823 = vmul.f32 %v663, %v807
      %v840 = vrot.slane %v808, 1
      %v841 = vrot.slane %v809, 1
      %v842 = vsel %vm763, %v840, %v841
      %v843 = vrot.slane %v810, 1
      %v844 = vrot.slane %v811, 1
      %v845 = vsel %vm763, %v843, %v844
      %v846 = vrot.slane %v812, 1
      %v847 = vrot.slane %v813, 1
      %v848 = vsel %vm763, %v846, %v847
      %v849 = vrot.slane %v814, 1
      %v850 = vrot.slane %v815, 1
      %v851 = vsel %vm763, %v849, %v850
      %v852 = vrot.slane %v816, 1
      %v853 = vrot.slane %v817, 1
      %v854 = vsel %vm763, %v852, %v853
      %v855 = vrot.slane %v818, 1
      %v856 = vrot.slane %v819, 1
      %v857 = vsel %vm763, %v855, %v856
      %v858 = vrot.slane %v820, 1
      %v859 = vrot.slane %v821, 1
      %v860 = vsel %vm763, %v858, %v859
      %v861 = vrot.slane %v822, 1
      %v862 = vrot.slane %v823, 1
      %v863 = vsel %vm763, %v861, %v862
      %v872 = vadd.f32 %v796, %v842
      %v873 = vadd.f32 %v797, %v845
      %v874 = vadd.f32 %v798, %v848
      %v875 = vadd.f32 %v799, %v851
      %v876 = vadd.f32 %v800, %v854
      %v877 = vadd.f32 %v801, %v857
      %v878 = vadd.f32 %v802, %v860
      %v879 = vadd.f32 %v803, %v863
      %v880 = vlaneseq
      %v881 = vshrl.u32 %v880, 7
      %v882 = vsub.s32 7, %v881
      %v883 = vrot.slane %v665, %v882
      %v884 = vmul.f32 %v647, %v883
      %v885 = vmul.f32 %v657, %v883
      %v886 = vmul.f32 %v648, %v883
      %v887 = vmul.f32 %v658, %v883
      %v888 = vmul.f32 %v649, %v883
      %v889 = vmul.f32 %v659, %v883
      %v890 = vmul.f32 %v650, %v883
      %v891 = vmul.f32 %v660, %v883
      %v892 = vmul.f32 %v651, %v883
      %v893 = vmul.f32 %v661, %v883
      %v894 = vmul.f32 %v652, %v883
      %v895 = vmul.f32 %v662, %v883
      %v896 = vmul.f32 %v653, %v883
      %v897 = vmul.f32 %v663, %v883
      %v898 = vmul.f32 %v654, %v883
      %v899 = vmul.f32 %v664, %v883
      %v916 = vrot.slane %v884, 1
      %v917 = vrot.slane %v885, 1
      %v918 = vsel %vm763, %v916, %v917
      %v919 = vrot.slane %v886, 1
      %v920 = vrot.slane %v887, 1
      %v921 = vsel %vm763, %v919, %v920
      %v922 = vrot.slane %v888, 1
      %v923 = vrot.slane %v889, 1
      %v924 = vsel %vm763, %v922, %v923
      %v925 = vrot.slane %v890, 1
      %v926 = vrot.slane %v891, 1
      %v927 = vsel %vm763, %v925, %v926
      %v928 = vrot.slane %v892, 1
      %v929 = vrot.slane %v893, 1
      %v930 = vsel %vm763, %v928, %v929
      %v931 = vrot.slane %v894, 1
      %v932 = vrot.slane %v895, 1
      %v933 = vsel %vm763, %v931, %v932
      %v934 = vrot.slane %v896, 1
      %v935 = vrot.slane %v897, 1
      %v936 = vsel %vm763, %v934, %v935
      %v937 = vrot.slane %v898, 1
      %v938 = vrot.slane %v899, 1
      %v939 = vsel %vm763, %v937, %v938
      %v948 = vadd.f32 %v872, %v918
      %v949 = vadd.f32 %v873, %v921
      %v950 = vadd.f32 %v874, %v924
      %v951 = vadd.f32 %v875, %v927
      %v952 = vadd.f32 %v876, %v930
      %v953 = vadd.f32 %v877, %v933
      %v954 = vadd.f32 %v878, %v936
      %v955 = vadd.f32 %v879, %v939
      %v956 = vlaneseq
      %v957 = vshrl.u32 %v956, 7
      %v958 = vsub.s32 2, %v957
      %v959 = vrot.slane %v665, %v958
      %v960 = vmul.f32 %v645, %v959
      %v961 = vmul.f32 %v655, %v959
      %v962 = vmul.f32 %v646, %v959
      %v963 = vmul.f32 %v656, %v959
      %v964 = vmul.f32 %v647, %v959
      %v965 = vmul.f32 %v657, %v959
      %v966 = vmul.f32 %v648, %v959
      %v967 = vmul.f32 %v658, %v959
      %v968 = vmul.f32 %v649, %v959
      %v969 = vmul.f32 %v659, %v959
      %v970 = vmul.f32 %v650, %v959
      %v971 = vmul.f32 %v660, %v959
      %v972 = vmul.f32 %v651, %v959
      %v973 = vmul.f32 %v661, %v959
      %v974 = vmul.f32 %v652, %v959
      %v975 = vmul.f32 %v662, %v959
      %vm992 = vcmask 1045504
      %v993 = vrot.slane %v960, 2
      %v994 = vrot.slane %v961, 2
      %v995 = vsel %vm992, %v993, %v994
      %v996 = vrot.slane %v962, 2
      %v997 = vrot.slane %v963, 2
      %v998 = vsel %vm992, %v996, %v997
      %v999 = vrot.slane %v964, 2
      %v1000 = vrot.slane %v965, 2
      %v1001 = vsel %vm992, %v999, %v1000
      %v1002 = vrot.slane %v966, 2
      %v1003 = vrot.slane %v967, 2
      %v1004 = vsel %vm992, %v1002, %v1003
      %v1005 = vrot.slane %v968, 2
      %v1006 = vrot.slane %v969, 2
      %v1007 = vsel %vm992, %v1005, %v1006
      %v1008 = vrot.slane %v970, 2
      %v1009 = vrot.slane %v971, 2
      %v1010 = vsel %vm992, %v1008, %v1009
      %v1011 = vrot.slane %v972, 2
      %v1012 = vrot.slane %v973, 2
      %v1013 = vsel %vm992, %v1011, %v1012
      %v1014 = vrot.slane %v974, 2
      %v1015 = vrot.slane %v975, 2
      %v1016 = vsel %vm992, %v1014, %v1015
      %v1025 = vadd.f32 %v948, %v995
      %v1026 = vadd.f32 %v949, %v998
      %v1027 = vadd.f32 %v950, %v1001
      %v1028 = vadd.f32 %v951, %v1004
      %v1029 = vadd.f32 %v952, %v1007
      %v1030 = vadd.f32 %v953, %v1010
      %v1031 = vadd.f32 %v954, %v1013
      %v1032 = vadd.f32 %v955, %v1016
      %v1033 = vlaneseq
      %v1034 = vshrl.u32 %v1033, 7
      %v1035 = vsub.s32 5, %v1034
      %v1036 = vrot.slane %v665, %v1035
      %v1037 = vmul.f32 %v646, %v1036
      %v1038 = vmul.f32 %v656, %v1036
      %v1039 = vmul.f32 %v647, %v1036
      %v1040 = vmul.f32 %v657, %v1036
      %v1041 = vmul.f32 %v648, %v1036
      %v1042 = vmul.f32 %v658, %v1036
      %v1043 = vmul.f32 %v649, %v1036
      %v1044 = vmul.f32 %v659, %v1036
      %v1045 = vmul.f32 %v650, %v1036
      %v1046 = vmul.f32 %v660, %v1036
      %v1047 = vmul.f32 %v651, %v1036
      %v1048 = vmul.f32 %v661, %v1036
      %v1049 = vmul.f32 %v652, %v1036
      %v1050 = vmul.f32 %v662, %v1036
      %v1051 = vmul.f32 %v653, %v1036
      %v1052 = vmul.f32 %v663, %v1036
      %v1069 = vrot.slane %v1037, 2
      %v1070 = vrot.slane %v1038, 2
      %v1071 = vsel %vm992, %v1069, %v1070
      %v1072 = vrot.slane %v1039, 2
      %v1073 = vrot.slane %v1040, 2
      %v1074 = vsel %vm992, %v1072, %v1073
      %v1075 = vrot.slane %v1041, 2
      %v1076 = vrot.slane %v1042, 2
      %v1077 = vsel %vm992, %v1075, %v1076
      %v1078 = vrot.slane %v1043, 2
      %v1079 = vrot.slane %v1044, 2
      %v1080 = vsel %vm992, %v1078, %v1079
      %v1081 = vrot.slane %v1045, 2
      %v1082 = vrot.slane %v1046, 2
      %v1083 = vsel %vm992, %v1081, %v1082
      %v1084 = vrot.slane %v1047, 2
      %v1085 = vrot.slane %v1048, 2
      %v1086 = vsel %vm992, %v1084, %v1085
      %v1087 = vrot.slane %v1049, 2
      %v1088 = vrot.slane %v1050, 2
      %v1089 = vsel %vm992, %v1087, %v1088
      %v1090 = vrot.slane %v1051, 2
      %v1091 = vrot.slane %v1052, 2
      %v1092 = vsel %vm992, %v1090, %v1091
      %v1101 = vadd.f32 %v1025, %v1071
      %v1102 = vadd.f32 %v1026, %v1074
      %v1103 = vadd.f32 %v1027, %v1077
      %v1104 = vadd.f32 %v1028, %v1080
      %v1105 = vadd.f32 %v1029, %v1083
      %v1106 = vadd.f32 %v1030, %v1086
      %v1107 = vadd.f32 %v1031, %v1089
      %v1108 = vadd.f32 %v1032, %v1092
      %v1109 = vlaneseq
      %v1110 = vshrl.u32 %v1109, 7
      %v1111 = vsub.s32 0, %v1110
      %v1112 = vrot.slane %v666, %v1111
      %v1113 = vmul.f32 %v647, %v1112
      %v1114 = vmul.f32 %v657, %v1112
      %v1115 = vmul.f32 %v648, %v1112
      %v1116 = vmul.f32 %v658, %v1112
      %v1117 = vmul.f32 %v649, %v1112
      %v1118 = vmul.f32 %v659, %v1112
      %v1119 = vmul.f32 %v650, %v1112
      %v1120 = vmul.f32 %v660, %v1112
      %v1121 = vmul.f32 %v651, %v1112
      %v1122 = vmul.f32 %v661, %v1112
      %v1123 = vmul.f32 %v652, %v1112
      %v1124 = vmul.f32 %v662, %v1112
      %v1125 = vmul.f32 %v653, %v1112
      %v1126 = vmul.f32 %v663, %v1112
      %v1127 = vmul.f32 %v654, %v1112
      %v1128 = vmul.f32 %v664, %v1112
      %v1145 = vrot.slane %v1113, 2
      %v1146 = vrot.slane %v1114, 2
      %v1147 = vsel %vm992, %v1145, %v1146
      %v1148 = vrot.slane %v1115, 2
      %v1149 = vrot.slane %v1116, 2
      %v1150 = vsel %vm992, %v1148, %v1149
      %v1151 = vrot.slane %v1117, 2
      %v1152 = vrot.slane %v1118, 2
      %v1153 = vsel %vm992, %v1151, %v1152
      %v1154 = vrot.slane %v1119, 2
      %v1155 = vrot.slane %v1120, 2
      %v1156 = vsel %vm992, %v1154, %v1155
      %v1157 = vrot.slane %v1121, 2
      %v1158 = vrot.slane %v1122, 2
      %v1159 = vsel %vm992, %v1157, %v1158
      %v1160 = vrot.slane %v1123, 2
      %v1161 = vrot.slane %v1124, 2
      %v1162 = vsel %vm992, %v1160, %v1161
      %v1163 = vrot.slane %v1125, 2
      %v1164 = vrot.slane %v1126, 2
      %v1165 = vsel %vm992, %v1163, %v1164
      %v1166 = vrot.slane %v1127, 2
      %v1167 = vrot.slane %v1128, 2
      %v1168 = vsel %vm992, %v1166, %v1167
      %v1177 = vadd.f32 %v1101, %v1147
      %v1178 = vadd.f32 %v1102, %v1150
      %v1179 = vadd.f32 %v1103, %v1153
      %v1180 = vadd.f32 %v1104, %v1156
      %v1181 = vadd.f32 %v1105, %v1159
      %v1182 = vadd.f32 %v1106, %v1162
      %v1183 = vadd.f32 %v1107, %v1165
      %v1184 = vadd.f32 %v1108, %v1168
      %v1185 = vld [vmem:[%s6] sm:$0x1]
      %v1187 = vlaneseq
      %v1188 = vshrl.u32 %v1187, 7
      %v1189 = vsub.s32 0, %v1188
      %v1190 = vrot.slane %v1185, %v1189
      %v1192 = vadd.f32 %v1177, %v1190
      %v1193 = vadd.f32 %v1178, %v1190
      %v1194 = vadd.f32 %v1179, %v1190
      %v1195 = vadd.f32 %v1180, %v1190
      %v1196 = vadd.f32 %v1181, %v1190
      %v1197 = vadd.f32 %v1182, %v1190
      %v1198 = vadd.f32 %v1183, %v1190
      %v1199 = vadd.f32 %v1184, %v1190
      %v1200 = vld [vmem:[%s7] sm:$0xff]
      %v1201 = vld [vmem:[%s7 + $0x8] sm:$0xff]
      %v1202 = vld [vmem:[%s7 + $0x10] sm:$0xff]
      %v1203 = vld [vmem:[%s7 + $0x18] sm:$0xff]
      %v1204 = vld [vmem:[%s7 + $0x20] sm:$0xff]
      %v1205 = vld [vmem:[%s7 + $0x28] sm:$0xff]
      %v1206 = vld [vmem:[%s7 + $0x30] sm:$0xff]
      %v1207 = vld [vmem:[%s7 + $0x38] sm:$0xff]
      %v1208 = vld [vmem:[%s8] sm:$0x1]
      %v1210 = vlaneseq
      %v1211 = vshrl.u32 %v1210, 7
      %v1212 = vsub.s32 0, %v1211
      %v1213 = vrot.slane %v1208, %v1212
      %vm1215 = vcmask 523264
      %v1217 = vsel %vm1215, %v1192, 0
      %v1220 = vsel %vm1215, %v1193, 0
      %v1223 = vsel %vm1215, %v1194, 0
      %v1226 = vsel %vm1215, %v1195, 0
      %v1229 = vsel %vm1215, %v1196, 0
      %v1232 = vsel %vm1215, %v1197, 0
      %v1235 = vsel %vm1215, %v1198, 0
      %v1238 = vsel %vm1215, %v1199, 0
      %1240 = vmatprep.subr.mxu0 0.0
      %1241 = vmatpush1.msra.mxu0 %v1200
      %1242 = vmatprep.subr.mxu0 0.0
      %1243 = vmatpush1.msra.mxu0 %v1201
      %1244 = vmatprep.subr.mxu0 0.0
      %1245 = vmatpush1.msra.mxu0 %v1202
      %1246 = vmatprep.subr.mxu0 0.0
      %1247 = vmatpush1.msra.mxu0 %v1203
      %1248 = vmatprep.subr.mxu0 0.0
      %1249 = vmatpush1.msra.mxu0 %v1204
      %1250 = vmatprep.subr.mxu0 0.0
      %1251 = vmatpush1.msra.mxu0 %v1205
      %1252 = vmatprep.subr.mxu0 0.0
      %1253 = vmatpush1.msra.mxu0 %v1206
      %1254 = vmatprep.subr.mxu0 0.0
      %1255 = vmatpush1.msra.mxu0 %v1207
      %1256 = vmatprep.subr.mxu0 0.0
      %1257 = vmatpush1.msra.mxu0 0.0
      %1258 = vmatprep.subr.mxu0 0.0
      %1259 = vmatpush1.msra.mxu0 0.0
      %1260 = vmatprep.subr.mxu0 0.0
      %1261 = vmatpush1.msra.mxu0 0.0
      %1262 = vmatprep.subr.mxu0 0.0
      %1263 = vmatpush1.msra.mxu0 0.0
      %1264 = vmatprep.subr.mxu0 0.0
      %1265 = vmatpush1.msra.mxu0 0.0
      %1266 = vmatprep.subr.mxu0 0.0
      %1267 = vmatpush1.msra.mxu0 0.0
      %1268 = vmatprep.subr.mxu0 0.0
      %1269 = vmatpush1.msra.mxu0 0.0
      %1270 = vmatprep.subr.mxu0 0.0
      %1271 = vmatpush1.msra.mxu0 0.0
      %1272 = vmatprep.subr.mxu0 0.0
      %1273 = vmatpush1.msra.mxu0 0.0
      %1274 = vmatprep.subr.mxu0 0.0
      %1275 = vmatpush1.msra.mxu0 0.0
      %1276 = vmatprep.subr.mxu0 0.0
      %1277 = vmatpush1.msra.mxu0 0.0
      %1278 = vmatprep.subr.mxu0 0.0
      %1279 = vmatpush1.msra.mxu0 0.0
      %1280 = vmatprep.subr.mxu0 0.0
      %1281 = vmatpush1.msra.mxu0 0.0
      %1282 = vmatprep.subr.mxu0 0.0
      %1283 = vmatpush1.msra.mxu0 0.0
      %1284 = vmatprep.subr.mxu0 0.0
      %1285 = vmatpush1.msra.mxu0 0.0
      %1286 = vmatprep.subr.mxu0 0.0
      %1287 = vmatpush1.msra.mxu0 0.0
      %1288 = vmatprep.subr.mxu0 0.0
      %1289 = vmatpush1.msra.mxu0 0.0
      %1290 = vmatprep.subr.mxu0 0.0
      %1291 = vmatpush1.msra.mxu0 0.0
      %1292 = vmatprep.subr.mxu0 0.0
      %1293 = vmatpush1.msra.mxu0 0.0
      %1294 = vmatprep.subr.mxu0 0.0
      %1295 = vmatpush1.msra.mxu0 0.0
      %1296 = vmatprep.subr.mxu0 0.0
      %1297 = vmatpush1.msra.mxu0 0.0
      %1298 = vmatprep.subr.mxu0 0.0
      %1299 = vmatpush1.msra.mxu0 0.0
      %1300 = vmatprep.subr.mxu0 0.0
      %1301 = vmatpush1.msra.mxu0 0.0
      %1302 = vmatprep.subr.mxu0 0.0
      %1303 = vmatpush1.msra.mxu0 0.0
      %1304 = vmatprep.mubr.f32.mxu0 0.0
      %1305 = vmatmul.mubr.f32.gmra.mrb[0].mxu0 %v1217
      %v1306 = vpop.f32.mrb[0].mxu0
      %v1307 = vadd.f32 %v1213, %v1306
      %v1308 = vpop.f32.mrb[0].mxu0
      %1309 = vmatprep.mubr.f32.mxu0 0.0
      %1310 = vmatmul.mubr.f32.gmra.mrb[0].mxu0 %v1220
      %v1311 = vpop.f32.mrb[0].mxu0
      %v1312 = vadd.f32 %v1213, %v1311
      %v1313 = vpop.f32.mrb[0].mxu0
      %1314 = vmatprep.mubr.f32.mxu0 0.0
      %1315 = vmatmul.mubr.f32.gmra.mrb[0].mxu0 %v1223
      %v1316 = vpop.f32.mrb[0].mxu0
      %v1317 = vadd.f32 %v1213, %v1316
      %v1318 = vpop.f32.mrb[0].mxu0
      %1319 = vmatprep.mubr.f32.mxu0 0.0
      %1320 = vmatmul.mubr.f32.gmra.mrb[0].mxu0 %v1226
      %v1321 = vpop.f32.mrb[0].mxu0
      %v1322 = vadd.f32 %v1213, %v1321
      %v1323 = vpop.f32.mrb[0].mxu0
      %1324 = vmatprep.mubr.f32.mxu0 0.0
      %1325 = vmatmul.mubr.f32.gmra.mrb[0].mxu0 %v1229
      %v1326 = vpop.f32.mrb[0].mxu0
      %v1327 = vadd.f32 %v1213, %v1326
      %v1328 = vpop.f32.mrb[0].mxu0
      %1329 = vmatprep.mubr.f32.mxu0 0.0
      %1330 = vmatmul.mubr.f32.gmra.mrb[0].mxu0 %v1232
      %v1331 = vpop.f32.mrb[0].mxu0
      %v1332 = vadd.f32 %v1213, %v1331
      %v1333 = vpop.f32.mrb[0].mxu0
      %1334 = vmatprep.mubr.f32.mxu0 0.0
      %1335 = vmatmul.mubr.f32.gmra.mrb[0].mxu0 %v1235
      %v1336 = vpop.f32.mrb[0].mxu0
      %v1337 = vadd.f32 %v1213, %v1336
      %v1338 = vpop.f32.mrb[0].mxu0
      %1339 = vmatprep.mubr.f32.mxu0 0.0
      %1340 = vmatmul.mubr.f32.gmra.mrb[0].mxu0 %v1238
      %v1341 = vpop.f32.mrb[0].mxu0
      %v1342 = vadd.f32 %v1213, %v1341
      %v1343 = vpop.f32.mrb[0].mxu0
      %1344 = vdwg.mxu0
      %v1345 = vmul.f32 %v1307, 0.5
      %v1346 = vmul.f32 %v1312, 0.5
      %v1347 = vmul.f32 %v1317, 0.5
      %v1348 = vmul.f32 %v1322, 0.5
      %v1349 = vmul.f32 %v1327, 0.5
      %v1350 = vmul.f32 %v1332, 0.5
      %v1351 = vmul.f32 %v1337, 0.5
      %v1352 = vmul.f32 %v1342, 0.5
      %v1353 = vmul.f32 %v1307, 0.044715
      %v1354 = vmul.f32 %v1312, 0.044715
      %v1355 = vmul.f32 %v1317, 0.044715
      %v1356 = vmul.f32 %v1322, 0.044715
      %v1357 = vmul.f32 %v1327, 0.044715
      %v1358 = vmul.f32 %v1332, 0.044715
      %v1359 = vmul.f32 %v1337, 0.044715
      %v1360 = vmul.f32 %v1342, 0.044715
      %v1361 = vmul.f32 %v1353, %v1307
      %v1362 = vmul.f32 %v1354, %v1312
      %v1363 = vmul.f32 %v1355, %v1317
      %v1364 = vmul.f32 %v1356, %v1322
      %v1365 = vmul.f32 %v1357, %v1327
      %v1366 = vmul.f32 %v1358, %v1332
      %v1367 = vmul.f32 %v1359, %v1337
      %v1368 = vmul.f32 %v1360, %v1342
      %v1369 = vmul.f32 %v1361, %v1307
      %v1370 = vmul.f32 %v1362, %v1312
      %v1371 = vmul.f32 %v1363, %v1317
      %v1372 = vmul.f32 %v1364, %v1322
      %v1373 = vmul.f32 %v1365, %v1327
      %v1374 = vmul.f32 %v1366, %v1332
      %v1375 = vmul.f32 %v1367, %v1337
      %v1376 = vmul.f32 %v1368, %v1342
      %v1377 = vadd.f32 %v1307, %v1369
      %v1378 = vadd.f32 %v1312, %v1370
      %v1379 = vadd.f32 %v1317, %v1371
      %v1380 = vadd.f32 %v1322, %v1372
      %v1381 = vadd.f32 %v1327, %v1373
      %v1382 = vadd.f32 %v1332, %v1374
      %v1383 = vadd.f32 %v1337, %v1375
      %v1384 = vadd.f32 %v1342, %v1376
      %v1385 = vmul.f32 %v1377, 0.7978846
      %v1386 = vmul.f32 %v1378, 0.7978846
      %v1387 = vmul.f32 %v1379, 0.7978846
      %v1388 = vmul.f32 %v1380, 0.7978846
      %v1389 = vmul.f32 %v1381, 0.7978846
      %v1390 = vmul.f32 %v1382, 0.7978846
      %v1391 = vmul.f32 %v1383, 0.7978846
      %v1392 = vmul.f32 %v1384, 0.7978846
      %v1393 = vtanh.pop %v1385
      %v1394 = vtanh.pop %v1386
      %v1395 = vtanh.pop %v1387
      %v1396 = vtanh.pop %v1388
      %v1397 = vtanh.pop %v1389
      %v1398 = vtanh.pop %v1390
      %v1399 = vtanh.pop %v1391
      %v1400 = vtanh.pop %v1392
      %v1401 = vadd.f32 %v1393, 1.0
      %v1402 = vadd.f32 %v1394, 1.0
      %v1403 = vadd.f32 %v1395, 1.0
      %v1404 = vadd.f32 %v1396, 1.0
      %v1405 = vadd.f32 %v1397, 1.0
      %v1406 = vadd.f32 %v1398, 1.0
      %v1407 = vadd.f32 %v1399, 1.0
      %v1408 = vadd.f32 %v1400, 1.0
      %v1409 = vmul.f32 %v1345, %v1401
      %v1410 = vmul.f32 %v1346, %v1402
      %v1411 = vmul.f32 %v1347, %v1403
      %v1412 = vmul.f32 %v1348, %v1404
      %v1413 = vmul.f32 %v1349, %v1405
      %v1414 = vmul.f32 %v1350, %v1406
      %v1415 = vmul.f32 %v1351, %v1407
      %v1416 = vmul.f32 %v1352, %v1408
      %v1417 = vld [vmem:[%s9] sm:$0xff]
      %v1418 = vld [vmem:[%s9 + $0x8] sm:$0xff]
      %v1419 = vld [vmem:[%s9 + $0x10] sm:$0xff]
      %v1420 = vld [vmem:[%s9 + $0x18] sm:$0xff]
      %v1421 = vld [vmem:[%s9 + $0x20] sm:$0xff]
      %v1422 = vld [vmem:[%s9 + $0x28] sm:$0xff]
      %v1423 = vld [vmem:[%s9 + $0x30] sm:$0xff]
      %v1424 = vld [vmem:[%s9 + $0x38] sm:$0xff]
      %v1425 = vld [vmem:[%s10] sm:$0x1]
      %v1427 = vlaneseq
      %v1428 = vshrl.u32 %v1427, 7
      %v1429 = vsub.s32 0, %v1428
      %v1430 = vrot.slane %v1425, %v1429
      %v1433 = vsel %vm1215, %v1409, 0
      %v1436 = vsel %vm1215, %v1410, 0
      %v1439 = vsel %vm1215, %v1411, 0
      %v1442 = vsel %vm1215, %v1412, 0
      %v1445 = vsel %vm1215, %v1413, 0
      %v1448 = vsel %vm1215, %v1414, 0
      %v1451 = vsel %vm1215, %v1415, 0
      %v1454 = vsel %vm1215, %v1416, 0
      %1456 = vmatprep.subr.mxu0 0.0
      %1457 = vmatpush1.msra.mxu0 %v1417
      %1458 = vmatprep.subr.mxu0 0.0
      %1459 = vmatpush1.msra.mxu0 %v1418
      %1460 = vmatprep.subr.mxu0 0.0
      %1461 = vmatpush1.msra.mxu0 %v1419
      %1462 = vmatprep.subr.mxu0 0.0
      %1463 = vmatpush1.msra.mxu0 %v1420
      %1464 = vmatprep.subr.mxu0 0.0
      %1465 = vmatpush1.msra.mxu0 %v1421
      %1466 = vmatprep.subr.mxu0 0.0
      %1467 = vmatpush1.msra.mxu0 %v1422
      %1468 = vmatprep.subr.mxu0 0.0
      %1469 = vmatpush1.msra.mxu0 %v1423
      %1470 = vmatprep.subr.mxu0 0.0
      %1471 = vmatpush1.msra.mxu0 %v1424
      %1472 = vmatprep.subr.mxu0 0.0
      %1473 = vmatpush1.msra.mxu0 0.0
      %1474 = vmatprep.subr.mxu0 0.0
      %1475 = vmatpush1.msra.mxu0 0.0
      %1476 = vmatprep.subr.mxu0 0.0
      %1477 = vmatpush1.msra.mxu0 0.0
      %1478 = vmatprep.subr.mxu0 0.0
      %1479 = vmatpush1.msra.mxu0 0.0
      %1480 = vmatprep.subr.mxu0 0.0
      %1481 = vmatpush1.msra.mxu0 0.0
      %1482 = vmatprep.subr.mxu0 0.0
      %1483 = vmatpush1.msra.mxu0 0.0
      %1484 = vmatprep.subr.mxu0 0.0
      %1485 = vmatpush1.msra.mxu0 0.0
      %1486 = vmatprep.subr.mxu0 0.0
      %1487 = vmatpush1.msra.mxu0 0.0
      %1488 = vmatprep.subr.mxu0 0.0
      %1489 = vmatpush1.msra.mxu0 0.0
      %1490 = vmatprep.subr.mxu0 0.0
      %1491 = vmatpush1.msra.mxu0 0.0
      %1492 = vmatprep.subr.mxu0 0.0
      %1493 = vmatpush1.msra.mxu0 0.0
      %1494 = vmatprep.subr.mxu0 0.0
      %1495 = vmatpush1.msra.mxu0 0.0
      %1496 = vmatprep.subr.mxu0 0.0
      %1497 = vmatpush1.msra.mxu0 0.0
      %1498 = vmatprep.subr.mxu0 0.0
      %1499 = vmatpush1.msra.mxu0 0.0
      %1500 = vmatprep.subr.mxu0 0.0
      %1501 = vmatpush1.msra.mxu0 0.0
      %1502 = vmatprep.subr.mxu0 0.0
      %1503 = vmatpush1.msra.mxu0 0.0
      %1504 = vmatprep.subr.mxu0 0.0
      %1505 = vmatpush1.msra.mxu0 0.0
      %1506 = vmatprep.subr.mxu0 0.0
      %1507 = vmatpush1.msra.mxu0 0.0
      %1508 = vmatprep.subr.mxu0 0.0
      %1509 = vmatpush1.msra.mxu0 0.0
      %1510 = vmatprep.subr.mxu0 0.0
      %1511 = vmatpush1.msra.mxu0 0.0
      %1512 = vmatprep.subr.mxu0 0.0
      %1513 = vmatpush1.msra.mxu0 0.0
      %1514 = vmatprep.subr.mxu0 0.0
      %1515 = vmatpush1.msra.mxu0 0.0
      %1516 = vmatprep.subr.mxu0 0.0
      %1517 = vmatpush1.msra.mxu0 0.0
      %1518 = vmatprep.subr.mxu0 0.0
      %1519 = vmatpush1.msra.mxu0 0.0
      %1520 = vmatprep.mubr.f32.mxu0 0.0
      %1521 = vmatmul.mubr.f32.gmra.mrb[0].mxu0 %v1433
      %v1522 = vpop.f32.mrb[0].mxu0
      %v1523 = vadd.f32 %v1430, %v1522
      %v1524 = vpop.f32.mrb[0].mxu0
      %1525 = vmatprep.mubr.f32.mxu0 0.0
      %1526 = vmatmul.mubr.f32.gmra.mrb[0].mxu0 %v1436
      %v1527 = vpop.f32.mrb[0].mxu0
      %v1528 = vadd.f32 %v1430, %v1527
      %v1529 = vpop.f32.mrb[0].mxu0
      %1530 = vmatprep.mubr.f32.mxu0 0.0
      %1531 = vmatmul.mubr.f32.gmra.mrb[0].mxu0 %v1439
      %v1532 = vpop.f32.mrb[0].mxu0
      %v1533 = vadd.f32 %v1430, %v1532
      %v1534 = vpop.f32.mrb[0].mxu0
      %1535 = vmatprep.mubr.f32.mxu0 0.0
      %1536 = vmatmul.mubr.f32.gmra.mrb[0].mxu0 %v1442
      %v1537 = vpop.f32.mrb[0].mxu0
      %v1538 = vadd.f32 %v1430, %v1537
      %v1539 = vpop.f32.mrb[0].mxu0
      %1540 = vmatprep.mubr.f32.mxu0 0.0
      %1541 = vmatmul.mubr.f32.gmra.mrb[0].mxu0 %v1445
      %v1542 = vpop.f32.mrb[0].mxu0
      %v1543 = vadd.f32 %v1430, %v1542
      %v1544 = vpop.f32.mrb[0].mxu0
      %1545 = vmatprep.mubr.f32.mxu0 0.0
      %1546 = vmatmul.mubr.f32.gmra.mrb[0].mxu0 %v1448
      %v1547 = vpop.f32.mrb[0].mxu0
      %v1548 = vadd.f32 %v1430, %v1547
      %v1549 = vpop.f32.mrb[0].mxu0
      %1550 = vmatprep.mubr.f32.mxu0 0.0
      %1551 = vmatmul.mubr.f32.gmra.mrb[0].mxu0 %v1451
      %v1552 = vpop.f32.mrb[0].mxu0
      %v1553 = vadd.f32 %v1430, %v1552
      %v1554 = vpop.f32.mrb[0].mxu0
      %1555 = vmatprep.mubr.f32.mxu0 0.0
      %1556 = vmatmul.mubr.f32.gmra.mrb[0].mxu0 %v1454
      %v1557 = vpop.f32.mrb[0].mxu0
      %v1558 = vadd.f32 %v1430, %v1557
      %v1559 = vpop.f32.mrb[0].mxu0
      %1560 = vdwg.mxu0
      %v1561 = vld [vmem:[%s583] sm:$0x1]
      %v1562 = vld [vmem:[%s579] sm:$0xff]
      %v1563 = vld [vmem:[%s579 + $0x8] sm:$0xff]
      %v1564 = vld [vmem:[%s579 + $0x10] sm:$0xff]
      %v1565 = vld [vmem:[%s579 + $0x18] sm:$0xff]
      %v1566 = vld [vmem:[%s579 + $0x20] sm:$0xff]
      %v1567 = vld [vmem:[%s579 + $0x28] sm:$0xff]
      %v1568 = vld [vmem:[%s579 + $0x30] sm:$0xff]
      %v1569 = vld [vmem:[%s579 + $0x38] sm:$0xff]
      %v1571 = vlaneseq
      %v1572 = vshrl.u32 %v1571, 7
      %v1573 = vsub.s32 0, %v1572
      %v1574 = vrot.slane %v1561, %v1573
      %1575 = vset.pattern.permute.xlu0 0
      %1576 = vperm.xlu0 %1575, %v1574
      %v1577 = vpop.permute.xlu0 %1576
      %v1579 = vmul.f32 %v1562, %v1577
      %v1580 = vmul.f32 %v1563, %v1577
      %v1581 = vmul.f32 %v1564, %v1577
      %v1582 = vmul.f32 %v1565, %v1577
      %v1583 = vmul.f32 %v1566, %v1577
      %v1584 = vmul.f32 %v1567, %v1577
      %v1585 = vmul.f32 %v1568, %v1577
      %v1586 = vmul.f32 %v1569, %v1577
      %1587 = vset.pattern.permute.xlu0 1
      %1588 = vperm.xlu0 %1587, %v1574
      %v1589 = vpop.permute.xlu0 %1588
      %v1591 = vadd.f32 %v1579, %v1589
      %v1592 = vadd.f32 %v1580, %v1589
      %v1593 = vadd.f32 %v1581, %v1589
      %v1594 = vadd.f32 %v1582, %v1589
      %v1595 = vadd.f32 %v1583, %v1589
      %v1596 = vadd.f32 %v1584, %v1589
      %v1597 = vadd.f32 %v1585, %v1589
      %v1598 = vadd.f32 %v1586, %v1589
      %v1599 = vadd.f32 %v1523, %v1591
      %v1600 = vadd.f32 %v1528, %v1592
      %v1601 = vadd.f32 %v1533, %v1593
      %v1602 = vadd.f32 %v1538, %v1594
      %v1603 = vadd.f32 %v1543, %v1595
      %v1604 = vadd.f32 %v1548, %v1596
      %v1605 = vadd.f32 %v1553, %v1597
      %v1606 = vadd.f32 %v1558, %v1598
      %vm1607 = vcmask 261120
      %1608 = vst.msk [vmem:[%s592] sm:$0xff] %vm1607, %v1599
      %1609 = vst.msk [vmem:[%s592 + $0x8] sm:$0xff] %vm1607, %v1600
      %1610 = vst.msk [vmem:[%s592 + $0x10] sm:$0xff] %vm1607, %v1601
      %1611 = vst.msk [vmem:[%s592 + $0x18] sm:$0xff] %vm1607, %v1602
      %1612 = vst.msk [vmem:[%s592 + $0x20] sm:$0xff] %vm1607, %v1603
      %1613 = vst.msk [vmem:[%s592 + $0x28] sm:$0xff] %vm1607, %v1604
      %1614 = vst.msk [vmem:[%s592 + $0x30] sm:$0xff] %vm1607, %v1605
      %1615 = vst.msk [vmem:[%s592 + $0x38] sm:$0xff] %vm1607, %v1606
      %s1616 = smul.u32 8, %s27
      %p1617 = scmp.lt.s32.totalorder %s26, 1
      %s1618 = scalar_select %p1617, %s26, 1
      %p1619 = scmp.lt.s32.totalorder %s1616, 7
      %s1620 = scalar_select %p1619, %s1616, 7
      %s1621 = smul.addr %s1618, 8
      %s1622 = sadd.s32 %s1620, %s1621
      %s1623 = smul.addr %s1622, 8
      %s1624 = scalar_lea.vmem %s11, %s1623
      // Predicated region
      $region65: #{_lambda_.11} parent=63 // pred_check
        %p1625 = pneg %p334
      $region66: #{_lambda_.11} parent=63 // pred_check_branch
        %1627 = sbr.rel (%p1625) target = $region68
      $region67: #{_lambda_.11} parent=63 // pred_region
        %s1628 = smul.u32 8, %s27
      $region68: #{_lambda_.11} parent=63 // pred_fallthru
        _
    $region64: #{_lambda_.11} parent=5 // pred_fallthru
      _
    %p1629 = scmp.le.s32.totalorder 2, %s17
    // Predicated region
    $region69: #{_lambda_.11} parent=5 // pred_check
      %p1630 = pneg %p1629
    $region70: #{_lambda_.11} parent=5 // pred_check_branch
      %1632 = sbr.rel (%p1630) target = $region72
    $region71: #{_lambda_.11} parent=5 // pred_region
      %s1633 = ssub.s32 %s17, 2
      // Predicated region
      $region73: #{_lambda_.11} parent=71 // pred_check
        %p1634 = pneg %p340
      $region74: #{_lambda_.11} parent=71 // pred_check_branch
        %1636 = sbr.rel (%p1634) target = $region76
      $region75: #{_lambda_.11} parent=71 // pred_region
        %s1637 = smul.u32 8, %s29
        %p1638 = scmp.lt.s32.totalorder %s28, 1
        %s1639 = scalar_select %p1638, %s28, 1
        %p1640 = scmp.lt.s32.totalorder %s1637, 7
        %s1641 = scalar_select %p1640, %s1637, 7
        %s1642 = smul.addr %s1639, 8
        %s1643 = sadd.s32 %s1641, %s1642
        %s1644 = smul.addr %s1643, 8
        %s1645 = scalar_lea.vmem %s11, %s1644
      $region76: #{_lambda_.11} parent=71 // pred_fallthru
        _
    $region72: #{_lambda_.11} parent=5 // pred_fallthru
      _
  $region6: #{_lambda_.11} parent=0 // loop_footer
    %s21 = sadd.s32 1, %s17
  $region7: #{_lambda_.11} parent=0 // loop_footer_branch
    %16 = sbr.rel target = $region3
  $region8: #{_lambda_.11} parent=0 // loop_exit
    _

// kernel: _lambda_.13
$region0: #{_lambda_.13}
  #allocation0 [shape = 'u32[]', space=smem, size = 0x4, offset = 0x4, fixed_abs, tag = 'smem constant byte address 0x4 - core index']
  #allocation1 [shape = 'u32[144,128]{1,0:T(1,128)}', space=vmem, size = 0x12000, scoped, tag = 'internal scratch']
  %s0 = inlined_call_operand.vmem [shape: f32[2,8,128], index: 0, kind: input, shape index: {}]
  %s1 = inlined_call_operand.vmem [shape: f32[2,1,128], index: 1, kind: output, shape index: {}]
  %s2 = sld [smem:[#allocation0]]
  $region37: #{_lambda_.13} parent=0
    _
  %s4 = ssub.s32 1, %s2
  %s5 = scalar_select 0, %s4, %s2
  loop: start=0, step=1, limit=4
  $region2: #{_lambda_.13} parent=0 // loop_pre_header
    _
  $region3: #{_lambda_.13} parent=0 // loop_header
    %s7 = sphi 0, %s11
    %p8 = scmp.ge.s32.totalorder %s7, 4
    %s17 = sphi 0, %s19
    %s20 = sphi 0, %s17
    %s21 = sphi 0, %s20
    %s37 = sphi 0, %s21
    %s43 = sphi 0, %s45
    %s46 = sphi 0, %s43
    %s47 = sphi 0, %s46
    %s63 = sphi 0, %s47
  $region4: #{_lambda_.13} parent=0 // loop_header_branch
    %10 = sbr.rel (%p8) target = $region8
  $region5: #{_lambda_.13} parent=0 // loop_body
    %s12 = ssub.s32 %s7, 1
    %s13 = ssub.s32 %s7, 2
    %s14 = sadd.s32 %s7, 1
    %s15 = ssub.s32 %s7, %s14
    %p16 = scmp.eq.s32.totalorder %s15, 0
    %s18 = sadd.s32 %s17, 1
    %s19 = scalar_select %p16, %s17, %s18
    %p22 = pneg %p16
    %p23 = scmp.eq.s32.totalorder %s7, 1
    %p24 = por %p22, %p23
    %p25 = scmp.ne.s32.totalorder %s17, %s20
    %p26 = scmp.eq.s32.totalorder %s7, 0
    %p27 = por %p25, %p26
    %p28 = scmp.ne.s32.totalorder %s17, %s20
    %p29 = scmp.eq.s32.totalorder %s12, 1
    %p30 = por %p28, %p29
    %p31 = scmp.ne.s32.totalorder %s20, %s21
    %p32 = scmp.eq.s32.totalorder %s12, 0
    %p33 = por %p31, %p32
    %p34 = scmp.ne.s32.totalorder %s20, %s21
    %p35 = scmp.eq.s32.totalorder %s13, 1
    %p36 = por %p34, %p35
    %p38 = scmp.ne.s32.totalorder %s21, %s37
    %p39 = scmp.eq.s32.totalorder %s13, 0
    %p40 = por %p38, %p39
    %s41 = ssub.s32 %s7, %s14
    %p42 = scmp.eq.s32.totalorder %s41, 0
    %s44 = sadd.s32 %s43, 1
    %s45 = scalar_select %p42, %s43, %s44
    %p48 = pneg %p42
    %p49 = scmp.eq.s32.totalorder %s7, 1
    %p50 = por %p48, %p49
    %p51 = scmp.ne.s32.totalorder %s43, %s46
    %p52 = scmp.eq.s32.totalorder %s7, 0
    %p53 = por %p51, %p52
    %p54 = scmp.ne.s32.totalorder %s43, %s46
    %p55 = scmp.eq.s32.totalorder %s12, 1
    %p56 = por %p54, %p55
    %p57 = scmp.ne.s32.totalorder %s46, %s47
    %p58 = scmp.eq.s32.totalorder %s12, 0
    %p59 = por %p57, %p58
    %p60 = scmp.ne.s32.totalorder %s46, %s47
    %p61 = scmp.eq.s32.totalorder %s13, 1
    %p62 = por %p60, %p61
    %p64 = scmp.ne.s32.totalorder %s47, %s63
    %p65 = scmp.eq.s32.totalorder %s13, 0
    %p66 = por %p64, %p65
    %p67 = scmp.le.s32.totalorder 1, %s7
    %p68 = scmp.lt.s32.totalorder %s7, 3
    %p69 = pnand %p67, %p68
    %p70 = pneg %p69
    // Predicated region
    $region9: #{_lambda_.13} parent=5 // pred_check
      _
    $region10: #{_lambda_.13} parent=5 // pred_check_branch
      %72 = sbr.rel (%p69) target = $region12
    $region11: #{_lambda_.13} parent=5 // pred_region
      %s73 = ssub.s32 %s7, 1
    $region12: #{_lambda_.13} parent=5 // pred_fallthru
      _
    %p74 = scmp.lt.s32.totalorder %s7, 2
    // Predicated region
    $region13: #{_lambda_.13} parent=5 // pred_check
      %p75 = pneg %p74
    $region14: #{_lambda_.13} parent=5 // pred_check_branch
      %77 = sbr.rel (%p75) target = $region16
    $region15: #{_lambda_.13} parent=5 // pred_region
      // Predicated region
      $region17: #{_lambda_.13} parent=15 // pred_check
        %p78 = pneg %p27
      $region18: #{_lambda_.13} parent=15 // pred_check_branch
        %80 = sbr.rel (%p78) target = $region20
      $region19: #{_lambda_.13} parent=15 // pred_region
        %p81 = scmp.lt.s32.totalorder %s7, 1
        %s82 = scalar_select %p81, %s7, 1
        %s83 = smul.addr %s82, 8
        %s84 = scalar_lea.vmem %s0, %s83
      $region20: #{_lambda_.13} parent=15 // pred_fallthru
        _
    $region16: #{_lambda_.13} parent=5 // pred_fallthru
      _
    %p85 = scmp.le.s32.totalorder 1, %s7
    %p86 = scmp.lt.s32.totalorder %s7, 3
    %p87 = pnand %p85, %p86
    %p88 = pneg %p87
    // Predicated region
    $region21: #{_lambda_.13} parent=5 // pred_check
      _
    $region22: #{_lambda_.13} parent=5 // pred_check_branch
      %90 = sbr.rel (%p87) target = $region24
    $region23: #{_lambda_.13} parent=5 // pred_region
      %s91 = ssub.s32 %s7, 1
      %p92 = scmp.lt.s32.totalorder %s12, 1
      %s93 = scalar_select %p92, %s12, 1
      %s94 = smul.addr %s93, 8
      %s95 = scalar_lea.vmem %s0, %s94
      %p96 = pneg %p33
      %p97 = pneg %p30
      %p98 = pneg %p59
      %p99 = pneg %p56
      %p100 = scmp.lt.s32.totalorder %s12, 1
      %s101 = scalar_select %p100, %s12, 1
      %s102 = scalar_lea.vmem %s1, %s101
      %p103 = scmp.lt.s32.totalorder %s12, 1
      %s104 = scalar_select %p103, %s12, 1
      %s105 = smul.addr %s104, 8
      %s106 = scalar_lea.vmem %s0, %s105
      %p107 = scmp.lt.s32.totalorder %s12, 1
      %s108 = scalar_select %p107, %s12, 1
      %s109 = scalar_lea.vmem %s1, %s108
      %v110 = vld [vmem:[%s106] sm:$0xff]
      %111 = vadd.xlane.f32.xlu0 %v110
      %v112 = vpop.xlane.xlu0 %111
      %v113 = vrot.slane %v112, 4
      %v114 = vadd.f32 %v112, %v113
      %v115 = vrot.slane %v114, 2
      %v116 = vadd.f32 %v114, %v115
      %v117 = vrot.slane %v116, 1
      %v118 = vadd.f32 %v116, %v117
      %s119 = vtos %v118
      %s120 = smul.f32 %s119, 0.0009765625
      %v121 = vmul.f32 %v110, %v110
      %122 = vadd.xlane.f32.xlu0 %v121
      %v123 = vpop.xlane.xlu0 %122
      %v124 = vrot.slane %v123, 4
      %v125 = vadd.f32 %v123, %v124
      %v126 = vrot.slane %v125, 2
      %v127 = vadd.f32 %v125, %v126
      %v128 = vrot.slane %v127, 1
      %v129 = vadd.f32 %v127, %v128
      %s130 = vtos %v129
      %s131 = smul.f32 %s130, 0.0009765625
      %s132 = smul.f32 %s120, %s120
      %s133 = ssub.f32 %s131, %s132
      %s134 = sadd.f32 %s133, 1e-05
      %v135 = vstv %s134
      %v136 = vrsqrt.pop %v135
      %s137 = vtos %v136
      %v138 = vlaneseq
      %v139 = vand.u32 %v138, 127
      %vm140 = vcmp.eq.s32.totalorder %v139, 0
      %vm141 = vcmp.eq.s32.totalorder %v139, 1
      %s142 = ssub.f32 0.0, %s120
      %s143 = smul.f32 %s142, %s137
      %v144 = vstv %s143
      %v145 = vsel %vm141, %v144, 0.0
      %v146 = vstv %s137
      %v147 = vsel %vm140, %v146, %v145
      %148 = vst [vmem:[%s109] sm:$0x1] %v147
      %p149 = scmp.lt.s32.totalorder %s12, 1
      %s150 = scalar_select %p149, %s12, 1
      %s151 = scalar_lea.vmem %s1, %s150
      // Predicated region
      $region25: #{_lambda_.13} parent=23 // pred_check
        %p152 = pneg %p56
      $region26: #{_lambda_.13} parent=23 // pred_check_branch
        %154 = sbr.rel (%p152) target = $region28
      $region27: #{_lambda_.13} parent=23 // pred_region
        _
      $region28: #{_lambda_.13} parent=23 // pred_fallthru
        _
    $region24: #{_lambda_.13} parent=5 // pred_fallthru
      _
    %p155 = scmp.le.s32.totalorder 2, %s7
    // Predicated region
    $region29: #{_lambda_.13} parent=5 // pred_check
      %p156 = pneg %p155
    $region30: #{_lambda_.13} parent=5 // pred_check_branch
      %158 = sbr.rel (%p156) target = $region32
    $region31: #{_lambda_.13} parent=5 // pred_region
      %s159 = ssub.s32 %s7, 2
      // Predicated region
      $region33: #{_lambda_.13} parent=31 // pred_check
        %p160 = pneg %p62
      $region34: #{_lambda_.13} parent=31 // pred_check_branch
        %162 = sbr.rel (%p160) target = $region36
      $region35: #{_lambda_.13} parent=31 // pred_region
        %p163 = scmp.lt.s32.totalorder %s13, 1
        %s164 = scalar_select %p163, %s13, 1
        %s165 = scalar_lea.vmem %s1, %s164
      $region36: #{_lambda_.13} parent=31 // pred_fallthru
        _
    $region32: #{_lambda_.13} parent=5 // pred_fallthru
      _
  $region6: #{_lambda_.13} parent=0 // loop_footer
    %s11 = sadd.s32 1, %s7
  $region7: #{_lambda_.13} parent=0 // loop_footer_branch
    %6 = sbr.rel target = $region3
  $region8: #{_lambda_.13} parent=0 // loop_exit
    _

// kernel: _lambda_.12
$region0: #{_lambda_.12}
  #allocation0 [shape = 'u32[]', space=smem, size = 0x4, offset = 0x4, fixed_abs, tag = 'smem constant byte address 0x4 - core index']
  #allocation1 [shape = 'u32[144,128]{1,0:T(1,128)}', space=vmem, size = 0x12000, scoped, tag = 'internal scratch']
  %s0 = inlined_call_operand.vmem [shape: f32[8,512], index: 0, kind: input, shape index: {}]
  %s1 = inlined_call_operand.vmem [shape: f32[512,256], index: 1, kind: input, shape index: {}]
  %s2 = inlined_call_operand.vmem [shape: f32[1,256], index: 2, kind: input, shape index: {}]
  %s3 = inlined_call_operand.vmem [shape: f32[8,256], index: 3, kind: output, shape index: {}]
  %s4 = sld [smem:[#allocation0]]
  $region22: #{_lambda_.12} parent=0
    _
  %s6 = ssub.s32 1, %s4
  %s7 = scalar_select 0, %s6, %s4
  // Predicated region
  $region2: #{_lambda_.12} parent=0 // pred_check
    _
  $region3: #{_lambda_.12} parent=0 // pred_check_branch
    %9 = sbr.rel (0) target = $region5
  $region4: #{_lambda_.12} parent=0 // pred_region
    _
  $region5: #{_lambda_.12} parent=0 // pred_fallthru
    _
  // Predicated region
  $region6: #{_lambda_.12} parent=0 // pred_check
    _
  $region7: #{_lambda_.12} parent=0 // pred_check_branch
    %11 = sbr.rel (0) target = $region9
  $region8: #{_lambda_.12} parent=0 // pred_region
    _
  $region9: #{_lambda_.12} parent=0 // pred_fallthru
    _
  // Predicated region
  $region10: #{_lambda_.12} parent=0 // pred_check
    _
  $region11: #{_lambda_.12} parent=0 // pred_check_branch
    %13 = sbr.rel (0) target = $region13
  $region12: #{_lambda_.12} parent=0 // pred_region
    _
  $region13: #{_lambda_.12} parent=0 // pred_fallthru
    _
  %v14 = vld [vmem:[%s0] sm:$0xff]
  %v15 = vld [vmem:[%s0 + $0x8] sm:$0xff]
  %v16 = vld [vmem:[%s0 + $0x10] sm:$0xff]
  %v17 = vld [vmem:[%s0 + $0x18] sm:$0xff]
  %v18 = vld [vmem:[%s1] sm:$0xff]
  %v19 = vld [vmem:[%s1 + $0x8] sm:$0xff]
  %v20 = vld [vmem:[%s1 + $0x10] sm:$0xff]
  %v21 = vld [vmem:[%s1 + $0x18] sm:$0xff]
  %v22 = vld [vmem:[%s1 + $0x20] sm:$0xff]
  %v23 = vld [vmem:[%s1 + $0x28] sm:$0xff]
  %v24 = vld [vmem:[%s1 + $0x30] sm:$0xff]
  %v25 = vld [vmem:[%s1 + $0x38] sm:$0xff]
  %v26 = vld [vmem:[%s1 + $0x40] sm:$0xff]
  %v27 = vld [vmem:[%s1 + $0x48] sm:$0xff]
  %v28 = vld [vmem:[%s1 + $0x50] sm:$0xff]
  %v29 = vld [vmem:[%s1 + $0x58] sm:$0xff]
  %v30 = vld [vmem:[%s1 + $0x60] sm:$0xff]
  %v31 = vld [vmem:[%s1 + $0x68] sm:$0xff]
  %v32 = vld [vmem:[%s1 + $0x70] sm:$0xff]
  %v33 = vld [vmem:[%s1 + $0x78] sm:$0xff]
  %v34 = vld [vmem:[%s1 + $0x80] sm:$0xff]
  %v35 = vld [vmem:[%s1 + $0x88] sm:$0xff]
  %v36 = vld [vmem:[%s1 + $0x90] sm:$0xff]
  %v37 = vld [vmem:[%s1 + $0x98] sm:$0xff]
  %v38 = vld [vmem:[%s1 + $0xa0] sm:$0xff]
  %v39 = vld [vmem:[%s1 + $0xa8] sm:$0xff]
  %v40 = vld [vmem:[%s1 + $0xb0] sm:$0xff]
  %v41 = vld [vmem:[%s1 + $0xb8] sm:$0xff]
  %v42 = vld [vmem:[%s1 + $0xc0] sm:$0xff]
  %v43 = vld [vmem:[%s1 + $0xc8] sm:$0xff]
  %v44 = vld [vmem:[%s1 + $0xd0] sm:$0xff]
  %v45 = vld [vmem:[%s1 + $0xd8] sm:$0xff]
  %v46 = vld [vmem:[%s1 + $0xe0] sm:$0xff]
  %v47 = vld [vmem:[%s1 + $0xe8] sm:$0xff]
  %v48 = vld [vmem:[%s1 + $0xf0] sm:$0xff]
  %v49 = vld [vmem:[%s1 + $0xf8] sm:$0xff]
  %v50 = vld [vmem:[%s1 + $0x100] sm:$0xff]
  %v51 = vld [vmem:[%s1 + $0x108] sm:$0xff]
  %v52 = vld [vmem:[%s1 + $0x110] sm:$0xff]
  %v53 = vld [vmem:[%s1 + $0x118] sm:$0xff]
  %v54 = vld [vmem:[%s1 + $0x120] sm:$0xff]
  %v55 = vld [vmem:[%s1 + $0x128] sm:$0xff]
  %v56 = vld [vmem:[%s1 + $0x130] sm:$0xff]
  %v57 = vld [vmem:[%s1 + $0x138] sm:$0xff]
  %v58 = vld [vmem:[%s1 + $0x140] sm:$0xff]
  %v59 = vld [vmem:[%s1 + $0x148] sm:$0xff]
  %v60 = vld [vmem:[%s1 + $0x150] sm:$0xff]
  %v61 = vld [vmem:[%s1 + $0x158] sm:$0xff]
  %v62 = vld [vmem:[%s1 + $0x160] sm:$0xff]
  %v63 = vld [vmem:[%s1 + $0x168] sm:$0xff]
  %v64 = vld [vmem:[%s1 + $0x170] sm:$0xff]
  %v65 = vld [vmem:[%s1 + $0x178] sm:$0xff]
  %v66 = vld [vmem:[%s1 + $0x180] sm:$0xff]
  %v67 = vld [vmem:[%s1 + $0x188] sm:$0xff]
  %v68 = vld [vmem:[%s1 + $0x190] sm:$0xff]
  %v69 = vld [vmem:[%s1 + $0x198] sm:$0xff]
  %v70 = vld [vmem:[%s1 + $0x1a0] sm:$0xff]
  %v71 = vld [vmem:[%s1 + $0x1a8] sm:$0xff]
  %v72 = vld [vmem:[%s1 + $0x1b0] sm:$0xff]
  %v73 = vld [vmem:[%s1 + $0x1b8] sm:$0xff]
  %v74 = vld [vmem:[%s1 + $0x1c0] sm:$0xff]
  %v75 = vld [vmem:[%s1 + $0x1c8] sm:$0xff]
  %v76 = vld [vmem:[%s1 + $0x1d0] sm:$0xff]
  %v77 = vld [vmem:[%s1 + $0x1d8] sm:$0xff]
  %v78 = vld [vmem:[%s1 + $0x1e0] sm:$0xff]
  %v79 = vld [vmem:[%s1 + $0x1e8] sm:$0xff]
  %v80 = vld [vmem:[%s1 + $0x1f0] sm:$0xff]
  %v81 = vld [vmem:[%s1 + $0x1f8] sm:$0xff]
  %v82 = vld [vmem:[%s1 + $0x200] sm:$0xff]
  %v83 = vld [vmem:[%s1 + $0x208] sm:$0xff]
  %v84 = vld [vmem:[%s1 + $0x210] sm:$0xff]
  %v85 = vld [vmem:[%s1 + $0x218] sm:$0xff]
  %v86 = vld [vmem:[%s1 + $0x220] sm:$0xff]
  %v87 = vld [vmem:[%s1 + $0x228] sm:$0xff]
  %v88 = vld [vmem:[%s1 + $0x230] sm:$0xff]
  %v89 = vld [vmem:[%s1 + $0x238] sm:$0xff]
  %v90 = vld [vmem:[%s1 + $0x240] sm:$0xff]
  %v91 = vld [vmem:[%s1 + $0x248] sm:$0xff]
  %v92 = vld [vmem:[%s1 + $0x250] sm:$0xff]
  %v93 = vld [vmem:[%s1 + $0x258] sm:$0xff]
  %v94 = vld [vmem:[%s1 + $0x260] sm:$0xff]
  %v95 = vld [vmem:[%s1 + $0x268] sm:$0xff]
  %v96 = vld [vmem:[%s1 + $0x270] sm:$0xff]
  %v97 = vld [vmem:[%s1 + $0x278] sm:$0xff]
  %v98 = vld [vmem:[%s1 + $0x280] sm:$0xff]
  %v99 = vld [vmem:[%s1 + $0x288] sm:$0xff]
  %v100 = vld [vmem:[%s1 + $0x290] sm:$0xff]
  %v101 = vld [vmem:[%s1 + $0x298] sm:$0xff]
  %v102 = vld [vmem:[%s1 + $0x2a0] sm:$0xff]
  %v103 = vld [vmem:[%s1 + $0x2a8] sm:$0xff]
  %v104 = vld [vmem:[%s1 + $0x2b0] sm:$0xff]
  %v105 = vld [vmem:[%s1 + $0x2b8] sm:$0xff]
  %v106 = vld [vmem:[%s1 + $0x2c0] sm:$0xff]
  %v107 = vld [vmem:[%s1 + $0x2c8] sm:$0xff]
  %v108 = vld [vmem:[%s1 + $0x2d0] sm:$0xff]
  %v109 = vld [vmem:[%s1 + $0x2d8] sm:$0xff]
  %v110 = vld [vmem:[%s1 + $0x2e0] sm:$0xff]
  %v111 = vld [vmem:[%s1 + $0x2e8] sm:$0xff]
  %v112 = vld [vmem:[%s1 + $0x2f0] sm:$0xff]
  %v113 = vld [vmem:[%s1 + $0x2f8] sm:$0xff]
  %v114 = vld [vmem:[%s1 + $0x300] sm:$0xff]
  %v115 = vld [vmem:[%s1 + $0x308] sm:$0xff]
  %v116 = vld [vmem:[%s1 + $0x310] sm:$0xff]
  %v117 = vld [vmem:[%s1 + $0x318] sm:$0xff]
  %v118 = vld [vmem:[%s1 + $0x320] sm:$0xff]
  %v119 = vld [vmem:[%s1 + $0x328] sm:$0xff]
  %v120 = vld [vmem:[%s1 + $0x330] sm:$0xff]
  %v121 = vld [vmem:[%s1 + $0x338] sm:$0xff]
  %v122 = vld [vmem:[%s1 + $0x340] sm:$0xff]
  %v123 = vld [vmem:[%s1 + $0x348] sm:$0xff]
  %v124 = vld [vmem:[%s1 + $0x350] sm:$0xff]
  %v125 = vld [vmem:[%s1 + $0x358] sm:$0xff]
  %v126 = vld [vmem:[%s1 + $0x360] sm:$0xff]
  %v127 = vld [vmem:[%s1 + $0x368] sm:$0xff]
  %v128 = vld [vmem:[%s1 + $0x370] sm:$0xff]
  %v129 = vld [vmem:[%s1 + $0x378] sm:$0xff]
  %v130 = vld [vmem:[%s1 + $0x380] sm:$0xff]
  %v131 = vld [vmem:[%s1 + $0x388] sm:$0xff]
  %v132 = vld [vmem:[%s1 + $0x390] sm:$0xff]
  %v133 = vld [vmem:[%s1 + $0x398] sm:$0xff]
  %v134 = vld [vmem:[%s1 + $0x3a0] sm:$0xff]
  %v135 = vld [vmem:[%s1 + $0x3a8] sm:$0xff]
  %v136 = vld [vmem:[%s1 + $0x3b0] sm:$0xff]
  %v137 = vld [vmem:[%s1 + $0x3b8] sm:$0xff]
  %v138 = vld [vmem:[%s1 + $0x3c0] sm:$0xff]
  %v139 = vld [vmem:[%s1 + $0x3c8] sm:$0xff]
  %v140 = vld [vmem:[%s1 + $0x3d0] sm:$0xff]
  %v141 = vld [vmem:[%s1 + $0x3d8] sm:$0xff]
  %v142 = vld [vmem:[%s1 + $0x3e0] sm:$0xff]
  %v143 = vld [vmem:[%s1 + $0x3e8] sm:$0xff]
  %v144 = vld [vmem:[%s1 + $0x3f0] sm:$0xff]
  %v145 = vld [vmem:[%s1 + $0x3f8] sm:$0xff]
  %v146 = vld [vmem:[%s2] sm:$0x3]
  %v148 = vlaneseq
  %v149 = vshrl.u32 %v148, 7
  %v150 = vsub.s32 0, %v149
  %v151 = vrot.slane %v146, %v150
  %v152 = vlaneseq
  %v153 = vshrl.u32 %v152, 7
  %v154 = vsub.s32 1, %v153
  %v155 = vrot.slane %v146, %v154
  %158 = vmatprep.subr.mxu0 %v19
  %159 = vmatpush1.msra.mxu0 %v18
  %160 = vmatprep.subr.mxu0 %v21
  %161 = vmatpush1.msra.mxu0 %v20
  %162 = vmatprep.subr.mxu0 %v23
  %163 = vmatpush1.msra.mxu0 %v22
  %164 = vmatprep.subr.mxu0 %v25
  %165 = vmatpush1.msra.mxu0 %v24
  %166 = vmatprep.subr.mxu0 %v27
  %167 = vmatpush1.msra.mxu0 %v26
  %168 = vmatprep.subr.mxu0 %v29
  %169 = vmatpush1.msra.mxu0 %v28
  %170 = vmatprep.subr.mxu0 %v31
  %171 = vmatpush1.msra.mxu0 %v30
  %172 = vmatprep.subr.mxu0 %v33
  %173 = vmatpush1.msra.mxu0 %v32
  %174 = vmatprep.subr.mxu0 %v35
  %175 = vmatpush1.msra.mxu0 %v34
  %176 = vmatprep.subr.mxu0 %v37
  %177 = vmatpush1.msra.mxu0 %v36
  %178 = vmatprep.subr.mxu0 %v39
  %179 = vmatpush1.msra.mxu0 %v38
  %180 = vmatprep.subr.mxu0 %v41
  %181 = vmatpush1.msra.mxu0 %v40
  %182 = vmatprep.subr.mxu0 %v43
  %183 = vmatpush1.msra.mxu0 %v42
  %184 = vmatprep.subr.mxu0 %v45
  %185 = vmatpush1.msra.mxu0 %v44
  %186 = vmatprep.subr.mxu0 %v47
  %187 = vmatpush1.msra.mxu0 %v46
  %188 = vmatprep.subr.mxu0 %v49
  %189 = vmatpush1.msra.mxu0 %v48
  %190 = vmatprep.subr.mxu0 %v51
  %191 = vmatpush1.msra.mxu0 %v50
  %192 = vmatprep.subr.mxu0 %v53
  %193 = vmatpush1.msra.mxu0 %v52
  %194 = vmatprep.subr.mxu0 %v55
  %195 = vmatpush1.msra.mxu0 %v54
  %196 = vmatprep.subr.mxu0 %v57
  %197 = vmatpush1.msra.mxu0 %v56
  %198 = vmatprep.subr.mxu0 %v59
  %199 = vmatpush1.msra.mxu0 %v58
  %200 = vmatprep.subr.mxu0 %v61
  %201 = vmatpush1.msra.mxu0 %v60
  %202 = vmatprep.subr.mxu0 %v63
  %203 = vmatpush1.msra.mxu0 %v62
  %204 = vmatprep.subr.mxu0 %v65
  %205 = vmatpush1.msra.mxu0 %v64
  %206 = vmatprep.subr.mxu0 %v67
  %207 = vmatpush1.msra.mxu0 %v66
  %208 = vmatprep.subr.mxu0 %v69
  %209 = vmatpush1.msra.mxu0 %v68
  %210 = vmatprep.subr.mxu0 %v71
  %211 = vmatpush1.msra.mxu0 %v70
  %212 = vmatprep.subr.mxu0 %v73
  %213 = vmatpush1.msra.mxu0 %v72
  %214 = vmatprep.subr.mxu0 %v75
  %215 = vmatpush1.msra.mxu0 %v74
  %216 = vmatprep.subr.mxu0 %v77
  %217 = vmatpush1.msra.mxu0 %v76
  %218 = vmatprep.subr.mxu0 %v79
  %219 = vmatpush1.msra.mxu0 %v78
  %220 = vmatprep.subr.mxu0 %v81
  %221 = vmatpush1.msra.mxu0 %v80
  %222 = vmatprep.mubr.f32.mxu0 %v15
  %223 = vmatmul.mubr.f32.gmra.mrb[0].mxu0 %v14
  %v224 = vpop.f32.mrb[0].mxu0
  %v225 = vadd.f32 %v151, %v224
  %v226 = vpop.f32.mrb[0].mxu0
  %v227 = vadd.f32 %v155, %v226
  %228 = vdwg.mxu0
  %229 = vmatprep.subr.mxu0 %v83
  %230 = vmatpush1.msra.mxu0 %v82
  %231 = vmatprep.subr.mxu0 %v85
  %232 = vmatpush1.msra.mxu0 %v84
  %233 = vmatprep.subr.mxu0 %v87
  %234 = vmatpush1.msra.mxu0 %v86
  %235 = vmatprep.subr.mxu0 %v89
  %236 = vmatpush1.msra.mxu0 %v88
  %237 = vmatprep.subr.mxu0 %v91
  %238 = vmatpush1.msra.mxu0 %v90
  %239 = vmatprep.subr.mxu0 %v93
  %240 = vmatpush1.msra.mxu0 %v92
  %241 = vmatprep.subr.mxu0 %v95
  %242 = vmatpush1.msra.mxu0 %v94
  %243 = vmatprep.subr.mxu0 %v97
  %244 = vmatpush1.msra.mxu0 %v96
  %245 = vmatprep.subr.mxu0 %v99
  %246 = vmatpush1.msra.mxu0 %v98
  %247 = vmatprep.subr.mxu0 %v101
  %248 = vmatpush1.msra.mxu0 %v100
  %249 = vmatprep.subr.mxu0 %v103
  %250 = vmatpush1.msra.mxu0 %v102
  %251 = vmatprep.subr.mxu0 %v105
  %252 = vmatpush1.msra.mxu0 %v104
  %253 = vmatprep.subr.mxu0 %v107
  %254 = vmatpush1.msra.mxu0 %v106
  %255 = vmatprep.subr.mxu0 %v109
  %256 = vmatpush1.msra.mxu0 %v108
  %257 = vmatprep.subr.mxu0 %v111
  %258 = vmatpush1.msra.mxu0 %v110
  %259 = vmatprep.subr.mxu0 %v113
  %260 = vmatpush1.msra.mxu0 %v112
  %261 = vmatprep.subr.mxu0 %v115
  %262 = vmatpush1.msra.mxu0 %v114
  %263 = vmatprep.subr.mxu0 %v117
  %264 = vmatpush1.msra.mxu0 %v116
  %265 = vmatprep.subr.mxu0 %v119
  %266 = vmatpush1.msra.mxu0 %v118
  %267 = vmatprep.subr.mxu0 %v121
  %268 = vmatpush1.msra.mxu0 %v120
  %269 = vmatprep.subr.mxu0 %v123
  %270 = vmatpush1.msra.mxu0 %v122
  %271 = vmatprep.subr.mxu0 %v125
  %272 = vmatpush1.msra.mxu0 %v124
  %273 = vmatprep.subr.mxu0 %v127
  %274 = vmatpush1.msra.mxu0 %v126
  %275 = vmatprep.subr.mxu0 %v129
  %276 = vmatpush1.msra.mxu0 %v128
  %277 = vmatprep.subr.mxu0 %v131
  %278 = vmatpush1.msra.mxu0 %v130
  %279 = vmatprep.subr.mxu0 %v133
  %280 = vmatpush1.msra.mxu0 %v132
  %281 = vmatprep.subr.mxu0 %v135
  %282 = vmatpush1.msra.mxu0 %v134
  %283 = vmatprep.subr.mxu0 %v137
  %284 = vmatpush1.msra.mxu0 %v136
  %285 = vmatprep.subr.mxu0 %v139
  %286 = vmatpush1.msra.mxu0 %v138
  %287 = vmatprep.subr.mxu0 %v141
  %288 = vmatpush1.msra.mxu0 %v140
  %289 = vmatprep.subr.mxu0 %v143
  %290 = vmatpush1.msra.mxu0 %v142
  %291 = vmatprep.subr.mxu0 %v145
  %292 = vmatpush1.msra.mxu0 %v144
  %293 = vmatprep.mubr.f32.mxu0 %v17
  %294 = vmatmul.mubr.f32.gmra.mrb[0].mxu0 %v16
  %v295 = vpop.f32.mrb[0].mxu0
  %v296 = vadd.f32 %v225, %v295
  %v297 = vpop.f32.mrb[0].mxu0
  %v298 = vadd.f32 %v227, %v297
  %299 = vdwg.mxu0
  %300 = vst [vmem:[%s3] sm:$0xff] %v296
  %301 = vst [vmem:[%s3 + $0x8] sm:$0xff] %v298
  // Predicated region
  $region14: #{_lambda_.12} parent=0 // pred_check
    _
  $region15: #{_lambda_.12} parent=0 // pred_check_branch
    %303 = sbr.rel (0) target = $region17
  $region16: #{_lambda_.12} parent=0 // pred_region
    _
  $region17: #{_lambda_.12} parent=0 // pred_fallthru
    _
  // Predicated region
  $region18: #{_lambda_.12} parent=0 // pred_check
    _
  $region19: #{_lambda_.12} parent=0 // pred_check_branch
    %305 = sbr.rel (0) target = $region21
  $region20: #{_lambda_.12} parent=0 // pred_region
    _
  $region21: #{_lambda_.12} parent=0 // pred_fallthru
    _

// kernel: _lambda_.14
$region0: #{_lambda_.14}
  #allocation0 [shape = 'u32[]', space=smem, size = 0x4, offset = 0x4, fixed_abs, tag = 'smem constant byte address 0x4 - core index']
  #allocation1 [shape = 'u32[144,128]{1,0:T(1,128)}', space=vmem, size = 0x12000, scoped, tag = 'internal scratch']
  %s0 = inlined_call_operand.vmem [shape: f32[2,8,128], index: 0, kind: input, shape index: {}]
  %s1 = inlined_call_operand.vmem [shape: f32[2,1,128], index: 1, kind: input, shape index: {}]
  %s2 = inlined_call_operand.vmem [shape: f32[128,256], index: 2, kind: input, shape index: {}]
  %s3 = inlined_call_operand.vmem [shape: f32[1,256], index: 3, kind: input, shape index: {}]
  %s4 = inlined_call_operand.vmem [shape: f32[2,8,256], index: 4, kind: output, shape index: {}]
  %s5 = sld [smem:[#allocation0]]
  $region49: #{_lambda_.14} parent=0
    _
  %s7 = ssub.s32 1, %s5
  %s8 = scalar_select 0, %s7, %s5
  loop: start=0, step=1, limit=4
  $region2: #{_lambda_.14} parent=0 // loop_pre_header
    _
  $region3: #{_lambda_.14} parent=0 // loop_header
    %s10 = sphi 0, %s14
    %p11 = scmp.ge.s32.totalorder %s10, 4
    %s17 = sphi 0, %s29
    %s18 = sphi 0, %s25
    %s19 = sphi 0, %s17
    %s20 = sphi 0, %s18
    %s21 = sphi 0, %s19
    %s22 = sphi 0, %s20
    %s34 = sphi 0, %s36
    %s37 = sphi 0, %s34
    %s38 = sphi 0, %s37
    %s54 = sphi 0, %s38
    %s60 = sphi 0, %s62
    %s63 = sphi 0, %s60
    %s64 = sphi 0, %s63
    %s80 = sphi 0, %s64
    %s84 = sphi 0, %s84
    %s86 = sphi 0, %s84
    %s87 = sphi 0, %s86
    %s101 = sphi 0, %s87
    %s105 = sphi 0, %s105
    %s107 = sphi 0, %s105
    %s108 = sphi 0, %s107
    %s122 = sphi 0, %s108
    %s130 = sphi 0, %s132
    %s133 = sphi 0, %s130
    %s134 = sphi 0, %s133
    %s150 = sphi 0, %s134
  $region4: #{_lambda_.14} parent=0 // loop_header_branch
    %13 = sbr.rel (%p11) target = $region8
  $region5: #{_lambda_.14} parent=0 // loop_body
    %s15 = ssub.s32 %s10, 1
    %s16 = ssub.s32 %s10, 2
    %s23 = sadd.s32 1, %s18
    %p24 = scmp.ge.s32.totalorder %s23, 1
    %s25 = scalar_select %p24, 0, %s23
    %s26 = sadd.s32 1, %s17
    %s27 = scalar_select %p24, %s26, %s17
    %p28 = scmp.ge.s32.totalorder %s27, 2
    %s29 = scalar_select %p28, 0, %s27
    %s30 = ssub.s32 %s17, %s29
    %s31 = ssub.s32 %s18, %s25
    %s32 = sor.u32 %s30, %s31
    %p33 = scmp.eq.s32.totalorder %s32, 0
    %s35 = sadd.s32 %s34, 1
    %s36 = scalar_select %p33, %s34, %s35
    %p39 = pneg %p33
    %p40 = scmp.eq.s32.totalorder %s10, 1
    %p41 = por %p39, %p40
    %p42 = scmp.ne.s32.totalorder %s34, %s37
    %p43 = scmp.eq.s32.totalorder %s10, 0
    %p44 = por %p42, %p43
    %p45 = scmp.ne.s32.totalorder %s34, %s37
    %p46 = scmp.eq.s32.totalorder %s15, 1
    %p47 = por %p45, %p46
    %p48 = scmp.ne.s32.totalorder %s37, %s38
    %p49 = scmp.eq.s32.totalorder %s15, 0
    %p50 = por %p48, %p49
    %p51 = scmp.ne.s32.totalorder %s37, %s38
    %p52 = scmp.eq.s32.totalorder %s16, 1
    %p53 = por %p51, %p52
    %p55 = scmp.ne.s32.totalorder %s38, %s54
    %p56 = scmp.eq.s32.totalorder %s16, 0
    %p57 = por %p55, %p56
    %s58 = ssub.s32 %s17, %s29
    %p59 = scmp.eq.s32.totalorder %s58, 0
    %s61 = sadd.s32 %s60, 1
    %s62 = scalar_select %p59, %s60, %s61
    %p65 = pneg %p59
    %p66 = scmp.eq.s32.totalorder %s10, 1
    %p67 = por %p65, %p66
    %p68 = scmp.ne.s32.totalorder %s60, %s63
    %p69 = scmp.eq.s32.totalorder %s10, 0
    %p70 = por %p68, %p69
    %p71 = scmp.ne.s32.totalorder %s60, %s63
    %p72 = scmp.eq.s32.totalorder %s15, 1
    %p73 = por %p71, %p72
    %p74 = scmp.ne.s32.totalorder %s63, %s64
    %p75 = scmp.eq.s32.totalorder %s15, 0
    %p76 = por %p74, %p75
    %p77 = scmp.ne.s32.totalorder %s63, %s64
    %p78 = scmp.eq.s32.totalorder %s16, 1
    %p79 = por %p77, %p78
    %p81 = scmp.ne.s32.totalorder %s64, %s80
    %p82 = scmp.eq.s32.totalorder %s16, 0
    %p83 = por %p81, %p82
    %s85 = sadd.s32 %s84, 1
    %p88 = scmp.eq.s32.totalorder %s10, 1
    %p89 = scmp.ne.s32.totalorder %s84, %s86
    %p90 = scmp.eq.s32.totalorder %s10, 0
    %p91 = por %p89, %p90
    %p92 = scmp.ne.s32.totalorder %s84, %s86
    %p93 = scmp.eq.s32.totalorder %s15, 1
    %p94 = por %p92, %p93
    %p95 = scmp.ne.s32.totalorder %s86, %s87
    %p96 = scmp.eq.s32.totalorder %s15, 0
    %p97 = por %p95, %p96
    %p98 = scmp.ne.s32.totalorder %s86, %s87
    %p99 = scmp.eq.s32.totalorder %s16, 1
    %p100 = por %p98, %p99
    %p102 = scmp.ne.s32.totalorder %s87, %s101
    %p103 = scmp.eq.s32.totalorder %s16, 0
    %p104 = por %p102, %p103
    %s106 = sadd.s32 %s105, 1
    %p109 = scmp.eq.s32.totalorder %s10, 1
    %p110 = scmp.ne.s32.totalorder %s105, %s107
    %p111 = scmp.eq.s32.totalorder %s10, 0
    %p112 = por %p110, %p111
    %p113 = scmp.ne.s32.totalorder %s105, %s107
    %p114 = scmp.eq.s32.totalorder %s15, 1
    %p115 = por %p113, %p114
    %p116 = scmp.ne.s32.totalorder %s107, %s108
    %p117 = scmp.eq.s32.totalorder %s15, 0
    %p118 = por %p116, %p117
    %p119 = scmp.ne.s32.totalorder %s107, %s108
    %p120 = scmp.eq.s32.totalorder %s16, 1
    %p121 = por %p119, %p120
    %p123 = scmp.ne.s32.totalorder %s108, %s122
    %p124 = scmp.eq.s32.totalorder %s16, 0
    %p125 = por %p123, %p124
    %s126 = ssub.s32 %s17, %s29
    %s127 = ssub.s32 %s18, %s25
    %s128 = sor.u32 %s126, %s127
    %p129 = scmp.eq.s32.totalorder %s128, 0
    %s131 = sadd.s32 %s130, 1
    %s132 = scalar_select %p129, %s130, %s131
    %p135 = pneg %p129
    %p136 = scmp.eq.s32.totalorder %s10, 1
    %p137 = por %p135, %p136
    %p138 = scmp.ne.s32.totalorder %s130, %s133
    %p139 = scmp.eq.s32.totalorder %s10, 0
    %p140 = por %p138, %p139
    %p141 = scmp.ne.s32.totalorder %s130, %s133
    %p142 = scmp.eq.s32.totalorder %s15, 1
    %p143 = por %p141, %p142
    %p144 = scmp.ne.s32.totalorder %s133, %s134
    %p145 = scmp.eq.s32.totalorder %s15, 0
    %p146 = por %p144, %p145
    %p147 = scmp.ne.s32.totalorder %s133, %s134
    %p148 = scmp.eq.s32.totalorder %s16, 1
    %p149 = por %p147, %p148
    %p151 = scmp.ne.s32.totalorder %s134, %s150
    %p152 = scmp.eq.s32.totalorder %s16, 0
    %p153 = por %p151, %p152
    %p154 = scmp.le.s32.totalorder 1, %s10
    %p155 = scmp.lt.s32.totalorder %s10, 3
    %p156 = pnand %p154, %p155
    %p157 = pneg %p156
    // Predicated region
    $region9: #{_lambda_.14} parent=5 // pred_check
      _
    $region10: #{_lambda_.14} parent=5 // pred_check_branch
      %159 = sbr.rel (%p156) target = $region12
    $region11: #{_lambda_.14} parent=5 // pred_region
      %s160 = ssub.s32 %s10, 1
      // Predicated region
      $region13: #{_lambda_.14} parent=11 // pred_check
        %p161 = pneg %p97
      $region14: #{_lambda_.14} parent=11 // pred_check_branch
        %163 = sbr.rel (%p161) target = $region16
      $region15: #{_lambda_.14} parent=11 // pred_region
        _
      $region16: #{_lambda_.14} parent=11 // pred_fallthru
        _
      // Predicated region
      $region17: #{_lambda_.14} parent=11 // pred_check
        %p164 = pneg %p118
      $region18: #{_lambda_.14} parent=11 // pred_check_branch
        %166 = sbr.rel (%p164) target = $region20
      $region19: #{_lambda_.14} parent=11 // pred_region
        _
      $region20: #{_lambda_.14} parent=11 // pred_fallthru
        _
    $region12: #{_lambda_.14} parent=5 // pred_fallthru
      _
    %p167 = scmp.lt.s32.totalorder %s10, 2
    // Predicated region
    $region21: #{_lambda_.14} parent=5 // pred_check
      %p168 = pneg %p167
    $region22: #{_lambda_.14} parent=5 // pred_check_branch
      %170 = sbr.rel (%p168) target = $region24
    $region23: #{_lambda_.14} parent=5 // pred_region
      // Predicated region
      $region25: #{_lambda_.14} parent=23 // pred_check
        %p171 = pneg %p44
      $region26: #{_lambda_.14} parent=23 // pred_check_branch
        %173 = sbr.rel (%p171) target = $region28
      $region27: #{_lambda_.14} parent=23 // pred_region
        %p174 = scmp.lt.s32.totalorder %s17, 1
        %s175 = scalar_select %p174, %s17, 1
        %p176 = scmp.lt.s32.totalorder %s18, 0
        %s177 = scalar_select %p176, %s18, 0
        %s178 = sadd.s32 %s177, %s175
        %s179 = smul.addr %s178, 8
        %s180 = scalar_lea.vmem %s0, %s179
      $region28: #{_lambda_.14} parent=23 // pred_fallthru
        _
      // Predicated region
      $region29: #{_lambda_.14} parent=23 // pred_check
        %p181 = pneg %p70
      $region30: #{_lambda_.14} parent=23 // pred_check_branch
        %183 = sbr.rel (%p181) target = $region32
      $region31: #{_lambda_.14} parent=23 // pred_region
        %p184 = scmp.lt.s32.totalorder %s17, 1
        %s185 = scalar_select %p184, %s17, 1
        %s186 = scalar_lea.vmem %s1, %s185
      $region32: #{_lambda_.14} parent=23 // pred_fallthru
        _
    $region24: #{_lambda_.14} parent=5 // pred_fallthru
      _
    %p187 = scmp.le.s32.totalorder 1, %s10
    %p188 = scmp.lt.s32.totalorder %s10, 3
    %p189 = pnand %p187, %p188
    %p190 = pneg %p189
    // Predicated region
    $region33: #{_lambda_.14} parent=5 // pred_check
      _
    $region34: #{_lambda_.14} parent=5 // pred_check_branch
      %192 = sbr.rel (%p189) target = $region36
    $region35: #{_lambda_.14} parent=5 // pred_region
      %s193 = ssub.s32 %s10, 1
      %p194 = scmp.lt.s32.totalorder %s19, 1
      %s195 = scalar_select %p194, %s19, 1
      %p196 = scmp.lt.s32.totalorder %s20, 0
      %s197 = scalar_select %p196, %s20, 0
      %s198 = sadd.s32 %s197, %s195
      %s199 = smul.addr %s198, 8
      %s200 = scalar_lea.vmem %s0, %s199
      %p201 = pneg %p50
      %p202 = pneg %p47
      %p203 = scmp.lt.s32.totalorder %s19, 1
      %s204 = scalar_select %p203, %s19, 1
      %s205 = scalar_lea.vmem %s1, %s204
      %p206 = pneg %p76
      %p207 = pneg %p73
      %p208 = pneg %p97
      %p209 = pneg %p94
      %p210 = pneg %p118
      %p211 = pneg %p115
      %p212 = pneg %p146
      %p213 = pneg %p143
      %p214 = scmp.lt.s32.totalorder %s19, 1
      %s215 = scalar_select %p214, %s19, 1
      %p216 = scmp.lt.s32.totalorder %s20, 0
      %s217 = scalar_select %p216, %s20, 0
      %s218 = smul.addr %s217, 2
      %s219 = smul.addr %s215, 2
      %s220 = sadd.s32 %s218, %s219
      %s221 = smul.addr %s220, 8
      %s222 = scalar_lea.vmem %s4, %s221
      %p223 = scmp.lt.s32.totalorder %s19, 1
      %s224 = scalar_select %p223, %s19, 1
      %p225 = scmp.lt.s32.totalorder %s20, 0
      %s226 = scalar_select %p225, %s20, 0
      %s227 = sadd.s32 %s226, %s224
      %s228 = smul.addr %s227, 8
      %s229 = scalar_lea.vmem %s0, %s228
      %p230 = scmp.lt.s32.totalorder %s19, 1
      %s231 = scalar_select %p230, %s19, 1
      %s232 = scalar_lea.vmem %s1, %s231
      %p233 = scmp.lt.s32.totalorder %s19, 1
      %s234 = scalar_select %p233, %s19, 1
      %p235 = scmp.lt.s32.totalorder %s20, 0
      %s236 = scalar_select %p235, %s20, 0
      %s237 = smul.addr %s236, 2
      %s238 = smul.addr %s234, 2
      %s239 = sadd.s32 %s237, %s238
      %s240 = smul.addr %s239, 8
      %s241 = scalar_lea.vmem %s4, %s240
      %v242 = vld [vmem:[%s232] sm:$0x1]
      %v243 = vld [vmem:[%s229] sm:$0xff]
      %v245 = vlaneseq
      %v246 = vshrl.u32 %v245, 7
      %v247 = vsub.s32 0, %v246
      %v248 = vrot.slane %v242, %v247
      %249 = vset.pattern.permute.xlu0 0
      %250 = vperm.xlu0 %249, %v248
      %v251 = vpop.permute.xlu0 %250
      %v253 = vmul.f32 %v243, %v251
      %254 = vset.pattern.permute.xlu0 1
      %255 = vperm.xlu0 %254, %v248
      %v256 = vpop.permute.xlu0 %255
      %v258 = vadd.f32 %v253, %v256
      %v259 = vld [vmem:[%s2] sm:$0xff]
      %v260 = vld [vmem:[%s2 + $0x8] sm:$0xff]
      %v261 = vld [vmem:[%s2 + $0x10] sm:$0xff]
      %v262 = vld [vmem:[%s2 + $0x18] sm:$0xff]
      %v263 = vld [vmem:[%s2 + $0x20] sm:$0xff]
      %v264 = vld [vmem:[%s2 + $0x28] sm:$0xff]
      %v265 = vld [vmem:[%s2 + $0x30] sm:$0xff]
      %v266 = vld [vmem:[%s2 + $0x38] sm:$0xff]
      %v267 = vld [vmem:[%s2 + $0x40] sm:$0xff]
      %v268 = vld [vmem:[%s2 + $0x48] sm:$0xff]
      %v269 = vld [vmem:[%s2 + $0x50] sm:$0xff]
      %v270 = vld [vmem:[%s2 + $0x58] sm:$0xff]
      %v271 = vld [vmem:[%s2 + $0x60] sm:$0xff]
      %v272 = vld [vmem:[%s2 + $0x68] sm:$0xff]
      %v273 = vld [vmem:[%s2 + $0x70] sm:$0xff]
      %v274 = vld [vmem:[%s2 + $0x78] sm:$0xff]
      %v275 = vld [vmem:[%s2 + $0x80] sm:$0xff]
      %v276 = vld [vmem:[%s2 + $0x88] sm:$0xff]
      %v277 = vld [vmem:[%s2 + $0x90] sm:$0xff]
      %v278 = vld [vmem:[%s2 + $0x98] sm:$0xff]
      %v279 = vld [vmem:[%s2 + $0xa0] sm:$0xff]
      %v280 = vld [vmem:[%s2 + $0xa8] sm:$0xff]
      %v281 = vld [vmem:[%s2 + $0xb0] sm:$0xff]
      %v282 = vld [vmem:[%s2 + $0xb8] sm:$0xff]
      %v283 = vld [vmem:[%s2 + $0xc0] sm:$0xff]
      %v284 = vld [vmem:[%s2 + $0xc8] sm:$0xff]
      %v285 = vld [vmem:[%s2 + $0xd0] sm:$0xff]
      %v286 = vld [vmem:[%s2 + $0xd8] sm:$0xff]
      %v287 = vld [vmem:[%s2 + $0xe0] sm:$0xff]
      %v288 = vld [vmem:[%s2 + $0xe8] sm:$0xff]
      %v289 = vld [vmem:[%s2 + $0xf0] sm:$0xff]
      %v290 = vld [vmem:[%s2 + $0xf8] sm:$0xff]
      %v291 = vld [vmem:[%s3] sm:$0x3]
      %v293 = vlaneseq
      %v294 = vshrl.u32 %v293, 7
      %v295 = vsub.s32 0, %v294
      %v296 = vrot.slane %v291, %v295
      %v297 = vlaneseq
      %v298 = vshrl.u32 %v297, 7
      %v299 = vsub.s32 1, %v298
      %v300 = vrot.slane %v291, %v299
      %303 = vmatprep.subr.mxu0 %v260
      %304 = vmatpush1.msra.mxu0 %v259
      %305 = vmatprep.subr.mxu0 %v262
      %306 = vmatpush1.msra.mxu0 %v261
      %307 = vmatprep.subr.mxu0 %v264
      %308 = vmatpush1.msra.mxu0 %v263
      %309 = vmatprep.subr.mxu0 %v266
      %310 = vmatpush1.msra.mxu0 %v265
      %311 = vmatprep.subr.mxu0 %v268
      %312 = vmatpush1.msra.mxu0 %v267
      %313 = vmatprep.subr.mxu0 %v270
      %314 = vmatpush1.msra.mxu0 %v269
      %315 = vmatprep.subr.mxu0 %v272
      %316 = vmatpush1.msra.mxu0 %v271
      %317 = vmatprep.subr.mxu0 %v274
      %318 = vmatpush1.msra.mxu0 %v273
      %319 = vmatprep.subr.mxu0 %v276
      %320 = vmatpush1.msra.mxu0 %v275
      %321 = vmatprep.subr.mxu0 %v278
      %322 = vmatpush1.msra.mxu0 %v277
      %323 = vmatprep.subr.mxu0 %v280
      %324 = vmatpush1.msra.mxu0 %v279
      %325 = vmatprep.subr.mxu0 %v282
      %326 = vmatpush1.msra.mxu0 %v281
      %327 = vmatprep.subr.mxu0 %v284
      %328 = vmatpush1.msra.mxu0 %v283
      %329 = vmatprep.subr.mxu0 %v286
      %330 = vmatpush1.msra.mxu0 %v285
      %331 = vmatprep.subr.mxu0 %v288
      %332 = vmatpush1.msra.mxu0 %v287
      %333 = vmatprep.subr.mxu0 %v290
      %334 = vmatpush1.msra.mxu0 %v289
      %335 = vmatprep.subr.mxu0 0.0
      %336 = vmatpush1.msra.mxu0 0.0
      %337 = vmatprep.subr.mxu0 0.0
      %338 = vmatpush1.msra.mxu0 0.0
      %339 = vmatprep.subr.mxu0 0.0
      %340 = vmatpush1.msra.mxu0 0.0
      %341 = vmatprep.subr.mxu0 0.0
      %342 = vmatpush1.msra.mxu0 0.0
      %343 = vmatprep.subr.mxu0 0.0
      %344 = vmatpush1.msra.mxu0 0.0
      %345 = vmatprep.subr.mxu0 0.0
      %346 = vmatpush1.msra.mxu0 0.0
      %347 = vmatprep.subr.mxu0 0.0
      %348 = vmatpush1.msra.mxu0 0.0
      %349 = vmatprep.subr.mxu0 0.0
      %350 = vmatpush1.msra.mxu0 0.0
      %351 = vmatprep.subr.mxu0 0.0
      %352 = vmatpush1.msra.mxu0 0.0
      %353 = vmatprep.subr.mxu0 0.0
      %354 = vmatpush1.msra.mxu0 0.0
      %355 = vmatprep.subr.mxu0 0.0
      %356 = vmatpush1.msra.mxu0 0.0
      %357 = vmatprep.subr.mxu0 0.0
      %358 = vmatpush1.msra.mxu0 0.0
      %359 = vmatprep.subr.mxu0 0.0
      %360 = vmatpush1.msra.mxu0 0.0
      %361 = vmatprep.subr.mxu0 0.0
      %362 = vmatpush1.msra.mxu0 0.0
      %363 = vmatprep.subr.mxu0 0.0
      %364 = vmatpush1.msra.mxu0 0.0
      %365 = vmatprep.subr.mxu0 0.0
      %366 = vmatpush1.msra.mxu0 0.0
      %367 = vmatprep.mubr.f32.mxu0 0.0
      %368 = vmatmul.mubr.f32.gmra.mrb[0].mxu0 %v258
      %v369 = vpop.f32.mrb[0].mxu0
      %v370 = vadd.f32 %v296, %v369
      %v371 = vpop.f32.mrb[0].mxu0
      %v372 = vadd.f32 %v300, %v371
      %373 = vdwg.mxu0
      %374 = vst [vmem:[%s241] sm:$0xff] %v370
      %375 = vst [vmem:[%s241 + $0x8] sm:$0xff] %v372
      %p376 = scmp.lt.s32.totalorder %s19, 1
      %s377 = scalar_select %p376, %s19, 1
      %p378 = scmp.lt.s32.totalorder %s20, 0
      %s379 = scalar_select %p378, %s20, 0
      %s380 = smul.addr %s379, 2
      %s381 = smul.addr %s377, 2
      %s382 = sadd.s32 %s380, %s381
      %s383 = smul.addr %s382, 8
      %s384 = scalar_lea.vmem %s4, %s383
      // Predicated region
      $region37: #{_lambda_.14} parent=35 // pred_check
        %p385 = pneg %p143
      $region38: #{_lambda_.14} parent=35 // pred_check_branch
        %387 = sbr.rel (%p385) target = $region40
      $region39: #{_lambda_.14} parent=35 // pred_region
        _
      $region40: #{_lambda_.14} parent=35 // pred_fallthru
        _
    $region36: #{_lambda_.14} parent=5 // pred_fallthru
      _
    %p388 = scmp.le.s32.totalorder 2, %s10
    // Predicated region
    $region41: #{_lambda_.14} parent=5 // pred_check
      %p389 = pneg %p388
    $region42: #{_lambda_.14} parent=5 // pred_check_branch
      %391 = sbr.rel (%p389) target = $region44
    $region43: #{_lambda_.14} parent=5 // pred_region
      %s392 = ssub.s32 %s10, 2
      // Predicated region
      $region45: #{_lambda_.14} parent=43 // pred_check
        %p393 = pneg %p149
      $region46: #{_lambda_.14} parent=43 // pred_check_branch
        %395 = sbr.rel (%p393) target = $region48
      $region47: #{_lambda_.14} parent=43 // pred_region
        %p396 = scmp.lt.s32.totalorder %s21, 1
        %s397 = scalar_select %p396, %s21, 1
        %p398 = scmp.lt.s32.totalorder %s22, 0
        %s399 = scalar_select %p398, %s22, 0
        %s400 = smul.addr %s399, 2
        %s401 = smul.addr %s397, 2
        %s402 = sadd.s32 %s400, %s401
        %s403 = smul.addr %s402, 8
        %s404 = scalar_lea.vmem %s4, %s403
      $region48: #{_lambda_.14} parent=43 // pred_fallthru
        _
    $region44: #{_lambda_.14} parent=5 // pred_fallthru
      _
  $region6: #{_lambda_.14} parent=0 // loop_footer
    %s14 = sadd.s32 1, %s10
  $region7: #{_lambda_.14} parent=0 // loop_footer_branch
    %9 = sbr.rel target = $region3
  $region8: #{_lambda_.14} parent=0 // loop_exit
    _

// kernel: _lambda_.15
$region0: #{_lambda_.15}
  #allocation0 [shape = 'u32[]', space=smem, size = 0x4, offset = 0x4, fixed_abs, tag = 'smem constant byte address 0x4 - core index']
  #allocation1 [shape = 'u32[144,128]{1,0:T(1,128)}', space=vmem, size = 0x12000, scoped, tag = 'internal scratch']
  %s0 = inlined_call_operand.vmem [shape: f32[2,4,4,128], index: 0, kind: input, shape index: {}, may-alias: {0,1,2}]
  %s1 = inlined_call_operand.vmem [shape: f32[2,4,4,128], index: 1, kind: input, shape index: {}, may-alias: {0,1,2}]
  %s2 = inlined_call_operand.vmem [shape: f32[2,4,4,128], index: 2, kind: input, shape index: {}, may-alias: {0,1,2}]
  %s3 = inlined_call_operand.vmem [shape: f32[2,16,64], index: 3, kind: input, shape index: {}]
  %s4 = inlined_call_operand.vmem [shape: f32[2,1,128], index: 4, kind: input, shape index: {}]
  %s5 = inlined_call_operand.vmem [shape: f32[9,128], index: 5, kind: input, shape index: {}]
  %s6 = inlined_call_operand.vmem [shape: f32[1,128], index: 6, kind: input, shape index: {}]
  %s7 = inlined_call_operand.vmem [shape: f32[128,128], index: 7, kind: input, shape index: {}]
  %s8 = inlined_call_operand.vmem [shape: f32[1,128], index: 8, kind: input, shape index: {}]
  %s9 = inlined_call_operand.vmem [shape: f32[128,64], index: 9, kind: input, shape index: {}]
  %s10 = inlined_call_operand.vmem [shape: f32[1,64], index: 10, kind: input, shape index: {}]
  %s11 = inlined_call_operand.hbm [shape: f32[2,16,64], index: 11, kind: output, shape index: {}]
  %s12 = sld [smem:[#allocation0]]
  $region77: #{_lambda_.15} parent=0
    _
  %s14 = ssub.s32 1, %s12
  %s15 = scalar_select 0, %s14, %s12
  $region1: #{_lambda_.15} parent=0
    #allocation2 [shape = 'u8[16384]{0}', space=vmem, size = 0x4000, scoped, tag = 'output window, operand 0']
    #allocation3 [shape = 's32[2]{0}', space=sflag, size = 0x8, scoped, tag = 'scoped memory for _lambda_.15']
    %16 = vsyncpa [#allocation3], 0
    %s17 = scalar_lea.sflag [#allocation3], 1
    %18 = vsyncpa %s17, 0
    loop: start=0, step=1, limit=4
    $region2: #{_lambda_.15} parent=1 // loop_pre_header
      _
    $region3: #{_lambda_.15} parent=1 // loop_header
      %s20 = sphi 0, %s24
      %p21 = scmp.ge.s32.totalorder %s20, 4
      %s27 = sphi 0, %s39
      %s28 = sphi 0, %s35
      %s29 = sphi 0, %s27
      %s30 = sphi 0, %s28
      %s31 = sphi 0, %s29
      %s32 = sphi 0, %s30
      %s44 = sphi 0, %s46
      %s47 = sphi 0, %s44
      %s48 = sphi 0, %s47
      %s64 = sphi 0, %s48
      %s80 = sphi 0, %s82
      %s83 = sphi 0, %s80
      %s84 = sphi 0, %s83
      %s100 = sphi 0, %s84
      %s116 = sphi 0, %s118
      %s119 = sphi 0, %s116
      %s120 = sphi 0, %s119
      %s136 = sphi 0, %s120
      %s144 = sphi 0, %s146
      %s147 = sphi 0, %s144
      %s148 = sphi 0, %s147
      %s164 = sphi 0, %s148
      %s170 = sphi 0, %s172
      %s173 = sphi 0, %s170
      %s174 = sphi 0, %s173
      %s190 = sphi 0, %s174
      %s194 = sphi 0, %s194
      %s196 = sphi 0, %s194
      %s197 = sphi 0, %s196
      %s211 = sphi 0, %s197
      %s215 = sphi 0, %s215
      %s217 = sphi 0, %s215
      %s218 = sphi 0, %s217
      %s232 = sphi 0, %s218
      %s236 = sphi 0, %s236
      %s238 = sphi 0, %s236
      %s239 = sphi 0, %s238
      %s253 = sphi 0, %s239
      %s257 = sphi 0, %s257
      %s259 = sphi 0, %s257
      %s260 = sphi 0, %s259
      %s274 = sphi 0, %s260
      %s278 = sphi 0, %s278
      %s280 = sphi 0, %s278
      %s281 = sphi 0, %s280
      %s295 = sphi 0, %s281
      %s299 = sphi 0, %s299
      %s301 = sphi 0, %s299
      %s302 = sphi 0, %s301
      %s316 = sphi 0, %s302
      %s324 = sphi 0, %s326
      %s327 = sphi 0, %s324
      %s328 = sphi 0, %s327
      %s344 = sphi 0, %s328
    $region4: #{_lambda_.15} parent=1 // loop_header_branch
      %23 = sbr.rel (%p21) target = $region8
    $region5: #{_lambda_.15} parent=1 // loop_body
      %s25 = ssub.s32 %s20, 1
      %s26 = ssub.s32 %s20, 2
      %s33 = sadd.s32 1, %s28
      %p34 = scmp.ge.s32.totalorder %s33, 1
      %s35 = scalar_select %p34, 0, %s33
      %s36 = sadd.s32 1, %s27
      %s37 = scalar_select %p34, %s36, %s27
      %p38 = scmp.ge.s32.totalorder %s37, 2
      %s39 = scalar_select %p38, 0, %s37
      %s40 = ssub.s32 %s27, %s39
      %s41 = ssub.s32 %s28, %s35
      %s42 = sor.u32 %s40, %s41
      %p43 = scmp.eq.s32.totalorder %s42, 0
      %s45 = sadd.s32 %s44, 1
      %s46 = scalar_select %p43, %s44, %s45
      %p49 = pneg %p43
      %p50 = scmp.eq.s32.totalorder %s20, 1
      %p51 = por %p49, %p50
      %p52 = scmp.ne.s32.totalorder %s44, %s47
      %p53 = scmp.eq.s32.totalorder %s20, 0
      %p54 = por %p52, %p53
      %p55 = scmp.ne.s32.totalorder %s44, %s47
      %p56 = scmp.eq.s32.totalorder %s25, 1
      %p57 = por %p55, %p56
      %p58 = scmp.ne.s32.totalorder %s47, %s48
      %p59 = scmp.eq.s32.totalorder %s25, 0
      %p60 = por %p58, %p59
      %p61 = scmp.ne.s32.totalorder %s47, %s48
      %p62 = scmp.eq.s32.totalorder %s26, 1
      %p63 = por %p61, %p62
      %p65 = scmp.ne.s32.totalorder %s48, %s64
      %p66 = scmp.eq.s32.totalorder %s26, 0
      %p67 = por %p65, %p66
      %s68 = smul.u32 %s28, 4
      %s69 = ssub.s32 %s68, 1
      %p70 = scmp.gt.s32.totalorder %s69, 0
      %s71 = scalar_select %p70, %s69, 0
      %s72 = smul.u32 %s35, 4
      %s73 = ssub.s32 %s72, 1
      %p74 = scmp.gt.s32.totalorder %s73, 0
      %s75 = scalar_select %p74, %s73, 0
      %s76 = ssub.s32 %s27, %s39
      %s77 = ssub.s32 %s71, %s75
      %s78 = sor.u32 %s76, %s77
      %p79 = scmp.eq.s32.totalorder %s78, 0
      %s81 = sadd.s32 %s80, 1
      %s82 = scalar_select %p79, %s80, %s81
      %p85 = pneg %p79
      %p86 = scmp.eq.s32.totalorder %s20, 1
      %p87 = por %p85, %p86
      %p88 = scmp.ne.s32.totalorder %s80, %s83
      %p89 = scmp.eq.s32.totalorder %s20, 0
      %p90 = por %p88, %p89
      %p91 = scmp.ne.s32.totalorder %s80, %s83
      %p92 = scmp.eq.s32.totalorder %s25, 1
      %p93 = por %p91, %p92
      %p94 = scmp.ne.s32.totalorder %s83, %s84
      %p95 = scmp.eq.s32.totalorder %s25, 0
      %p96 = por %p94, %p95
      %p97 = scmp.ne.s32.totalorder %s83, %s84
      %p98 = scmp.eq.s32.totalorder %s26, 1
      %p99 = por %p97, %p98
      %p101 = scmp.ne.s32.totalorder %s84, %s100
      %p102 = scmp.eq.s32.totalorder %s26, 0
      %p103 = por %p101, %p102
      %s104 = sadd.s32 %s28, 1
      %s105 = smul.u32 %s104, 4
      %p106 = scmp.lt.s32.totalorder %s105, 3
      %s107 = scalar_select %p106, %s105, 3
      %s108 = sadd.s32 %s35, 1
      %s109 = smul.u32 %s108, 4
      %p110 = scmp.lt.s32.totalorder %s109, 3
      %s111 = scalar_select %p110, %s109, 3
      %s112 = ssub.s32 %s27, %s39
      %s113 = ssub.s32 %s107, %s111
      %s114 = sor.u32 %s112, %s113
      %p115 = scmp.eq.s32.totalorder %s114, 0
      %s117 = sadd.s32 %s116, 1
      %s118 = scalar_select %p115, %s116, %s117
      %p121 = pneg %p115
      %p122 = scmp.eq.s32.totalorder %s20, 1
      %p123 = por %p121, %p122
      %p124 = scmp.ne.s32.totalorder %s116, %s119
      %p125 = scmp.eq.s32.totalorder %s20, 0
      %p126 = por %p124, %p125
      %p127 = scmp.ne.s32.totalorder %s116, %s119
      %p128 = scmp.eq.s32.totalorder %s25, 1
      %p129 = por %p127, %p128
      %p130 = scmp.ne.s32.totalorder %s119, %s120
      %p131 = scmp.eq.s32.totalorder %s25, 0
      %p132 = por %p130, %p131
      %p133 = scmp.ne.s32.totalorder %s119, %s120
      %p134 = scmp.eq.s32.totalorder %s26, 1
      %p135 = por %p133, %p134
      %p137 = scmp.ne.s32.totalorder %s120, %s136
      %p138 = scmp.eq.s32.totalorder %s26, 0
      %p139 = por %p137, %p138
      %s140 = ssub.s32 %s27, %s39
      %s141 = ssub.s32 %s28, %s35
      %s142 = sor.u32 %s140, %s141
      %p143 = scmp.eq.s32.totalorder %s142, 0
      %s145 = sadd.s32 %s144, 1
      %s146 = scalar_select %p143, %s144, %s145
      %p149 = pneg %p143
      %p150 = scmp.eq.s32.totalorder %s20, 1
      %p151 = por %p149, %p150
      %p152 = scmp.ne.s32.totalorder %s144, %s147
      %p153 = scmp.eq.s32.totalorder %s20, 0
      %p154 = por %p152, %p153
      %p155 = scmp.ne.s32.totalorder %s144, %s147
      %p156 = scmp.eq.s32.totalorder %s25, 1
      %p157 = por %p155, %p156
      %p158 = scmp.ne.s32.totalorder %s147, %s148
      %p159 = scmp.eq.s32.totalorder %s25, 0
      %p160 = por %p158, %p159
      %p161 = scmp.ne.s32.totalorder %s147, %s148
      %p162 = scmp.eq.s32.totalorder %s26, 1
      %p163 = por %p161, %p162
      %p165 = scmp.ne.s32.totalorder %s148, %s164
      %p166 = scmp.eq.s32.totalorder %s26, 0
      %p167 = por %p165, %p166
      %s168 = ssub.s32 %s27, %s39
      %p169 = scmp.eq.s32.totalorder %s168, 0
      %s171 = sadd.s32 %s170, 1
      %s172 = scalar_select %p169, %s170, %s171
      %p175 = pneg %p169
      %p176 = scmp.eq.s32.totalorder %s20, 1
      %p177 = por %p175, %p176
      %p178 = scmp.ne.s32.totalorder %s170, %s173
      %p179 = scmp.eq.s32.totalorder %s20, 0
      %p180 = por %p178, %p179
      %p181 = scmp.ne.s32.totalorder %s170, %s173
      %p182 = scmp.eq.s32.totalorder %s25, 1
      %p183 = por %p181, %p182
      %p184 = scmp.ne.s32.totalorder %s173, %s174
      %p185 = scmp.eq.s32.totalorder %s25, 0
      %p186 = por %p184, %p185
      %p187 = scmp.ne.s32.totalorder %s173, %s174
      %p188 = scmp.eq.s32.totalorder %s26, 1
      %p189 = por %p187, %p188
      %p191 = scmp.ne.s32.totalorder %s174, %s190
      %p192 = scmp.eq.s32.totalorder %s26, 0
      %p193 = por %p191, %p192
      %s195 = sadd.s32 %s194, 1
      %p198 = scmp.eq.s32.totalorder %s20, 1
      %p199 = scmp.ne.s32.totalorder %s194, %s196
      %p200 = scmp.eq.s32.totalorder %s20, 0
      %p201 = por %p199, %p200
      %p202 = scmp.ne.s32.totalorder %s194, %s196
      %p203 = scmp.eq.s32.totalorder %s25, 1
      %p204 = por %p202, %p203
      %p205 = scmp.ne.s32.totalorder %s196, %s197
      %p206 = scmp.eq.s32.totalorder %s25, 0
      %p207 = por %p205, %p206
      %p208 = scmp.ne.s32.totalorder %s196, %s197
      %p209 = scmp.eq.s32.totalorder %s26, 1
      %p210 = por %p208, %p209
      %p212 = scmp.ne.s32.totalorder %s197, %s211
      %p213 = scmp.eq.s32.totalorder %s26, 0
      %p214 = por %p212, %p213
      %s216 = sadd.s32 %s215, 1
      %p219 = scmp.eq.s32.totalorder %s20, 1
      %p220 = scmp.ne.s32.totalorder %s215, %s217
      %p221 = scmp.eq.s32.totalorder %s20, 0
      %p222 = por %p220, %p221
      %p223 = scmp.ne.s32.totalorder %s215, %s217
      %p224 = scmp.eq.s32.totalorder %s25, 1
      %p225 = por %p223, %p224
      %p226 = scmp.ne.s32.totalorder %s217, %s218
      %p227 = scmp.eq.s32.totalorder %s25, 0
      %p228 = por %p226, %p227
      %p229 = scmp.ne.s32.totalorder %s217, %s218
      %p230 = scmp.eq.s32.totalorder %s26, 1
      %p231 = por %p229, %p230
      %p233 = scmp.ne.s32.totalorder %s218, %s232
      %p234 = scmp.eq.s32.totalorder %s26, 0
      %p235 = por %p233, %p234
      %s237 = sadd.s32 %s236, 1
      %p240 = scmp.eq.s32.totalorder %s20, 1
      %p241 = scmp.ne.s32.totalorder %s236, %s238
      %p242 = scmp.eq.s32.totalorder %s20, 0
      %p243 = por %p241, %p242
      %p244 = scmp.ne.s32.totalorder %s236, %s238
      %p245 = scmp.eq.s32.totalorder %s25, 1
      %p246 = por %p244, %p245
      %p247 = scmp.ne.s32.totalorder %s238, %s239
      %p248 = scmp.eq.s32.totalorder %s25, 0
      %p249 = por %p247, %p248
      %p250 = scmp.ne.s32.totalorder %s238, %s239
      %p251 = scmp.eq.s32.totalorder %s26, 1
      %p252 = por %p250, %p251
      %p254 = scmp.ne.s32.totalorder %s239, %s253
      %p255 = scmp.eq.s32.totalorder %s26, 0
      %p256 = por %p254, %p255
      %s258 = sadd.s32 %s257, 1
      %p261 = scmp.eq.s32.totalorder %s20, 1
      %p262 = scmp.ne.s32.totalorder %s257, %s259
      %p263 = scmp.eq.s32.totalorder %s20, 0
      %p264 = por %p262, %p263
      %p265 = scmp.ne.s32.totalorder %s257, %s259
      %p266 = scmp.eq.s32.totalorder %s25, 1
      %p267 = por %p265, %p266
      %p268 = scmp.ne.s32.totalorder %s259, %s260
      %p269 = scmp.eq.s32.totalorder %s25, 0
      %p270 = por %p268, %p269
      %p271 = scmp.ne.s32.totalorder %s259, %s260
      %p272 = scmp.eq.s32.totalorder %s26, 1
      %p273 = por %p271, %p272
      %p275 = scmp.ne.s32.totalorder %s260, %s274
      %p276 = scmp.eq.s32.totalorder %s26, 0
      %p277 = por %p275, %p276
      %s279 = sadd.s32 %s278, 1
      %p282 = scmp.eq.s32.totalorder %s20, 1
      %p283 = scmp.ne.s32.totalorder %s278, %s280
      %p284 = scmp.eq.s32.totalorder %s20, 0
      %p285 = por %p283, %p284
      %p286 = scmp.ne.s32.totalorder %s278, %s280
      %p287 = scmp.eq.s32.totalorder %s25, 1
      %p288 = por %p286, %p287
      %p289 = scmp.ne.s32.totalorder %s280, %s281
      %p290 = scmp.eq.s32.totalorder %s25, 0
      %p291 = por %p289, %p290
      %p292 = scmp.ne.s32.totalorder %s280, %s281
      %p293 = scmp.eq.s32.totalorder %s26, 1
      %p294 = por %p292, %p293
      %p296 = scmp.ne.s32.totalorder %s281, %s295
      %p297 = scmp.eq.s32.totalorder %s26, 0
      %p298 = por %p296, %p297
      %s300 = sadd.s32 %s299, 1
      %p303 = scmp.eq.s32.totalorder %s20, 1
      %p304 = scmp.ne.s32.totalorder %s299, %s301
      %p305 = scmp.eq.s32.totalorder %s20, 0
      %p306 = por %p304, %p305
      %p307 = scmp.ne.s32.totalorder %s299, %s301
      %p308 = scmp.eq.s32.totalorder %s25, 1
      %p309 = por %p307, %p308
      %p310 = scmp.ne.s32.totalorder %s301, %s302
      %p311 = scmp.eq.s32.totalorder %s25, 0
      %p312 = por %p310, %p311
      %p313 = scmp.ne.s32.totalorder %s301, %s302
      %p314 = scmp.eq.s32.totalorder %s26, 1
      %p315 = por %p313, %p314
      %p317 = scmp.ne.s32.totalorder %s302, %s316
      %p318 = scmp.eq.s32.totalorder %s26, 0
      %p319 = por %p317, %p318
      %s320 = ssub.s32 %s27, %s39
      %s321 = ssub.s32 %s28, %s35
      %s322 = sor.u32 %s320, %s321
      %p323 = scmp.eq.s32.totalorder %s322, 0
      %s325 = sadd.s32 %s324, 1
      %s326 = scalar_select %p323, %s324, %s325
      %p329 = pneg %p323
      %p330 = scmp.eq.s32.totalorder %s20, 1
      %p331 = por %p329, %p330
      %p332 = scmp.ne.s32.totalorder %s324, %s327
      %p333 = scmp.eq.s32.totalorder %s20, 0
      %p334 = por %p332, %p333
      %p335 = scmp.ne.s32.totalorder %s324, %s327
      %p336 = scmp.eq.s32.totalorder %s25, 1
      %p337 = por %p335, %p336
      %p338 = scmp.ne.s32.totalorder %s327, %s328
      %p339 = scmp.eq.s32.totalorder %s25, 0
      %p340 = por %p338, %p339
      %p341 = scmp.ne.s32.totalorder %s327, %s328
      %p342 = scmp.eq.s32.totalorder %s26, 1
      %p343 = por %p341, %p342
      %p345 = scmp.ne.s32.totalorder %s328, %s344
      %p346 = scmp.eq.s32.totalorder %s26, 0
      %p347 = por %p345, %p346
      %p348 = scmp.le.s32.totalorder 1, %s20
      %p349 = scmp.lt.s32.totalorder %s20, 3
      %p350 = pnand %p348, %p349
      %p351 = pneg %p350
      // Predicated region
      $region9: #{_lambda_.15} parent=5 // pred_check
        _
      $region10: #{_lambda_.15} parent=5 // pred_check_branch
        %353 = sbr.rel (%p350) target = $region12
      $region11: #{_lambda_.15} parent=5 // pred_region
        %s354 = ssub.s32 %s20, 1
        // Predicated region
        $region13: #{_lambda_.15} parent=11 // pred_check
          %p355 = pneg %p207
        $region14: #{_lambda_.15} parent=11 // pred_check_branch
          %357 = sbr.rel (%p355) target = $region16
        $region15: #{_lambda_.15} parent=11 // pred_region
          _
        $region16: #{_lambda_.15} parent=11 // pred_fallthru
          _
        // Predicated region
        $region17: #{_lambda_.15} parent=11 // pred_check
          %p358 = pneg %p228
        $region18: #{_lambda_.15} parent=11 // pred_check_branch
          %360 = sbr.rel (%p358) target = $region20
        $region19: #{_lambda_.15} parent=11 // pred_region
          _
        $region20: #{_lambda_.15} parent=11 // pred_fallthru
          _
        // Predicated region
        $region21: #{_lambda_.15} parent=11 // pred_check
          %p361 = pneg %p249
        $region22: #{_lambda_.15} parent=11 // pred_check_branch
          %363 = sbr.rel (%p361) target = $region24
        $region23: #{_lambda_.15} parent=11 // pred_region
          _
        $region24: #{_lambda_.15} parent=11 // pred_fallthru
          _
        // Predicated region
        $region25: #{_lambda_.15} parent=11 // pred_check
          %p364 = pneg %p270
        $region26: #{_lambda_.15} parent=11 // pred_check_branch
          %366 = sbr.rel (%p364) target = $region28
        $region27: #{_lambda_.15} parent=11 // pred_region
          _
        $region28: #{_lambda_.15} parent=11 // pred_fallthru
          _
        // Predicated region
        $region29: #{_lambda_.15} parent=11 // pred_check
          %p367 = pneg %p291
        $region30: #{_lambda_.15} parent=11 // pred_check_branch
          %369 = sbr.rel (%p367) target = $region32
        $region31: #{_lambda_.15} parent=11 // pred_region
          _
        $region32: #{_lambda_.15} parent=11 // pred_fallthru
          _
        // Predicated region
        $region33: #{_lambda_.15} parent=11 // pred_check
          %p370 = pneg %p312
        $region34: #{_lambda_.15} parent=11 // pred_check_branch
          %372 = sbr.rel (%p370) target = $region36
        $region35: #{_lambda_.15} parent=11 // pred_region
          _
        $region36: #{_lambda_.15} parent=11 // pred_fallthru
          _
      $region12: #{_lambda_.15} parent=5 // pred_fallthru
        _
      %p373 = scmp.lt.s32.totalorder %s20, 2
      // Predicated region
      $region37: #{_lambda_.15} parent=5 // pred_check
        %p374 = pneg %p373
      $region38: #{_lambda_.15} parent=5 // pred_check_branch
        %376 = sbr.rel (%p374) target = $region40
      $region39: #{_lambda_.15} parent=5 // pred_region
        // Predicated region
        $region41: #{_lambda_.15} parent=39 // pred_check
          %p377 = pneg %p54
        $region42: #{_lambda_.15} parent=39 // pred_check_branch
          %379 = sbr.rel (%p377) target = $region44
        $region43: #{_lambda_.15} parent=39 // pred_region
          %s380 = smul.u32 4, %s28
          %p381 = scmp.lt.s32.totalorder %s27, 1
          %s382 = scalar_select %p381, %s27, 1
          %p383 = scmp.lt.s32.totalorder %s380, 3
          %s384 = scalar_select %p383, %s380, 3
          %s385 = smul.addr %s382, 4
          %s386 = sadd.s32 %s384, %s385
          %s387 = smul.addr %s386, 4
          %s388 = scalar_lea.vmem %s0, %s387
          %s389 = smul.u32 4, %s28
        $region44: #{_lambda_.15} parent=39 // pred_fallthru
          _
        // Predicated region
        $region45: #{_lambda_.15} parent=39 // pred_check
          %p390 = pneg %p90
        $region46: #{_lambda_.15} parent=39 // pred_check_branch
          %392 = sbr.rel (%p390) target = $region48
        $region47: #{_lambda_.15} parent=39 // pred_region
          %s393 = smul.u32 %s28, 4
          %s394 = ssub.s32 %s393, 1
          %p395 = scmp.gt.s32.totalorder %s394, 0
          %s396 = scalar_select %p395, %s394, 0
          %p397 = scmp.lt.s32.totalorder %s27, 1
          %s398 = scalar_select %p397, %s27, 1
          %p399 = scmp.lt.s32.totalorder %s396, 3
          %s400 = scalar_select %p399, %s396, 3
          %s401 = smul.addr %s398, 4
          %s402 = sadd.s32 %s400, %s401
          %s403 = smul.addr %s402, 4
          %s404 = scalar_lea.vmem %s1, %s403
          %s405 = smul.u32 %s28, 4
          %s406 = ssub.s32 %s405, 1
          %p407 = scmp.gt.s32.totalorder %s406, 0
          %s408 = scalar_select %p407, %s406, 0
        $region48: #{_lambda_.15} parent=39 // pred_fallthru
          _
        // Predicated region
        $region49: #{_lambda_.15} parent=39 // pred_check
          %p409 = pneg %p126
        $region50: #{_lambda_.15} parent=39 // pred_check_branch
          %411 = sbr.rel (%p409) target = $region52
        $region51: #{_lambda_.15} parent=39 // pred_region
          %s412 = sadd.s32 %s28, 1
          %s413 = smul.u32 %s412, 4
          %p414 = scmp.lt.s32.totalorder %s413, 3
          %s415 = scalar_select %p414, %s413, 3
          %p416 = scmp.lt.s32.totalorder %s27, 1
          %s417 = scalar_select %p416, %s27, 1
          %p418 = scmp.lt.s32.totalorder %s415, 3
          %s419 = scalar_select %p418, %s415, 3
          %s420 = smul.addr %s417, 4
          %s421 = sadd.s32 %s419, %s420
          %s422 = smul.addr %s421, 4
          %s423 = scalar_lea.vmem %s2, %s422
          %s424 = sadd.s32 %s28, 1
          %s425 = smul.u32 %s424, 4
          %p426 = scmp.lt.s32.totalorder %s425, 3
          %s427 = scalar_select %p426, %s425, 3
        $region52: #{_lambda_.15} parent=39 // pred_fallthru
          _
        // Predicated region
        $region53: #{_lambda_.15} parent=39 // pred_check
          %p428 = pneg %p154
        $region54: #{_lambda_.15} parent=39 // pred_check_branch
          %430 = sbr.rel (%p428) target = $region56
        $region55: #{_lambda_.15} parent=39 // pred_region
          %s431 = smul.u32 2, %s28
          %p432 = scmp.lt.s32.totalorder %s27, 1
          %s433 = scalar_select %p432, %s27, 1
          %p434 = scmp.lt.s32.totalorder %s431, 1
          %s435 = scalar_select %p434, %s431, 1
          %s436 = smul.addr %s433, 2
          %s437 = sadd.s32 %s435, %s436
          %s438 = smul.addr %s437, 8
          %s439 = scalar_lea.vmem %s3, %s438
          %s440 = smul.u32 2, %s28
        $region56: #{_lambda_.15} parent=39 // pred_fallthru
          _
        // Predicated region
        $region57: #{_lambda_.15} parent=39 // pred_check
          %p441 = pneg %p180
        $region58: #{_lambda_.15} parent=39 // pred_check_branch
          %443 = sbr.rel (%p441) target = $region60
        $region59: #{_lambda_.15} parent=39 // pred_region
          %p444 = scmp.lt.s32.totalorder %s27, 1
          %s445 = scalar_select %p444, %s27, 1
          %s446 = scalar_lea.vmem %s4, %s445
        $region60: #{_lambda_.15} parent=39 // pred_fallthru
          _
      $region40: #{_lambda_.15} parent=5 // pred_fallthru
        _
      %p447 = scmp.le.s32.totalorder 1, %s20
      %p448 = scmp.lt.s32.totalorder %s20, 3
      %p449 = pnand %p447, %p448
      %p450 = pneg %p449
      // Predicated region
      $region61: #{_lambda_.15} parent=5 // pred_check
        _
      $region62: #{_lambda_.15} parent=5 // pred_check_branch
        %452 = sbr.rel (%p449) target = $region64
      $region63: #{_lambda_.15} parent=5 // pred_region
        %s453 = ssub.s32 %s20, 1
        %s454 = smul.u32 4, %s30
        %p455 = scmp.lt.s32.totalorder %s29, 1
        %s456 = scalar_select %p455, %s29, 1
        %p457 = scmp.lt.s32.totalorder %s454, 3
        %s458 = scalar_select %p457, %s454, 3
        %s459 = smul.addr %s456, 4
        %s460 = sadd.s32 %s458, %s459
        %s461 = smul.addr %s460, 4
        %s462 = scalar_lea.vmem %s0, %s461
        %p463 = pneg %p60
        %p464 = pneg %p57
        %s465 = smul.u32 %s30, 4
        %s466 = ssub.s32 %s465, 1
        %p467 = scmp.gt.s32.totalorder %s466, 0
        %s468 = scalar_select %p467, %s466, 0
        %p469 = scmp.lt.s32.totalorder %s29, 1
        %s470 = scalar_select %p469, %s29, 1
        %p471 = scmp.lt.s32.totalorder %s468, 3
        %s472 = scalar_select %p471, %s468, 3
        %s473 = smul.addr %s470, 4
        %s474 = sadd.s32 %s472, %s473
        %s475 = smul.addr %s474, 4
        %s476 = scalar_lea.vmem %s1, %s475
        %p477 = pneg %p96
        %p478 = pneg %p93
        %s479 = sadd.s32 %s30, 1
        %s480 = smul.u32 %s479, 4
        %p481 = scmp.lt.s32.totalorder %s480, 3
        %s482 = scalar_select %p481, %s480, 3
        %p483 = scmp.lt.s32.totalorder %s29, 1
        %s484 = scalar_select %p483, %s29, 1
        %p485 = scmp.lt.s32.totalorder %s482, 3
        %s486 = scalar_select %p485, %s482, 3
        %s487 = smul.addr %s484, 4
        %s488 = sadd.s32 %s486, %s487
        %s489 = smul.addr %s488, 4
        %s490 = scalar_lea.vmem %s2, %s489
        %p491 = pneg %p132
        %p492 = pneg %p129
        %s493 = smul.u32 2, %s30
        %p494 = scmp.lt.s32.totalorder %s29, 1
        %s495 = scalar_select %p494, %s29, 1
        %p496 = scmp.lt.s32.totalorder %s493, 1
        %s497 = scalar_select %p496, %s493, 1
        %s498 = smul.addr %s495, 2
        %s499 = sadd.s32 %s497, %s498
        %s500 = smul.addr %s499, 8
        %s501 = scalar_lea.vmem %s3, %s500
        %p502 = pneg %p160
        %p503 = pneg %p157
        %p504 = scmp.lt.s32.totalorder %s29, 1
        %s505 = scalar_select %p504, %s29, 1
        %s506 = scalar_lea.vmem %s4, %s505
        %p507 = pneg %p186
        %p508 = pneg %p183
        %p509 = pneg %p207
        %p510 = pneg %p204
        %p511 = pneg %p228
        %p512 = pneg %p225
        %p513 = pneg %p249
        %p514 = pneg %p246
        %p515 = pneg %p270
        %p516 = pneg %p267
        %p517 = pneg %p291
        %p518 = pneg %p288
        %p519 = pneg %p312
        %p520 = pneg %p309
        %p521 = pneg %p340
        %p522 = pneg %p337
        %s523 = sand.u32 %s327, 1
        %s524 = scalar_lea.sflag [#allocation3], %s523
        %s525 = sand.u32 %s327, 1
        %s526 = smul.addr %s525, 16
        %s527 = scalar_lea.vmem [#allocation2], %s526
        %s528 = smul.u32 4, %s30
        %p529 = scmp.lt.s32.totalorder %s29, 1
        %s530 = scalar_select %p529, %s29, 1
        %p531 = scmp.lt.s32.totalorder %s528, 3
        %s532 = scalar_select %p531, %s528, 3
        %s533 = smul.addr %s530, 4
        %s534 = sadd.s32 %s532, %s533
        %s535 = smul.addr %s534, 4
        %s536 = scalar_lea.vmem %s0, %s535
        %s537 = smul.u32 4, %s30
        %s538 = smul.u32 %s30, 4
        %s539 = ssub.s32 %s538, 1
        %p540 = scmp.gt.s32.totalorder %s539, 0
        %s541 = scalar_select %p540, %s539, 0
        %p542 = scmp.lt.s32.totalorder %s29, 1
        %s543 = scalar_select %p542, %s29, 1
        %p544 = scmp.lt.s32.totalorder %s541, 3
        %s545 = scalar_select %p544, %s541, 3
        %s546 = smul.addr %s543, 4
        %s547 = sadd.s32 %s545, %s546
        %s548 = smul.addr %s547, 4
        %s549 = scalar_lea.vmem %s1, %s548
        %s550 = smul.u32 %s30, 4
        %s551 = ssub.s32 %s550, 1
        %p552 = scmp.gt.s32.totalorder %s551, 0
        %s553 = scalar_select %p552, %s551, 0
        %s554 = sadd.s32 %s30, 1
        %s555 = smul.u32 %s554, 4
        %p556 = scmp.lt.s32.totalorder %s555, 3
        %s557 = scalar_select %p556, %s555, 3
        %p558 = scmp.lt.s32.totalorder %s29, 1
        %s559 = scalar_select %p558, %s29, 1
        %p560 = scmp.lt.s32.totalorder %s557, 3
        %s561 = scalar_select %p560, %s557, 3
        %s562 = smul.addr %s559, 4
        %s563 = sadd.s32 %s561, %s562
        %s564 = smul.addr %s563, 4
        %s565 = scalar_lea.vmem %s2, %s564
        %s566 = sadd.s32 %s30, 1
        %s567 = smul.u32 %s566, 4
        %p568 = scmp.lt.s32.totalorder %s567, 3
        %s569 = scalar_select %p568, %s567, 3
        %s570 = smul.u32 2, %s30
        %p571 = scmp.lt.s32.totalorder %s29, 1
        %s572 = scalar_select %p571, %s29, 1
        %p573 = scmp.lt.s32.totalorder %s570, 1
        %s574 = scalar_select %p573, %s570, 1
        %s575 = smul.addr %s572, 2
        %s576 = sadd.s32 %s574, %s575
        %s577 = smul.addr %s576, 8
        %s578 = scalar_lea.vmem %s3, %s577
        %s579 = smul.u32 2, %s30
        %p580 = scmp.lt.s32.totalorder %s29, 1
        %s581 = scalar_select %p580, %s29, 1
        %s582 = scalar_lea.vmem %s4, %s581
        %s583 = smul.u32 2, %s30
        %v584 = vld [vmem:[%s549] sm:$0xf]
        %p585 = scmp.gt.s32.totalorder %s30, 0
        %s586 = scalar_select %p585, 1, 0
        %s587 = scvt.s32.f32 %s586
        %v588 = vstv %s587
        %v589 = vmul.f32 %v584, %v588
        %v590 = vld [vmem:[%s565] sm:$0xf]
        %p591 = scmp.lt.s32.totalorder %s30, 0
        %s592 = scalar_select %p591, 1, 0
        %s593 = scvt.s32.f32 %s592
        %v594 = vstv %s593
        %v595 = vmul.f32 %v590, %v594
        %v596 = vld [vmem:[%s536] sm:$0xf]
        %v597 = vld [vmem:[%s536 + $0x4] sm:$0xf]
        %v598 = vld [vmem:[%s536 + $0x8] sm:$0xf]
        %v599 = vld [vmem:[%s536 + $0xc] sm:$0xf]
        %v606 = vrot.slane %v589, 7
        %v607 = vrot.slane %v596, 7
        %v608 = vrot.slane %v597, 7
        %v609 = vrot.slane %v598, 7
        %v610 = vrot.slane %v599, 7
        %v611 = vrot.slane %v595, 7
        %vm618 = vcmask 1040384
        %v619 = vsel %vm618, 0.0, %v606
        %v620 = vsel %vm618, 0.0, %v607
        %v621 = vsel %vm618, 0.0, %v608
        %v622 = vsel %vm618, 0.0, %v609
        %v623 = vsel %vm618, 0.0, %v610
        %v624 = vsel %vm618, 0.0, %v611
        %vm625 = vcmask 1044480
        %v626 = vsel %vm625, %v619, 0.0
        %v627 = vsel %vm625, %v620, 0.0
        %v628 = vsel %vm625, %v621, 0.0
        %v629 = vsel %vm625, %v622, 0.0
        %v630 = vsel %vm625, %v623, 0.0
        %v631 = vsel %vm625, %v624, 0.0
        %v632 = vld [vmem:[%s5] sm:$0xff]
        %v633 = vld [vmem:[%s5 + $0x8] sm:$0x1]
        %v634 = vlaneseq
        %v635 = vshrl.u32 %v634, 7
        %v636 = vsub.s32 0, %v635
        %v637 = vrot.slane %v632, %v636
        %v638 = vmul.f32 %v626, %v637
        %v639 = vmul.f32 %v627, %v637
        %v640 = vmul.f32 %v628, %v637
        %v641 = vmul.f32 %v629, %v637
        %v642 = vadd.f32 %v638, 0.0
        %v643 = vadd.f32 %v639, 0.0
        %v644 = vadd.f32 %v640, 0.0
        %v645 = vadd.f32 %v641, 0.0
        %v646 = vlaneseq
        %v647 = vshrl.u32 %v646, 7
        %v648 = vsub.s32 3, %v647
        %v649 = vrot.slane %v632, %v648
        %v650 = vmul.f32 %v627, %v649
        %v651 = vmul.f32 %v628, %v649
        %v652 = vmul.f32 %v629, %v649
        %v653 = vmul.f32 %v630, %v649
        %v654 = vadd.f32 %v642, %v650
        %v655 = vadd.f32 %v643, %v651
        %v656 = vadd.f32 %v644, %v652
        %v657 = vadd.f32 %v645, %v653
        %v658 = vlaneseq
        %v659 = vshrl.u32 %v658, 7
        %v660 = vsub.s32 6, %v659
        %v661 = vrot.slane %v632, %v660
        %v662 = vmul.f32 %v628, %v661
        %v663 = vmul.f32 %v629, %v661
        %v664 = vmul.f32 %v630, %v661
        %v665 = vmul.f32 %v631, %v661
        %v666 = vadd.f32 %v654, %v662
        %v667 = vadd.f32 %v655, %v663
        %v668 = vadd.f32 %v656, %v664
        %v669 = vadd.f32 %v657, %v665
        %v670 = vlaneseq
        %v671 = vshrl.u32 %v670, 7
        %v672 = vsub.s32 1, %v671
        %v673 = vrot.slane %v632, %v672
        %v674 = vmul.f32 %v626, %v673
        %v675 = vmul.f32 %v627, %v673
        %v676 = vmul.f32 %v628, %v673
        %v677 = vmul.f32 %v629, %v673
        %v682 = vrot.slane %v674, 1
        %v683 = vrot.slane %v675, 1
        %v684 = vrot.slane %v676, 1
        %v685 = vrot.slane %v677, 1
        %v690 = vadd.f32 %v666, %v682
        %v691 = vadd.f32 %v667, %v683
        %v692 = vadd.f32 %v668, %v684
        %v693 = vadd.f32 %v669, %v685
        %v694 = vlaneseq
        %v695 = vshrl.u32 %v694, 7
        %v696 = vsub.s32 4, %v695
        %v697 = vrot.slane %v632, %v696
        %v698 = vmul.f32 %v627, %v697
        %v699 = vmul.f32 %v628, %v697
        %v700 = vmul.f32 %v629, %v697
        %v701 = vmul.f32 %v630, %v697
        %v706 = vrot.slane %v698, 1
        %v707 = vrot.slane %v699, 1
        %v708 = vrot.slane %v700, 1
        %v709 = vrot.slane %v701, 1
        %v714 = vadd.f32 %v690, %v706
        %v715 = vadd.f32 %v691, %v707
        %v716 = vadd.f32 %v692, %v708
        %v717 = vadd.f32 %v693, %v709
        %v718 = vlaneseq
        %v719 = vshrl.u32 %v718, 7
        %v720 = vsub.s32 7, %v719
        %v721 = vrot.slane %v632, %v720
        %v722 = vmul.f32 %v628, %v721
        %v723 = vmul.f32 %v629, %v721
        %v724 = vmul.f32 %v630, %v721
        %v725 = vmul.f32 %v631, %v721
        %v730 = vrot.slane %v722, 1
        %v731 = vrot.slane %v723, 1
        %v732 = vrot.slane %v724, 1
        %v733 = vrot.slane %v725, 1
        %v738 = vadd.f32 %v714, %v730
        %v739 = vadd.f32 %v715, %v731
        %v740 = vadd.f32 %v716, %v732
        %v741 = vadd.f32 %v717, %v733
        %v742 = vlaneseq
        %v743 = vshrl.u32 %v742, 7
        %v744 = vsub.s32 2, %v743
        %v745 = vrot.slane %v632, %v744
        %v746 = vmul.f32 %v626, %v745
        %v747 = vmul.f32 %v627, %v745
        %v748 = vmul.f32 %v628, %v745
        %v749 = vmul.f32 %v629, %v745
        %v754 = vrot.slane %v746, 2
        %v755 = vrot.slane %v747, 2
        %v756 = vrot.slane %v748, 2
        %v757 = vrot.slane %v749, 2
        %v762 = vadd.f32 %v738, %v754
        %v763 = vadd.f32 %v739, %v755
        %v764 = vadd.f32 %v740, %v756
        %v765 = vadd.f32 %v741, %v757
        %v766 = vlaneseq
        %v767 = vshrl.u32 %v766, 7
        %v768 = vsub.s32 5, %v767
        %v769 = vrot.slane %v632, %v768
        %v770 = vmul.f32 %v627, %v769
        %v771 = vmul.f32 %v628, %v769
        %v772 = vmul.f32 %v629, %v769
        %v773 = vmul.f32 %v630, %v769
        %v778 = vrot.slane %v770, 2
        %v779 = vrot.slane %v771, 2
        %v780 = vrot.slane %v772, 2
        %v781 = vrot.slane %v773, 2
        %v786 = vadd.f32 %v762, %v778
        %v787 = vadd.f32 %v763, %v779
        %v788 = vadd.f32 %v764, %v780
        %v789 = vadd.f32 %v765, %v781
        %v790 = vlaneseq
        %v791 = vshrl.u32 %v790, 7
        %v792 = vsub.s32 0, %v791
        %v793 = vrot.slane %v633, %v792
        %v794 = vmul.f32 %v628, %v793
        %v795 = vmul.f32 %v629, %v793
        %v796 = vmul.f32 %v630, %v793
        %v797 = vmul.f32 %v631, %v793
        %v802 = vrot.slane %v794, 2
        %v803 = vrot.slane %v795, 2
        %v804 = vrot.slane %v796, 2
        %v805 = vrot.slane %v797, 2
        %v810 = vadd.f32 %v786, %v802
        %v811 = vadd.f32 %v787, %v803
        %v812 = vadd.f32 %v788, %v804
        %v813 = vadd.f32 %v789, %v805
        %v814 = vld [vmem:[%s6] sm:$0x1]
        %v816 = vlaneseq
        %v817 = vshrl.u32 %v816, 7
        %v818 = vsub.s32 0, %v817
        %v819 = vrot.slane %v814, %v818
        %v821 = vadd.f32 %v810, %v819
        %v822 = vadd.f32 %v811, %v819
        %v823 = vadd.f32 %v812, %v819
        %v824 = vadd.f32 %v813, %v819
        %v825 = vld [vmem:[%s7] sm:$0xff]
        %v826 = vld [vmem:[%s7 + $0x8] sm:$0xff]
        %v827 = vld [vmem:[%s7 + $0x10] sm:$0xff]
        %v828 = vld [vmem:[%s7 + $0x18] sm:$0xff]
        %v829 = vld [vmem:[%s7 + $0x20] sm:$0xff]
        %v830 = vld [vmem:[%s7 + $0x28] sm:$0xff]
        %v831 = vld [vmem:[%s7 + $0x30] sm:$0xff]
        %v832 = vld [vmem:[%s7 + $0x38] sm:$0xff]
        %v833 = vld [vmem:[%s7 + $0x40] sm:$0xff]
        %v834 = vld [vmem:[%s7 + $0x48] sm:$0xff]
        %v835 = vld [vmem:[%s7 + $0x50] sm:$0xff]
        %v836 = vld [vmem:[%s7 + $0x58] sm:$0xff]
        %v837 = vld [vmem:[%s7 + $0x60] sm:$0xff]
        %v838 = vld [vmem:[%s7 + $0x68] sm:$0xff]
        %v839 = vld [vmem:[%s7 + $0x70] sm:$0xff]
        %v840 = vld [vmem:[%s7 + $0x78] sm:$0xff]
        %v841 = vld [vmem:[%s8] sm:$0x1]
        %v843 = vlaneseq
        %v844 = vshrl.u32 %v843, 7
        %v845 = vsub.s32 0, %v844
        %v846 = vrot.slane %v841, %v845
        %v852 = vcombine.low %v821, %v822
        %v853 = vcombine.low %v823, %v824
        %856 = vmatprep.subr.mxu0 0.0
        %857 = vmatpush1.msra.mxu0 %v825
        %858 = vmatprep.subr.mxu0 0.0
        %859 = vmatpush1.msra.mxu0 %v826
        %860 = vmatprep.subr.mxu0 0.0
        %861 = vmatpush1.msra.mxu0 %v827
        %862 = vmatprep.subr.mxu0 0.0
        %863 = vmatpush1.msra.mxu0 %v828
        %864 = vmatprep.subr.mxu0 0.0
        %865 = vmatpush1.msra.mxu0 %v829
        %866 = vmatprep.subr.mxu0 0.0
        %867 = vmatpush1.msra.mxu0 %v830
        %868 = vmatprep.subr.mxu0 0.0
        %869 = vmatpush1.msra.mxu0 %v831
        %870 = vmatprep.subr.mxu0 0.0
        %871 = vmatpush1.msra.mxu0 %v832
        %872 = vmatprep.subr.mxu0 0.0
        %873 = vmatpush1.msra.mxu0 %v833
        %874 = vmatprep.subr.mxu0 0.0
        %875 = vmatpush1.msra.mxu0 %v834
        %876 = vmatprep.subr.mxu0 0.0
        %877 = vmatpush1.msra.mxu0 %v835
        %878 = vmatprep.subr.mxu0 0.0
        %879 = vmatpush1.msra.mxu0 %v836
        %880 = vmatprep.subr.mxu0 0.0
        %881 = vmatpush1.msra.mxu0 %v837
        %882 = vmatprep.subr.mxu0 0.0
        %883 = vmatpush1.msra.mxu0 %v838
        %884 = vmatprep.subr.mxu0 0.0
        %885 = vmatpush1.msra.mxu0 %v839
        %886 = vmatprep.subr.mxu0 0.0
        %887 = vmatpush1.msra.mxu0 %v840
        %888 = vmatprep.subr.mxu0 0.0
        %889 = vmatpush1.msra.mxu0 0.0
        %890 = vmatprep.subr.mxu0 0.0
        %891 = vmatpush1.msra.mxu0 0.0
        %892 = vmatprep.subr.mxu0 0.0
        %893 = vmatpush1.msra.mxu0 0.0
        %894 = vmatprep.subr.mxu0 0.0
        %895 = vmatpush1.msra.mxu0 0.0
        %896 = vmatprep.subr.mxu0 0.0
        %897 = vmatpush1.msra.mxu0 0.0
        %898 = vmatprep.subr.mxu0 0.0
        %899 = vmatpush1.msra.mxu0 0.0
        %900 = vmatprep.subr.mxu0 0.0
        %901 = vmatpush1.msra.mxu0 0.0
        %902 = vmatprep.subr.mxu0 0.0
        %903 = vmatpush1.msra.mxu0 0.0
        %904 = vmatprep.subr.mxu0 0.0
        %905 = vmatpush1.msra.mxu0 0.0
        %906 = vmatprep.subr.mxu0 0.0
        %907 = vmatpush1.msra.mxu0 0.0
        %908 = vmatprep.subr.mxu0 0.0
        %909 = vmatpush1.msra.mxu0 0.0
        %910 = vmatprep.subr.mxu0 0.0
        %911 = vmatpush1.msra.mxu0 0.0
        %912 = vmatprep.subr.mxu0 0.0
        %913 = vmatpush1.msra.mxu0 0.0
        %914 = vmatprep.subr.mxu0 0.0
        %915 = vmatpush1.msra.mxu0 0.0
        %916 = vmatprep.subr.mxu0 0.0
        %917 = vmatpush1.msra.mxu0 0.0
        %918 = vmatprep.subr.mxu0 0.0
        %919 = vmatpush1.msra.mxu0 0.0
        %920 = vmatprep.mubr.f32.mxu0 0.0
        %921 = vmatmul.mubr.f32.gmra.mrb[0].mxu0 %v852
        %v922 = vpop.f32.mrb[0].mxu0
        %v923 = vadd.f32 %v846, %v922
        %v924 = vpop.f32.mrb[0].mxu0
        %925 = vmatprep.mubr.f32.mxu0 0.0
        %926 = vmatmul.mubr.f32.gmra.mrb[0].mxu0 %v853
        %v927 = vpop.f32.mrb[0].mxu0
        %v928 = vadd.f32 %v846, %v927
        %v929 = vpop.f32.mrb[0].mxu0
        %930 = vdwg.mxu0
        %v931 = vmul.f32 %v923, 0.5
        %v932 = vmul.f32 %v928, 0.5
        %v933 = vmul.f32 %v923, 0.044715
        %v934 = vmul.f32 %v928, 0.044715
        %v935 = vmul.f32 %v933, %v923
        %v936 = vmul.f32 %v934, %v928
        %v937 = vmul.f32 %v935, %v923
        %v938 = vmul.f32 %v936, %v928
        %v939 = vadd.f32 %v923, %v937
        %v940 = vadd.f32 %v928, %v938
        %v941 = vmul.f32 %v939, 0.7978846
        %v942 = vmul.f32 %v940, 0.7978846
        %v943 = vtanh.pop %v941
        %v944 = vtanh.pop %v942
        %v945 = vadd.f32 %v943, 1.0
        %v946 = vadd.f32 %v944, 1.0
        %v947 = vmul.f32 %v931, %v945
        %v948 = vmul.f32 %v932, %v946
        %v949 = vld [vmem:[%s9] sm:$0xff]
        %v950 = vld [vmem:[%s9 + $0x8] sm:$0xff]
        %v951 = vld [vmem:[%s9 + $0x10] sm:$0xff]
        %v952 = vld [vmem:[%s9 + $0x18] sm:$0xff]
        %v953 = vld [vmem:[%s9 + $0x20] sm:$0xff]
        %v954 = vld [vmem:[%s9 + $0x28] sm:$0xff]
        %v955 = vld [vmem:[%s9 + $0x30] sm:$0xff]
        %v956 = vld [vmem:[%s9 + $0x38] sm:$0xff]
        %v957 = vld [vmem:[%s9 + $0x40] sm:$0xff]
        %v958 = vld [vmem:[%s9 + $0x48] sm:$0xff]
        %v959 = vld [vmem:[%s9 + $0x50] sm:$0xff]
        %v960 = vld [vmem:[%s9 + $0x58] sm:$0xff]
        %v961 = vld [vmem:[%s9 + $0x60] sm:$0xff]
        %v962 = vld [vmem:[%s9 + $0x68] sm:$0xff]
        %v963 = vld [vmem:[%s9 + $0x70] sm:$0xff]
        %v964 = vld [vmem:[%s9 + $0x78] sm:$0xff]
        %v965 = vld [vmem:[%s10] sm:$0x1]
        %v967 = vlaneseq
        %v968 = vshrl.u32 %v967, 7
        %v969 = vsub.s32 0, %v968
        %v970 = vrot.slane %v965, %v969
        %972 = vmatprep.subr.mxu0 0.0
        %973 = vmatpush1.msra.mxu0 %v949
        %974 = vmatprep.subr.mxu0 0.0
        %975 = vmatpush1.msra.mxu0 %v950
        %976 = vmatprep.subr.mxu0 0.0
        %977 = vmatpush1.msra.mxu0 %v951
        %978 = vmatprep.subr.mxu0 0.0
        %979 = vmatpush1.msra.mxu0 %v952
        %980 = vmatprep.subr.mxu0 0.0
        %981 = vmatpush1.msra.mxu0 %v953
        %982 = vmatprep.subr.mxu0 0.0
        %983 = vmatpush1.msra.mxu0 %v954
        %984 = vmatprep.subr.mxu0 0.0
        %985 = vmatpush1.msra.mxu0 %v955
        %986 = vmatprep.subr.mxu0 0.0
        %987 = vmatpush1.msra.mxu0 %v956
        %988 = vmatprep.subr.mxu0 0.0
        %989 = vmatpush1.msra.mxu0 %v957
        %990 = vmatprep.subr.mxu0 0.0
        %991 = vmatpush1.msra.mxu0 %v958
        %992 = vmatprep.subr.mxu0 0.0
        %993 = vmatpush1.msra.mxu0 %v959
        %994 = vmatprep.subr.mxu0 0.0
        %995 = vmatpush1.msra.mxu0 %v960
        %996 = vmatprep.subr.mxu0 0.0
        %997 = vmatpush1.msra.mxu0 %v961
        %998 = vmatprep.subr.mxu0 0.0
        %999 = vmatpush1.msra.mxu0 %v962
        %1000 = vmatprep.subr.mxu0 0.0
        %1001 = vmatpush1.msra.mxu0 %v963
        %1002 = vmatprep.subr.mxu0 0.0
        %1003 = vmatpush1.msra.mxu0 %v964
        %1004 = vmatprep.subr.mxu0 0.0
        %1005 = vmatpush1.msra.mxu0 0.0
        %1006 = vmatprep.subr.mxu0 0.0
        %1007 = vmatpush1.msra.mxu0 0.0
        %1008 = vmatprep.subr.mxu0 0.0
        %1009 = vmatpush1.msra.mxu0 0.0
        %1010 = vmatprep.subr.mxu0 0.0
        %1011 = vmatpush1.msra.mxu0 0.0
        %1012 = vmatprep.subr.mxu0 0.0
        %1013 = vmatpush1.msra.mxu0 0.0
        %1014 = vmatprep.subr.mxu0 0.0
        %1015 = vmatpush1.msra.mxu0 0.0
        %1016 = vmatprep.subr.mxu0 0.0
        %1017 = vmatpush1.msra.mxu0 0.0
        %1018 = vmatprep.subr.mxu0 0.0
        %1019 = vmatpush1.msra.mxu0 0.0
        %1020 = vmatprep.subr.mxu0 0.0
        %1021 = vmatpush1.msra.mxu0 0.0
        %1022 = vmatprep.subr.mxu0 0.0
        %1023 = vmatpush1.msra.mxu0 0.0
        %1024 = vmatprep.subr.mxu0 0.0
        %1025 = vmatpush1.msra.mxu0 0.0
        %1026 = vmatprep.subr.mxu0 0.0
        %1027 = vmatpush1.msra.mxu0 0.0
        %1028 = vmatprep.subr.mxu0 0.0
        %1029 = vmatpush1.msra.mxu0 0.0
        %1030 = vmatprep.subr.mxu0 0.0
        %1031 = vmatpush1.msra.mxu0 0.0
        %1032 = vmatprep.subr.mxu0 0.0
        %1033 = vmatpush1.msra.mxu0 0.0
        %1034 = vmatprep.subr.mxu0 0.0
        %1035 = vmatpush1.msra.mxu0 0.0
        %1036 = vmatprep.mubr.f32.mxu0 0.0
        %1037 = vmatmul.mubr.f32.gmra.mrb[0].mxu0 %v947
        %v1038 = vpop.f32.mrb[0].mxu0
        %v1039 = vadd.f32 %v970, %v1038
        %v1040 = vpop.f32.mrb[0].mxu0
        %1041 = vmatprep.mubr.f32.mxu0 0.0
        %1042 = vmatmul.mubr.f32.gmra.mrb[0].mxu0 %v948
        %v1043 = vpop.f32.mrb[0].mxu0
        %v1044 = vadd.f32 %v970, %v1043
        %v1045 = vpop.f32.mrb[0].mxu0
        %1046 = vdwg.mxu0
        %v1047 = vld [vmem:[%s582] sm:$0x1]
        %v1048 = vld [vmem:[%s578] sm:$0xff]
        %v1049 = vld [vmem:[%s578 + $0x8] sm:$0xff]
        %v1051 = vlaneseq
        %v1052 = vshrl.u32 %v1051, 7
        %v1053 = vsub.s32 0, %v1052
        %v1054 = vrot.slane %v1047, %v1053
        %1055 = vset.pattern.permute.xlu0 0
        %1056 = vperm.xlu0 %1055, %v1054
        %v1057 = vpop.permute.xlu0 %1056
        %v1059 = vmul.f32 %v1048, %v1057
        %v1060 = vmul.f32 %v1049, %v1057
        %1061 = vset.pattern.permute.xlu0 1
        %1062 = vperm.xlu0 %1061, %v1054
        %v1063 = vpop.permute.xlu0 %1062
        %v1065 = vadd.f32 %v1059, %v1063
        %v1066 = vadd.f32 %v1060, %v1063
        %v1067 = vadd.f32 %v1039, %v1065
        %v1068 = vadd.f32 %v1044, %v1066
        %vm1069 = vcmask 523264
        %1070 = vst.msk [vmem:[%s527] sm:$0xff] %vm1069, %v1067
        %1071 = vst.msk [vmem:[%s527 + $0x8] sm:$0xff] %vm1069, %v1068
        %s1072 = sand.u32 %s327, 1
        %s1073 = scalar_lea.sflag [#allocation3], %s1072
        %s1074 = sand.u32 %s327, 1
        %s1075 = smul.addr %s1074, 16
        %s1076 = scalar_lea.vmem [#allocation2], %s1075
        // Predicated region
        $region65: #{_lambda_.15} parent=63 // pred_check
          %p1077 = pneg %p337
        $region66: #{_lambda_.15} parent=63 // pred_check_branch
          %1079 = sbr.rel (%p1077) target = $region68
        $region67: #{_lambda_.15} parent=63 // pred_region
          %s1080 = smul.u32 2, %s30
          %s1082 = ssub.s32 256, 256
          %1083 = vsyncadd %s1073, %s1082
          %s1084 = smul.addr %s29, 2
          %s1085 = sadd.s32 %s1080, %s1084
          %s1086 = smul.addr %s1085, 128
          %s1087 = scalar_lea.hbm %s11, %s1086
          %s1088 = sshll.u32 %s1076, 4
          %s1089 = int_to_ptr.vmem [resolvable:$true] %s1088
          %1094 = dma.vmem_to_hbm [thread:$0]  %s1089, 256, %s1087, %s1073, 128, 128, 8
        $region68: #{_lambda_.15} parent=63 // pred_fallthru
          _
      $region64: #{_lambda_.15} parent=5 // pred_fallthru
        _
      %p1095 = scmp.le.s32.totalorder 2, %s20
      // Predicated region
      $region69: #{_lambda_.15} parent=5 // pred_check
        %p1096 = pneg %p1095
      $region70: #{_lambda_.15} parent=5 // pred_check_branch
        %1098 = sbr.rel (%p1096) target = $region72
      $region71: #{_lambda_.15} parent=5 // pred_region
        %s1099 = ssub.s32 %s20, 2
        // Predicated region
        $region73: #{_lambda_.15} parent=71 // pred_check
          %p1100 = pneg %p343
        $region74: #{_lambda_.15} parent=71 // pred_check_branch
          %1102 = sbr.rel (%p1100) target = $region76
        $region75: #{_lambda_.15} parent=71 // pred_region
          %s1103 = sand.u32 %s328, 1
          %s1104 = scalar_lea.sflag [#allocation3], %s1103
          %s1105 = sand.u32 %s328, 1
          %s1106 = smul.addr %s1105, 16
          %s1107 = scalar_lea.vmem [#allocation2], %s1106
          %1108 = dma.done %s1104, 256
        $region76: #{_lambda_.15} parent=71 // pred_fallthru
          _
      $region72: #{_lambda_.15} parent=5 // pred_fallthru
        _
    $region6: #{_lambda_.15} parent=1 // loop_footer
      %s24 = sadd.s32 1, %s20
    $region7: #{_lambda_.15} parent=1 // loop_footer_branch
      %19 = sbr.rel target = $region3
    $region8: #{_lambda_.15} parent=1 // loop_exit
      _
    %1109 = vsyncpa [#allocation3], 1
    %s1110 = scalar_lea.sflag [#allocation3], 1
    %1111 = vsyncpa %s1110, 1

</llo_original>
